<compile_context>
chip_gen: v7x
topology: tpu7x:2x2x1
jax: 0.10.0
libtpu: 0.0.40
codegen_flags: <defaults>
</compile_context>

<pallas_src>
import jax
import jax.numpy as jnp
from jax.experimental import pallas as pl
from jax.experimental.pallas import tpu as pltpu


# --------------------------------------------------------------------------- #
# helpers
# --------------------------------------------------------------------------- #
def _round_up(x, m):
    return ((x + m - 1) // m) * m


def _pad_last(a, target):
    pad = target - a.shape[-1]
    if pad == 0:
        return a
    return jnp.pad(a, [(0, 0)] * (a.ndim - 1) + [(0, pad)])


def _pad2d(w, rows, cols):
    return jnp.pad(w, [(0, rows - w.shape[0]), (0, cols - w.shape[1])])


def _num_tensorcores():
    """Heuristic: v7x has 2 TensorCores per chip; v5e/v6e have 1."""
    try:
        kind = jax.devices()[0].device_kind.lower()
        if "v7" in kind:
            return 2
    except Exception:
        pass
    return 1


def _choose_tb(batch, fp, in_itemsize, n_layers, weight_bytes, vmem_sizing_budget, num_tc):
    """Largest 128-multiple batch tile that fits the VMEM budget, never bigger than the
    padded batch, capped at 2048; keep >= 2 grid steps only on 2-TC chips."""
    bp128 = _round_up(max(int(batch), 1), 128)
    per_row = (2 * fp * in_itemsize          # double-buffered input slab
               + 2 * 512                     # double-buffered (tb,1) f32 out tile (lane-padded)
               + (n_layers + 3) * 128 * 4)   # f32 intermediates (h per layer, logits, temps)
    avail = max(vmem_sizing_budget - 2 * weight_bytes, per_row * 128)
    tb = (avail // per_row) // 128 * 128
    tb = max(128, min(tb, 2048, bp128))
    if num_tc >= 2 and bp128 >= 256:
        tb = min(tb, _round_up(bp128 // 2, 128))   # give both TensorCores work
    return int(tb)


# --------------------------------------------------------------------------- #
# kernel
# --------------------------------------------------------------------------- #
def make_fuse_kernel(num_deep_layers, narrow_out):
    """Ref order:
       slab, (deep_w0, deep_b0, ...), wf_deep, wf_cross_packed, bf, out
    slab columns: [deep_in | cross_cat | xtw0 | xtw1 | zero-pad] (lane-dense, 128-mult).
    The xTw fusion and the cross half of the final Linear are folded into
    wf_cross_packed, so the kernel is matmul + bias + ReLU + sigmoid only."""

    def kernel(slab_ref, *refs):
        deep_refs = refs[: 2 * num_deep_layers]
        wf_d_ref, wf_c_ref, bf_ref, out_ref = refs[2 * num_deep_layers:]

        x = slab_ref[...]                                   # (tb, Fp) packed inputs

        # ---- Deep MLP: Linear + ReLU per layer (MXU, f32 accumulation; h stays f32) ----
        h = x
        for li in range(num_deep_layers):
            w = deep_refs[2 * li][...]                      # (Din_p, Dout_p) mxu_dtype
            b = deep_refs[2 * li + 1][...]                  # (1,     Dout_p) f32
            h = jnp.dot(h.astype(w.dtype), w,
                        preferred_element_type=jnp.float32) + b
            h = jnp.maximum(h, 0.0)

        # ---- final Linear over cat([deep_out, cross_fused]); xTw terms folded into wf_c ----
        logits = (jnp.dot(h.astype(wf_d_ref.dtype), wf_d_ref[...],
                          preferred_element_type=jnp.float32)
                  + jnp.dot(x.astype(wf_c_ref.dtype), wf_c_ref[...],
                            preferred_element_type=jnp.float32)
                  + bf_ref[...])                            # (tb, 128); only col 0 is real

        if narrow_out:
            z = logits[:, 0:1]
            out_ref[...] = 1.0 / (1.0 + jnp.exp(-z))        # (tb, 1), exact sigmoid
        else:
            out_ref[...] = 1.0 / (1.0 + jnp.exp(-logits))   # fallback lane-dense (tb, 128)

    return kernel


# --------------------------------------------------------------------------- #
# wrapper
# --------------------------------------------------------------------------- #
def deep_crossfuse_forward(deep_outs, cross_outs, xtws, *,
                           deep_ws, deep_bs, final_w, final_b,
                           tb=None, mxu_dtype=jnp.float32):
    f32 = jnp.float32

    # ---- plain-JAX glue: build the single packed lane-dense input slab ----
    deep_in = jnp.concatenate([d.astype(f32) for d in deep_outs], axis=-1)
    c0 = cross_outs[0].shape[-1]
    c1 = cross_outs[1].shape[-1]
    xt = [jnp.reshape(x, (x.shape[0], 1)).astype(f32) for x in xtws]

    B, D = deep_in.shape
    C = c0 + c1
    F = D + C + 2
    Fp = _round_up(F, 128)

    slab = jnp.concatenate(
        [deep_in, cross_outs[0].astype(f32), cross_outs[1].astype(f32), xt[0], xt[1]],
        axis=-1)                                           # (B, F)
    slab = _pad_last(slab, Fp)                             # (B, Fp)

    hidden = [w.shape[1] for w in deep_ws]
    hidden_p = [_round_up(h, 128) for h in hidden]
    h_last = hidden[-1]
    assert final_w.shape[0] == h_last + C

    # ---- deep MLP weights: layer-0 rows zero-padded over the cross/xtw/pad columns ----
    weight_args = []
    in_dims_p = [Fp] + hidden_p[:-1]
    for li, (w, b) in enumerate(zip(deep_ws, deep_bs)):
        wp = _pad2d(w.astype(f32), in_dims_p[li], hidden_p[li]).astype(mxu_dtype)
        bp = _pad_last(b.reshape(1, -1).astype(f32), hidden_p[li])
        weight_args += [wp, bp]

    # ---- final Linear split into deep / packed-cross row blocks; xTw fusion folded in ----
    wf_d = _pad2d(final_w[:h_last, :].astype(f32), hidden_p[-1], 128).astype(mxu_dtype)
    wf_c = final_w[h_last:, :].astype(f32)                     # (C, 1)
    s_c0 = jnp.sum(wf_c[:c0, :], axis=0, keepdims=True)        # multiplies xtw1 (added to cross_0)
    s_c1 = jnp.sum(wf_c[c0:, :], axis=0, keepdims=True)        # multiplies xtw0 (added to cross_1)
    wc_col = jnp.concatenate([jnp.zeros((D, 1), f32), wf_c, s_c1, s_c0], axis=0)  # (F, 1)
    wf_cp = _pad2d(wc_col, Fp, 128).astype(mxu_dtype)
    bf_p = _pad2d(final_b.reshape(1, 1).astype(f32), 1, 128)
    weight_args += [wf_d, wf_cp, bf_p]
    weight_bytes = sum(int(a.size) * a.dtype.itemsize for a in weight_args)

    # ---- per-chip VMEM budget (conservative 64 MiB fallback = v7x) ----
    try:
        vmem_phys = int(pltpu.get_tpu_info().vmem_capacity_bytes)
    except Exception:
        vmem_phys = 64 * 1024 * 1024

    in_itemsize = jnp.dtype(mxu_dtype).itemsize
    if tb is None:
        tb = _choose_tb(B, Fp, in_itemsize, len(deep_ws), weight_bytes,
                        vmem_phys // 3, _num_tensorcores())
    assert tb % 128 == 0 and tb >= 128

    # ---- pad ragged batches and cast the streamed slab (bf16 halves its DMA bytes) ----
    Bp = _round_up(B, tb)
    slab = slab.astype(mxu_dtype)
    if Bp != B:
        slab = jnp.pad(slab, ((0, Bp - B), (0, 0)))

    # vmem_limit from actual footprint + headroom, capped at 3/4 of physical VMEM
    interm = (len(deep_ws) + 3) * tb * 128 * 4
    vmem_need = 2 * tb * Fp * in_itemsize + 2 * tb * 512 + 2 * weight_bytes + interm
    vmem_limit = int(min(vmem_phys * 3 // 4, vmem_need + (8 << 20)))

    n_layers = len(deep_ws)

    def run(narrow_out, single_buffer_weights):
        kernel = make_fuse_kernel(n_layers, narrow_out)
        wkw = {"pipeline_mode": pl.Buffered(1)} if single_buffer_weights else {}
        in_specs = [pl.BlockSpec((tb, Fp), lambda i: (i, 0))]
        in_specs += [pl.BlockSpec(a.shape, lambda i: (0, 0), **wkw) for a in weight_args]
        out_cols = 1 if narrow_out else 128
        out = pl.pallas_call(
            kernel,
            out_shape=jax.ShapeDtypeStruct((Bp, out_cols), jnp.float32),
            grid_spec=pltpu.PrefetchScalarGridSpec(
                num_scalar_prefetch=0,
                grid=(Bp // tb,),
                in_specs=in_specs,
                out_specs=pl.BlockSpec((tb, out_cols), lambda i: (i, 0)),
            ),
            compiler_params=pltpu.CompilerParams(
                dimension_semantics=("parallel",),
                vmem_limit_bytes=vmem_limit),
        )(slab, *weight_args)
        return jax.block_until_ready(out)

    # preferred config first; graceful fallbacks keep the kernel runnable everywhere
    attempts = ((True, True),     # narrow (Bp,1) output + single-buffered weights
                (True, False),    # narrow output, default double-buffered weights
                (False, False))   # known-good lane-dense (Bp,128) output
    out_p, last_err = None, None
    for narrow, single in attempts:
        try:
            out_p = run(narrow, single)
            break
        except Exception as e:    # pragma: no cover - fallback path
            last_err = e
    if out_p is None:
        raise last_err

    # torch module returns sigmoid(final_linear(...)) of shape [B, 1]
    return out_p[:B, :1]


# --------------------------------------------------------------------------- #
# plain-JAX reference (mirrors the PyTorch forward)
# --------------------------------------------------------------------------- #
def reference_forward(deep_outs, cross_outs, xtws, *,
                      deep_ws, deep_bs, final_w, final_b):
    deep_in = jnp.concatenate(deep_outs, axis=-1)
    h = deep_in
    for w, b in zip(deep_ws, deep_bs):
        h = jnp.maximum(h @ w + b[None, :], 0.0)
    cr0, cr1 = cross_outs
    xt0 = xtws[0].reshape(xtws[0].shape[0], 1)
    xt1 = xtws[1].reshape(xtws[1].shape[0], 1)
    cr1 = cr1 + xt0
    cr0 = cr0 + xt1
    fin = jnp.concatenate([h, cr0, cr1], axis=-1)
    return jax.nn.sigmoid(fin @ final_w + final_b[None, :])


# --------------------------------------------------------------------------- #
if __name__ == "__main__":
    key = jax.random.PRNGKey(0)

    # ---- toy split-DCN config (mirrors DeepCrossfuse.__init__) ----
    dense_alice, dense_bob = 2, 2
    sparse_alice, sparse_bob = [100, 50], [20, 30]
    emb_alice = [int(6 * v ** 0.25) for v in sparse_alice]     # [18, 15]
    emb_bob = [int(6 * v ** 0.25) for v in sparse_bob]         # [12, 14]
    c0 = dense_alice + sum(emb_alice)                          # party-0 cross width (35)
    c1 = dense_bob + sum(emb_bob)                              # party-1 cross width (28)
    cross_out_num = c0 + c1                                    # 63
    d0, d1 = 16, 16                                            # per-party deep outputs
    dnn_input_dim = d0 + d1
    deep_layers = [64, 32]                                     # config['deep_layers']
    final_dim = cross_out_num + deep_layers[-1]                # 95
    batch = 16

    keys = iter(jax.random.split(key, 16))

    # fuse-net parameters (weights stored [in, out])
    dims = [dnn_input_dim] + deep_layers
    deep_ws = [0.05 * jax.random.normal(next(keys), (dims[i], dims[i + 1]), jnp.float32)
               for i in range(len(deep_layers))]
    deep_bs = [0.01 * jax.random.normal(next(keys), (dims[i + 1],), jnp.float32)
               for i in range(len(deep_layers))]
    final_w = 0.05 * jax.random.normal(next(keys), (final_dim, 1), jnp.float32)
    final_b = 0.01 * jax.random.normal(next(keys), (1,), jnp.float32)

    # activations coming from the two (remote) DeepCrossbase halves
    deep_outs = (jnp.maximum(jax.random.normal(next(keys), (batch, d0), jnp.float32), 0.0),
                 jnp.maximum(jax.random.normal(next(keys), (batch, d1), jnp.float32), 0.0))
    cross_outs = (jax.random.normal(next(keys), (batch, c0), jnp.float32),
                  jax.random.normal(next(keys), (batch, c1), jnp.float32))
    xtws = (jax.random.normal(next(keys), (batch, 1, 1), jnp.float32),
            jax.random.normal(next(keys), (batch, 1, 1), jnp.float32))

    ref = reference_forward(deep_outs, cross_outs, xtws,
                            deep_ws=deep_ws, deep_bs=deep_bs,
                            final_w=final_w, final_b=final_b)

    # ---- default f32 matmul path: tight check against the f32 reference ----
    out = deep_crossfuse_forward(
        deep_outs, cross_outs, xtws,
        deep_ws=deep_ws, deep_bs=deep_bs, final_w=final_w, final_b=final_b)
    out = jax.block_until_ready(out)
    assert out.shape == (batch, 1)
    err = float(jnp.max(jnp.abs(out - ref)))
    assert err < 1e-4, err

    # ---- bf16 weight/activation path (recommended on v6e/v7x): looser tolerance ----
    out_bf16 = deep_crossfuse_forward(
        deep_outs, cross_outs, xtws,
        deep_ws=deep_ws, deep_bs=deep_bs, final_w=final_w, final_b=final_b,
        mxu_dtype=jnp.bfloat16)
    out_bf16 = jax.block_until_ready(out_bf16)
    err_bf16 = float(jnp.max(jnp.abs(out_bf16 - ref)))
    assert err_bf16 < 3e-2, err_bf16

    print("KERNEL_OK")
</pallas_src>

<mosaic_0001>
module attributes {stable_mosaic.version = 11 : i64} {
  func.func @kernel(%arg0: i32, %arg1: memref<128x128xf32, #tpu.memory_space<vmem>>, %arg2: memref<128x128xf32, #tpu.memory_space<vmem>>, %arg3: memref<1x128xf32, #tpu.memory_space<vmem>>, %arg4: memref<128x128xf32, #tpu.memory_space<vmem>>, %arg5: memref<1x128xf32, #tpu.memory_space<vmem>>, %arg6: memref<128x128xf32, #tpu.memory_space<vmem>>, %arg7: memref<128x128xf32, #tpu.memory_space<vmem>>, %arg8: memref<1x128xf32, #tpu.memory_space<vmem>>, %arg9: memref<128x1xf32, #tpu.memory_space<vmem>>) attributes {dimension_semantics = [#tpu.dimension_semantics<parallel>], iteration_bounds = array<i64: 1>, scalar_prefetch = 0 : i64, scratch_operands = 0 : i64, tpu.core_type = #tpu.core_type<tc>, window_params = [{transform_indices = @transform_0, window_bounds = array<i64: 128, 128>}, {pipeline_mode = #tpu.pipeline_mode<synchronous>, transform_indices = @transform_1, window_bounds = array<i64: 128, 128>}, {pipeline_mode = #tpu.pipeline_mode<synchronous>, transform_indices = @transform_2, window_bounds = array<i64: 1, 128>}, {pipeline_mode = #tpu.pipeline_mode<synchronous>, transform_indices = @transform_3, window_bounds = array<i64: 128, 128>}, {pipeline_mode = #tpu.pipeline_mode<synchronous>, transform_indices = @transform_4, window_bounds = array<i64: 1, 128>}, {pipeline_mode = #tpu.pipeline_mode<synchronous>, transform_indices = @transform_5, window_bounds = array<i64: 128, 128>}, {pipeline_mode = #tpu.pipeline_mode<synchronous>, transform_indices = @transform_6, window_bounds = array<i64: 128, 128>}, {pipeline_mode = #tpu.pipeline_mode<synchronous>, transform_indices = @transform_7, window_bounds = array<i64: 1, 128>}, {transform_indices = @transform_8, window_bounds = array<i64: 128, 1>}]} {
    %c0 = arith.constant 0 : index
    %c0_0 = arith.constant 0 : index
    %0 = vector.load %arg1[%c0, %c0_0] : memref<128x128xf32, #tpu.memory_space<vmem>>, vector<128x128xf32>
    %c0_1 = arith.constant 0 : index
    %c0_2 = arith.constant 0 : index
    %1 = vector.load %arg2[%c0_1, %c0_2] : memref<128x128xf32, #tpu.memory_space<vmem>>, vector<128x128xf32>
    %c0_3 = arith.constant 0 : index
    %c0_4 = arith.constant 0 : index
    %2 = vector.load %arg3[%c0_3, %c0_4] : memref<1x128xf32, #tpu.memory_space<vmem>>, vector<1x128xf32>
    %cst = arith.constant dense<0.000000e+00> : vector<128x128xf32>
    %3 = tpu.matmul %0, %1, %cst {dimension_numbers = #tpu.dot_dimension_numbers<[1], [0], [0], [1], [0, 0, 1, 1], [], []>} : vector<128x128xf32>, vector<128x128xf32>, vector<128x128xf32> -> vector<128x128xf32>
    %4 = vector.broadcast %2 : vector<1x128xf32> to vector<128x128xf32>
    %5 = arith.addf %3, %4 : vector<128x128xf32>
    %cst_5 = arith.constant 0.000000e+00 : f32
    %6 = vector.broadcast %cst_5 : f32 to vector<128x128xf32>
    %7 = arith.maximumf %5, %6 : vector<128x128xf32>
    %c0_6 = arith.constant 0 : index
    %c0_7 = arith.constant 0 : index
    %8 = vector.load %arg4[%c0_6, %c0_7] : memref<128x128xf32, #tpu.memory_space<vmem>>, vector<128x128xf32>
    %c0_8 = arith.constant 0 : index
    %c0_9 = arith.constant 0 : index
    %9 = vector.load %arg5[%c0_8, %c0_9] : memref<1x128xf32, #tpu.memory_space<vmem>>, vector<1x128xf32>
    %cst_10 = arith.constant dense<0.000000e+00> : vector<128x128xf32>
    %10 = tpu.matmul %7, %8, %cst_10 {dimension_numbers = #tpu.dot_dimension_numbers<[1], [0], [0], [1], [0, 0, 1, 1], [], []>} : vector<128x128xf32>, vector<128x128xf32>, vector<128x128xf32> -> vector<128x128xf32>
    %11 = vector.broadcast %9 : vector<1x128xf32> to vector<128x128xf32>
    %12 = arith.addf %10, %11 : vector<128x128xf32>
    %cst_11 = arith.constant 0.000000e+00 : f32
    %13 = vector.broadcast %cst_11 : f32 to vector<128x128xf32>
    %14 = arith.maximumf %12, %13 : vector<128x128xf32>
    %c0_12 = arith.constant 0 : index
    %c0_13 = arith.constant 0 : index
    %15 = vector.load %arg6[%c0_12, %c0_13] : memref<128x128xf32, #tpu.memory_space<vmem>>, vector<128x128xf32>
    %cst_14 = arith.constant dense<0.000000e+00> : vector<128x128xf32>
    %16 = tpu.matmul %14, %15, %cst_14 {dimension_numbers = #tpu.dot_dimension_numbers<[1], [0], [0], [1], [0, 0, 1, 1], [], []>} : vector<128x128xf32>, vector<128x128xf32>, vector<128x128xf32> -> vector<128x128xf32>
    %c0_15 = arith.constant 0 : index
    %c0_16 = arith.constant 0 : index
    %17 = vector.load %arg7[%c0_15, %c0_16] : memref<128x128xf32, #tpu.memory_space<vmem>>, vector<128x128xf32>
    %cst_17 = arith.constant dense<0.000000e+00> : vector<128x128xf32>
    %18 = tpu.matmul %0, %17, %cst_17 {dimension_numbers = #tpu.dot_dimension_numbers<[1], [0], [0], [1], [0, 0, 1, 1], [], []>} : vector<128x128xf32>, vector<128x128xf32>, vector<128x128xf32> -> vector<128x128xf32>
    %19 = arith.addf %16, %18 : vector<128x128xf32>
    %c0_18 = arith.constant 0 : index
    %c0_19 = arith.constant 0 : index
    %20 = vector.load %arg8[%c0_18, %c0_19] : memref<1x128xf32, #tpu.memory_space<vmem>>, vector<1x128xf32>
    %21 = vector.broadcast %20 : vector<1x128xf32> to vector<128x128xf32>
    %22 = arith.addf %19, %21 : vector<128x128xf32>
    %23 = vector.extract_strided_slice %22 {offsets = [0, 0], sizes = [128, 1], strides = [1, 1]} : vector<128x128xf32> to vector<128x1xf32>
    %cst_20 = arith.constant 0.000000e+00 : f32
    %24 = vector.broadcast %cst_20 : f32 to vector<128x1xf32>
    %25 = arith.subf %24, %23 : vector<128x1xf32>
    %26 = math.exp %25 : vector<128x1xf32>
    %cst_21 = arith.constant 1.000000e+00 : f32
    %27 = vector.broadcast %cst_21 : f32 to vector<128x1xf32>
    %28 = arith.addf %27, %26 : vector<128x1xf32>
    %cst_22 = arith.constant 1.000000e+00 : f32
    %29 = vector.broadcast %cst_22 : f32 to vector<128x1xf32>
    %30 = arith.divf %29, %28 : vector<128x1xf32>
    %c0_23 = arith.constant 0 : index
    %c0_24 = arith.constant 0 : index
    %31 = vector.load %arg9[%c0_23, %c0_24] : memref<128x1xf32, #tpu.memory_space<vmem>>, vector<128x1xf32>
    tpu.vector_store %arg9[%c0_23, %c0_24], %30 {strides = array<i32>} : memref<128x1xf32, #tpu.memory_space<vmem>>, vector<128x1xf32>,
    return
  }
  func.func @transform_0(%arg0: i32) -> (i32, i32) {
    %c0_i32 = arith.constant 0 : i32
    %c0_i32_0 = arith.constant 0 : i32
    return %arg0, %c0_i32 : i32, i32
  }
  func.func @transform_1(%arg0: i32) -> (i32, i32) {
    %c0_i32 = arith.constant 0 : i32
    %c0_i32_0 = arith.constant 0 : i32
    %c0_i32_1 = arith.constant 0 : i32
    return %c0_i32, %c0_i32_0 : i32, i32
  }
  func.func @transform_2(%arg0: i32) -> (i32, i32) {
    %c0_i32 = arith.constant 0 : i32
    %c0_i32_0 = arith.constant 0 : i32
    %c0_i32_1 = arith.constant 0 : i32
    return %c0_i32, %c0_i32_0 : i32, i32
  }
  func.func @transform_3(%arg0: i32) -> (i32, i32) {
    %c0_i32 = arith.constant 0 : i32
    %c0_i32_0 = arith.constant 0 : i32
    %c0_i32_1 = arith.constant 0 : i32
    return %c0_i32, %c0_i32_0 : i32, i32
  }
  func.func @transform_4(%arg0: i32) -> (i32, i32) {
    %c0_i32 = arith.constant 0 : i32
    %c0_i32_0 = arith.constant 0 : i32
    %c0_i32_1 = arith.constant 0 : i32
    return %c0_i32, %c0_i32_0 : i32, i32
  }
  func.func @transform_5(%arg0: i32) -> (i32, i32) {
    %c0_i32 = arith.constant 0 : i32
    %c0_i32_0 = arith.constant 0 : i32
    %c0_i32_1 = arith.constant 0 : i32
    return %c0_i32, %c0_i32_0 : i32, i32
  }
  func.func @transform_6(%arg0: i32) -> (i32, i32) {
    %c0_i32 = arith.constant 0 : i32
    %c0_i32_0 = arith.constant 0 : i32
    %c0_i32_1 = arith.constant 0 : i32
    return %c0_i32, %c0_i32_0 : i32, i32
  }
  func.func @transform_7(%arg0: i32) -> (i32, i32) {
    %c0_i32 = arith.constant 0 : i32
    %c0_i32_0 = arith.constant 0 : i32
    %c0_i32_1 = arith.constant 0 : i32
    return %c0_i32, %c0_i32_0 : i32, i32
  }
  func.func @transform_8(%arg0: i32) -> (i32, i32) {
    %c0_i32 = arith.constant 0 : i32
    %c0_i32_0 = arith.constant 0 : i32
    return %arg0, %c0_i32 : i32, i32
  }
}

module attributes {stable_mosaic.version = 11 : i64} {
  func.func @kernel(%arg0: i32, %arg1: memref<128x128xf32, #tpu.memory_space<vmem>>, %arg2: memref<128x128xf32, #tpu.memory_space<vmem>>, %arg3: memref<1x128xf32, #tpu.memory_space<vmem>>, %arg4: memref<128x128xf32, #tpu.memory_space<vmem>>, %arg5: memref<1x128xf32, #tpu.memory_space<vmem>>, %arg6: memref<128x128xf32, #tpu.memory_space<vmem>>, %arg7: memref<128x128xf32, #tpu.memory_space<vmem>>, %arg8: memref<1x128xf32, #tpu.memory_space<vmem>>, %arg9: memref<128x1xf32, #tpu.memory_space<vmem>>) attributes {dimension_semantics = [#tpu.dimension_semantics<parallel>], iteration_bounds = array<i64: 1>, scalar_prefetch = 0 : i64, scratch_operands = 0 : i64, tpu.core_type = #tpu.core_type<tc>, window_params = [{transform_indices = @transform_0, window_bounds = array<i64: 128, 128>}, {pipeline_mode = #tpu.pipeline_mode<synchronous>, transform_indices = @transform_1, window_bounds = array<i64: 128, 128>}, {pipeline_mode = #tpu.pipeline_mode<synchronous>, transform_indices = @transform_2, window_bounds = array<i64: 1, 128>}, {pipeline_mode = #tpu.pipeline_mode<synchronous>, transform_indices = @transform_3, window_bounds = array<i64: 128, 128>}, {pipeline_mode = #tpu.pipeline_mode<synchronous>, transform_indices = @transform_4, window_bounds = array<i64: 1, 128>}, {pipeline_mode = #tpu.pipeline_mode<synchronous>, transform_indices = @transform_5, window_bounds = array<i64: 128, 128>}, {pipeline_mode = #tpu.pipeline_mode<synchronous>, transform_indices = @transform_6, window_bounds = array<i64: 128, 128>}, {pipeline_mode = #tpu.pipeline_mode<synchronous>, transform_indices = @transform_7, window_bounds = array<i64: 1, 128>}, {transform_indices = @transform_8, window_bounds = array<i64: 128, 1>}]} {
    %c0 = arith.constant 0 : index
    %c0_0 = arith.constant 0 : index
    %0 = vector.load %arg1[%c0, %c0_0] : memref<128x128xf32, #tpu.memory_space<vmem>>, vector<128x128xf32>
    %c0_1 = arith.constant 0 : index
    %c0_2 = arith.constant 0 : index
    %1 = vector.load %arg2[%c0_1, %c0_2] : memref<128x128xf32, #tpu.memory_space<vmem>>, vector<128x128xf32>
    %c0_3 = arith.constant 0 : index
    %c0_4 = arith.constant 0 : index
    %2 = vector.load %arg3[%c0_3, %c0_4] : memref<1x128xf32, #tpu.memory_space<vmem>>, vector<1x128xf32>
    %cst = arith.constant dense<0.000000e+00> : vector<128x128xf32>
    %3 = tpu.matmul %0, %1, %cst {dimension_numbers = #tpu.dot_dimension_numbers<[1], [0], [0], [1], [0, 0, 1, 1], [], []>} : vector<128x128xf32>, vector<128x128xf32>, vector<128x128xf32> -> vector<128x128xf32>
    %4 = vector.broadcast %2 : vector<1x128xf32> to vector<128x128xf32>
    %5 = arith.addf %3, %4 : vector<128x128xf32>
    %cst_5 = arith.constant 0.000000e+00 : f32
    %6 = vector.broadcast %cst_5 : f32 to vector<128x128xf32>
    %7 = arith.maximumf %5, %6 : vector<128x128xf32>
    %c0_6 = arith.constant 0 : index
    %c0_7 = arith.constant 0 : index
    %8 = vector.load %arg4[%c0_6, %c0_7] : memref<128x128xf32, #tpu.memory_space<vmem>>, vector<128x128xf32>
    %c0_8 = arith.constant 0 : index
    %c0_9 = arith.constant 0 : index
    %9 = vector.load %arg5[%c0_8, %c0_9] : memref<1x128xf32, #tpu.memory_space<vmem>>, vector<1x128xf32>
    %cst_10 = arith.constant dense<0.000000e+00> : vector<128x128xf32>
    %10 = tpu.matmul %7, %8, %cst_10 {dimension_numbers = #tpu.dot_dimension_numbers<[1], [0], [0], [1], [0, 0, 1, 1], [], []>} : vector<128x128xf32>, vector<128x128xf32>, vector<128x128xf32> -> vector<128x128xf32>
    %11 = vector.broadcast %9 : vector<1x128xf32> to vector<128x128xf32>
    %12 = arith.addf %10, %11 : vector<128x128xf32>
    %cst_11 = arith.constant 0.000000e+00 : f32
    %13 = vector.broadcast %cst_11 : f32 to vector<128x128xf32>
    %14 = arith.maximumf %12, %13 : vector<128x128xf32>
    %c0_12 = arith.constant 0 : index
    %c0_13 = arith.constant 0 : index
    %15 = vector.load %arg6[%c0_12, %c0_13] : memref<128x128xf32, #tpu.memory_space<vmem>>, vector<128x128xf32>
    %cst_14 = arith.constant dense<0.000000e+00> : vector<128x128xf32>
    %16 = tpu.matmul %14, %15, %cst_14 {dimension_numbers = #tpu.dot_dimension_numbers<[1], [0], [0], [1], [0, 0, 1, 1], [], []>} : vector<128x128xf32>, vector<128x128xf32>, vector<128x128xf32> -> vector<128x128xf32>
    %c0_15 = arith.constant 0 : index
    %c0_16 = arith.constant 0 : index
    %17 = vector.load %arg7[%c0_15, %c0_16] : memref<128x128xf32, #tpu.memory_space<vmem>>, vector<128x128xf32>
    %cst_17 = arith.constant dense<0.000000e+00> : vector<128x128xf32>
    %18 = tpu.matmul %0, %17, %cst_17 {dimension_numbers = #tpu.dot_dimension_numbers<[1], [0], [0], [1], [0, 0, 1, 1], [], []>} : vector<128x128xf32>, vector<128x128xf32>, vector<128x128xf32> -> vector<128x128xf32>
    %19 = arith.addf %16, %18 : vector<128x128xf32>
    %c0_18 = arith.constant 0 : index
    %c0_19 = arith.constant 0 : index
    %20 = vector.load %arg8[%c0_18, %c0_19] : memref<1x128xf32, #tpu.memory_space<vmem>>, vector<1x128xf32>
    %21 = vector.broadcast %20 : vector<1x128xf32> to vector<128x128xf32>
    %22 = arith.addf %19, %21 : vector<128x128xf32>
    %23 = vector.extract_strided_slice %22 {offsets = [0, 0], sizes = [128, 1], strides = [1, 1]} : vector<128x128xf32> to vector<128x1xf32>
    %cst_20 = arith.constant 0.000000e+00 : f32
    %24 = vector.broadcast %cst_20 : f32 to vector<128x1xf32>
    %25 = arith.subf %24, %23 : vector<128x1xf32>
    %26 = math.exp %25 : vector<128x1xf32>
    %cst_21 = arith.constant 1.000000e+00 : f32
    %27 = vector.broadcast %cst_21 : f32 to vector<128x1xf32>
    %28 = arith.addf %27, %26 : vector<128x1xf32>
    %cst_22 = arith.constant 1.000000e+00 : f32
    %29 = vector.broadcast %cst_22 : f32 to vector<128x1xf32>
    %30 = arith.divf %29, %28 : vector<128x1xf32>
    %c0_23 = arith.constant 0 : index
    %c0_24 = arith.constant 0 : index
    %31 = vector.load %arg9[%c0_23, %c0_24] : memref<128x1xf32, #tpu.memory_space<vmem>>, vector<128x1xf32>
    tpu.vector_store %arg9[%c0_23, %c0_24], %30 {strides = array<i32>} : memref<128x1xf32, #tpu.memory_space<vmem>>, vector<128x1xf32>,
    return
  }
  func.func @transform_0(%arg0: i32) -> (i32, i32) {
    %c0_i32 = arith.constant 0 : i32
    %c0_i32_0 = arith.constant 0 : i32
    return %arg0, %c0_i32 : i32, i32
  }
  func.func @transform_1(%arg0: i32) -> (i32, i32) {
    %c0_i32 = arith.constant 0 : i32
    %c0_i32_0 = arith.constant 0 : i32
    %c0_i32_1 = arith.constant 0 : i32
    return %c0_i32, %c0_i32_0 : i32, i32
  }
  func.func @transform_2(%arg0: i32) -> (i32, i32) {
    %c0_i32 = arith.constant 0 : i32
    %c0_i32_0 = arith.constant 0 : i32
    %c0_i32_1 = arith.constant 0 : i32
    return %c0_i32, %c0_i32_0 : i32, i32
  }
  func.func @transform_3(%arg0: i32) -> (i32, i32) {
    %c0_i32 = arith.constant 0 : i32
    %c0_i32_0 = arith.constant 0 : i32
    %c0_i32_1 = arith.constant 0 : i32
    return %c0_i32, %c0_i32_0 : i32, i32
  }
  func.func @transform_4(%arg0: i32) -> (i32, i32) {
    %c0_i32 = arith.constant 0 : i32
    %c0_i32_0 = arith.constant 0 : i32
    %c0_i32_1 = arith.constant 0 : i32
    return %c0_i32, %c0_i32_0 : i32, i32
  }
  func.func @transform_5(%arg0: i32) -> (i32, i32) {
    %c0_i32 = arith.constant 0 : i32
    %c0_i32_0 = arith.constant 0 : i32
    %c0_i32_1 = arith.constant 0 : i32
    return %c0_i32, %c0_i32_0 : i32, i32
  }
  func.func @transform_6(%arg0: i32) -> (i32, i32) {
    %c0_i32 = arith.constant 0 : i32
    %c0_i32_0 = arith.constant 0 : i32
    %c0_i32_1 = arith.constant 0 : i32
    return %c0_i32, %c0_i32_0 : i32, i32
  }
  func.func @transform_7(%arg0: i32) -> (i32, i32) {
    %c0_i32 = arith.constant 0 : i32
    %c0_i32_0 = arith.constant 0 : i32
    %c0_i32_1 = arith.constant 0 : i32
    return %c0_i32, %c0_i32_0 : i32, i32
  }
  func.func @transform_8(%arg0: i32) -> (i32, i32) {
    %c0_i32 = arith.constant 0 : i32
    %c0_i32_0 = arith.constant 0 : i32
    return %arg0, %c0_i32 : i32, i32
  }
}

module attributes {stable_mosaic.version = 11 : i64} {
  func.func @kernel(%arg0: i32, %arg1: memref<128x128xf32, #tpu.memory_space<vmem>>, %arg2: memref<128x128xf32, #tpu.memory_space<vmem>>, %arg3: memref<1x128xf32, #tpu.memory_space<vmem>>, %arg4: memref<128x128xf32, #tpu.memory_space<vmem>>, %arg5: memref<1x128xf32, #tpu.memory_space<vmem>>, %arg6: memref<128x128xf32, #tpu.memory_space<vmem>>, %arg7: memref<128x128xf32, #tpu.memory_space<vmem>>, %arg8: memref<1x128xf32, #tpu.memory_space<vmem>>, %arg9: memref<128x128xf32, #tpu.memory_space<vmem>>) attributes {dimension_semantics = [#tpu.dimension_semantics<parallel>], iteration_bounds = array<i64: 1>, scalar_prefetch = 0 : i64, scratch_operands = 0 : i64, tpu.core_type = #tpu.core_type<tc>, window_params = [{transform_indices = @transform_0, window_bounds = array<i64: 128, 128>}, {pipeline_mode = #tpu.pipeline_mode<synchronous>, transform_indices = @transform_1, window_bounds = array<i64: 128, 128>}, {pipeline_mode = #tpu.pipeline_mode<synchronous>, transform_indices = @transform_2, window_bounds = array<i64: 1, 128>}, {pipeline_mode = #tpu.pipeline_mode<synchronous>, transform_indices = @transform_3, window_bounds = array<i64: 128, 128>}, {pipeline_mode = #tpu.pipeline_mode<synchronous>, transform_indices = @transform_4, window_bounds = array<i64: 1, 128>}, {pipeline_mode = #tpu.pipeline_mode<synchronous>, transform_indices = @transform_5, window_bounds = array<i64: 128, 128>}, {pipeline_mode = #tpu.pipeline_mode<synchronous>, transform_indices = @transform_6, window_bounds = array<i64: 128, 128>}, {pipeline_mode = #tpu.pipeline_mode<synchronous>, transform_indices = @transform_7, window_bounds = array<i64: 1, 128>}, {transform_indices = @transform_8, window_bounds = array<i64: 128, 128>}]} {
    %c0 = arith.constant 0 : index
    %c0_0 = arith.constant 0 : index
    %0 = vector.load %arg1[%c0, %c0_0] : memref<128x128xf32, #tpu.memory_space<vmem>>, vector<128x128xf32>
    %c0_1 = arith.constant 0 : index
    %c0_2 = arith.constant 0 : index
    %1 = vector.load %arg2[%c0_1, %c0_2] : memref<128x128xf32, #tpu.memory_space<vmem>>, vector<128x128xf32>
    %c0_3 = arith.constant 0 : index
    %c0_4 = arith.constant 0 : index
    %2 = vector.load %arg3[%c0_3, %c0_4] : memref<1x128xf32, #tpu.memory_space<vmem>>, vector<1x128xf32>
    %cst = arith.constant dense<0.000000e+00> : vector<128x128xf32>
    %3 = tpu.matmul %0, %1, %cst {dimension_numbers = #tpu.dot_dimension_numbers<[1], [0], [0], [1], [0, 0, 1, 1], [], []>} : vector<128x128xf32>, vector<128x128xf32>, vector<128x128xf32> -> vector<128x128xf32>
    %4 = vector.broadcast %2 : vector<1x128xf32> to vector<128x128xf32>
    %5 = arith.addf %3, %4 : vector<128x128xf32>
    %cst_5 = arith.constant 0.000000e+00 : f32
    %6 = vector.broadcast %cst_5 : f32 to vector<128x128xf32>
    %7 = arith.maximumf %5, %6 : vector<128x128xf32>
    %c0_6 = arith.constant 0 : index
    %c0_7 = arith.constant 0 : index
    %8 = vector.load %arg4[%c0_6, %c0_7] : memref<128x128xf32, #tpu.memory_space<vmem>>, vector<128x128xf32>
    %c0_8 = arith.constant 0 : index
    %c0_9 = arith.constant 0 : index
    %9 = vector.load %arg5[%c0_8, %c0_9] : memref<1x128xf32, #tpu.memory_space<vmem>>, vector<1x128xf32>
    %cst_10 = arith.constant dense<0.000000e+00> : vector<128x128xf32>
    %10 = tpu.matmul %7, %8, %cst_10 {dimension_numbers = #tpu.dot_dimension_numbers<[1], [0], [0], [1], [0, 0, 1, 1], [], []>} : vector<128x128xf32>, vector<128x128xf32>, vector<128x128xf32> -> vector<128x128xf32>
    %11 = vector.broadcast %9 : vector<1x128xf32> to vector<128x128xf32>
    %12 = arith.addf %10, %11 : vector<128x128xf32>
    %cst_11 = arith.constant 0.000000e+00 : f32
    %13 = vector.broadcast %cst_11 : f32 to vector<128x128xf32>
    %14 = arith.maximumf %12, %13 : vector<128x128xf32>
    %c0_12 = arith.constant 0 : index
    %c0_13 = arith.constant 0 : index
    %15 = vector.load %arg6[%c0_12, %c0_13] : memref<128x128xf32, #tpu.memory_space<vmem>>, vector<128x128xf32>
    %cst_14 = arith.constant dense<0.000000e+00> : vector<128x128xf32>
    %16 = tpu.matmul %14, %15, %cst_14 {dimension_numbers = #tpu.dot_dimension_numbers<[1], [0], [0], [1], [0, 0, 1, 1], [], []>} : vector<128x128xf32>, vector<128x128xf32>, vector<128x128xf32> -> vector<128x128xf32>
    %c0_15 = arith.constant 0 : index
    %c0_16 = arith.constant 0 : index
    %17 = vector.load %arg7[%c0_15, %c0_16] : memref<128x128xf32, #tpu.memory_space<vmem>>, vector<128x128xf32>
    %cst_17 = arith.constant dense<0.000000e+00> : vector<128x128xf32>
    %18 = tpu.matmul %0, %17, %cst_17 {dimension_numbers = #tpu.dot_dimension_numbers<[1], [0], [0], [1], [0, 0, 1, 1], [], []>} : vector<128x128xf32>, vector<128x128xf32>, vector<128x128xf32> -> vector<128x128xf32>
    %19 = arith.addf %16, %18 : vector<128x128xf32>
    %c0_18 = arith.constant 0 : index
    %c0_19 = arith.constant 0 : index
    %20 = vector.load %arg8[%c0_18, %c0_19] : memref<1x128xf32, #tpu.memory_space<vmem>>, vector<1x128xf32>
    %21 = vector.broadcast %20 : vector<1x128xf32> to vector<128x128xf32>
    %22 = arith.addf %19, %21 : vector<128x128xf32>
    %cst_20 = arith.constant 0.000000e+00 : f32
    %23 = vector.broadcast %cst_20 : f32 to vector<128x128xf32>
    %24 = arith.subf %23, %22 : vector<128x128xf32>
    %25 = math.exp %24 : vector<128x128xf32>
    %cst_21 = arith.constant 1.000000e+00 : f32
    %26 = vector.broadcast %cst_21 : f32 to vector<128x128xf32>
    %27 = arith.addf %26, %25 : vector<128x128xf32>
    %cst_22 = arith.constant 1.000000e+00 : f32
    %28 = vector.broadcast %cst_22 : f32 to vector<128x128xf32>
    %29 = arith.divf %28, %27 : vector<128x128xf32>
    %c0_23 = arith.constant 0 : index
    %c0_24 = arith.constant 0 : index
    %30 = vector.load %arg9[%c0_23, %c0_24] : memref<128x128xf32, #tpu.memory_space<vmem>>, vector<128x128xf32>
    tpu.vector_store %arg9[%c0_23, %c0_24], %29 {strides = array<i32>} : memref<128x128xf32, #tpu.memory_space<vmem>>, vector<128x128xf32>,
    return
  }
  func.func @transform_0(%arg0: i32) -> (i32, i32) {
    %c0_i32 = arith.constant 0 : i32
    %c0_i32_0 = arith.constant 0 : i32
    return %arg0, %c0_i32 : i32, i32
  }
  func.func @transform_1(%arg0: i32) -> (i32, i32) {
    %c0_i32 = arith.constant 0 : i32
    %c0_i32_0 = arith.constant 0 : i32
    %c0_i32_1 = arith.constant 0 : i32
    return %c0_i32, %c0_i32_0 : i32, i32
  }
  func.func @transform_2(%arg0: i32) -> (i32, i32) {
    %c0_i32 = arith.constant 0 : i32
    %c0_i32_0 = arith.constant 0 : i32
    %c0_i32_1 = arith.constant 0 : i32
    return %c0_i32, %c0_i32_0 : i32, i32
  }
  func.func @transform_3(%arg0: i32) -> (i32, i32) {
    %c0_i32 = arith.constant 0 : i32
    %c0_i32_0 = arith.constant 0 : i32
    %c0_i32_1 = arith.constant 0 : i32
    return %c0_i32, %c0_i32_0 : i32, i32
  }
  func.func @transform_4(%arg0: i32) -> (i32, i32) {
    %c0_i32 = arith.constant 0 : i32
    %c0_i32_0 = arith.constant 0 : i32
    %c0_i32_1 = arith.constant 0 : i32
    return %c0_i32, %c0_i32_0 : i32, i32
  }
  func.func @transform_5(%arg0: i32) -> (i32, i32) {
    %c0_i32 = arith.constant 0 : i32
    %c0_i32_0 = arith.constant 0 : i32
    %c0_i32_1 = arith.constant 0 : i32
    return %c0_i32, %c0_i32_0 : i32, i32
  }
  func.func @transform_6(%arg0: i32) -> (i32, i32) {
    %c0_i32 = arith.constant 0 : i32
    %c0_i32_0 = arith.constant 0 : i32
    %c0_i32_1 = arith.constant 0 : i32
    return %c0_i32, %c0_i32_0 : i32, i32
  }
  func.func @transform_7(%arg0: i32) -> (i32, i32) {
    %c0_i32 = arith.constant 0 : i32
    %c0_i32_0 = arith.constant 0 : i32
    %c0_i32_1 = arith.constant 0 : i32
    return %c0_i32, %c0_i32_0 : i32, i32
  }
  func.func @transform_8(%arg0: i32) -> (i32, i32) {
    %c0_i32 = arith.constant 0 : i32
    %c0_i32_0 = arith.constant 0 : i32
    return %arg0, %c0_i32 : i32, i32
  }
}

</mosaic_0001>

<llo_original>
// kernel: tpu_custom_call.1
$region0: #{tpu_custom_call.1}
  #allocation0 [shape = 'u32[]', space=smem, size = 0x4, offset = 0x4, fixed_abs, tag = 'smem constant byte address 0x4 - core index']
  #allocation1 [shape = 'u32[144,128]{1,0:T(1,128)}', space=vmem, size = 0x12000, scoped, tag = 'internal scratch']
  %s0 = inlined_call_operand.hbm [shape: f32[128,128], index: 0, kind: input, shape index: {}]
  %s1 = inlined_call_operand.hbm [shape: f32[128,128], index: 1, kind: input, shape index: {}]
  %s2 = inlined_call_operand.vmem [shape: f32[1,128], index: 2, kind: input, shape index: {}]
  %s3 = inlined_call_operand.hbm [shape: f32[128,128], index: 3, kind: input, shape index: {}]
  %s4 = inlined_call_operand.vmem [shape: f32[1,128], index: 4, kind: input, shape index: {}]
  %s5 = inlined_call_operand.hbm [shape: f32[128,128], index: 5, kind: input, shape index: {}]
  %s6 = inlined_call_operand.hbm [shape: f32[128,128], index: 6, kind: input, shape index: {}]
  %s7 = inlined_call_operand.vmem [shape: f32[1,128], index: 7, kind: input, shape index: {}]
  %s8 = inlined_call_operand.vmem [shape: f32[128,1], index: 8, kind: output, shape index: {}]
  %s9 = sld [smem:[#allocation0]]
  $region62: #{tpu_custom_call.1} parent=0
    _
  %s11 = ssub.s32 1, %s9
  %s12 = scalar_select 0, %s11, %s9
  $region1: #{tpu_custom_call.1} parent=0
    #allocation2 [shape = 'u8[65536]{0}', space=vmem, size = 0x10000, scoped, tag = 'input window, operand 0, single buffered']
    #allocation3 [shape = 's32[1]{0}', space=sflag, size = 0x4, scoped, tag = 'scoped memory for tpu_custom_call.1']
    #allocation4 [shape = 'u8[65536]{0}', space=vmem, size = 0x10000, scoped, tag = 'input window, operand 1, single buffered']
    #allocation5 [shape = 's32[1]{0}', space=sflag, size = 0x4, scoped, tag = 'scoped memory for tpu_custom_call.1']
    #allocation6 [shape = 'u8[65536]{0}', space=vmem, size = 0x10000, scoped, tag = 'input window, operand 3, single buffered']
    #allocation7 [shape = 'u8[65536]{0}', space=vmem, size = 0x10000, scoped, tag = 'input window, operand 5, single buffered']
    #allocation8 [shape = 's32[1]{0}', space=sflag, size = 0x4, scoped, tag = 'scoped memory for tpu_custom_call.1']
    #allocation9 [shape = 'u8[65536]{0}', space=vmem, size = 0x10000, scoped, tag = 'input window, operand 6, single buffered']
    %13 = vsyncpa [#allocation3], 0
    %14 = vsyncpa [#allocation5], 0
    %15 = vsyncpa [#allocation8], 0
    // Predicated region
    $region2: #{tpu_custom_call.1} parent=1 // pred_check
      _
    $region3: #{tpu_custom_call.1} parent=1 // pred_check_branch
      %17 = sbr.rel (0) target = $region5
    $region4: #{tpu_custom_call.1} parent=1 // pred_region
      %s19 = ssub.s32 2048, 2048
      %20 = vsyncadd [#allocation3], %s19
      %s21 = sshll.u32 [#allocation2], 4
      %s22 = int_to_ptr.vmem [resolvable:$true] %s21
      %27 = dma.hbm_to_vmem [thread:$0]  %s0, 2048, %s22, [#allocation3], 128, 128, 8
    $region5: #{tpu_custom_call.1} parent=1 // pred_fallthru
      _
    // Predicated region
    $region6: #{tpu_custom_call.1} parent=1 // pred_check
      _
    $region7: #{tpu_custom_call.1} parent=1 // pred_check_branch
      %29 = sbr.rel (0) target = $region9
    $region8: #{tpu_custom_call.1} parent=1 // pred_region
      %s31 = ssub.s32 2048, 2048
      %32 = vsyncadd [#allocation5], %s31
      %s33 = sshll.u32 [#allocation4], 4
      %s34 = int_to_ptr.vmem [resolvable:$true] %s33
      %39 = dma.hbm_to_vmem [thread:$0]  %s1, 2048, %s34, [#allocation5], 128, 128, 8
    $region9: #{tpu_custom_call.1} parent=1 // pred_fallthru
      _
    // Predicated region
    $region10: #{tpu_custom_call.1} parent=1 // pred_check
      _
    $region11: #{tpu_custom_call.1} parent=1 // pred_check_branch
      %41 = sbr.rel (0) target = $region13
    $region12: #{tpu_custom_call.1} parent=1 // pred_region
      _
    $region13: #{tpu_custom_call.1} parent=1 // pred_fallthru
      _
    // Predicated region
    $region14: #{tpu_custom_call.1} parent=1 // pred_check
      _
    $region15: #{tpu_custom_call.1} parent=1 // pred_check_branch
      %43 = sbr.rel (0) target = $region17
    $region16: #{tpu_custom_call.1} parent=1 // pred_region
      %s45 = ssub.s32 2048, 2048
      %46 = vsyncadd [#allocation5], %s45
      %s47 = sshll.u32 [#allocation6], 4
      %s48 = int_to_ptr.vmem [resolvable:$true] %s47
      %53 = dma.hbm_to_vmem [thread:$0]  %s3, 2048, %s48, [#allocation5], 128, 128, 8
    $region17: #{tpu_custom_call.1} parent=1 // pred_fallthru
      _
    // Predicated region
    $region18: #{tpu_custom_call.1} parent=1 // pred_check
      _
    $region19: #{tpu_custom_call.1} parent=1 // pred_check_branch
      %55 = sbr.rel (0) target = $region21
    $region20: #{tpu_custom_call.1} parent=1 // pred_region
      _
    $region21: #{tpu_custom_call.1} parent=1 // pred_fallthru
      _
    // Predicated region
    $region22: #{tpu_custom_call.1} parent=1 // pred_check
      _
    $region23: #{tpu_custom_call.1} parent=1 // pred_check_branch
      %57 = sbr.rel (0) target = $region25
    $region24: #{tpu_custom_call.1} parent=1 // pred_region
      %s59 = ssub.s32 2048, 2048
      %60 = vsyncadd [#allocation8], %s59
      %s61 = sshll.u32 [#allocation7], 4
      %s62 = int_to_ptr.vmem [resolvable:$true] %s61
      %67 = dma.hbm_to_vmem [thread:$0]  %s5, 2048, %s62, [#allocation8], 128, 128, 8
    $region25: #{tpu_custom_call.1} parent=1 // pred_fallthru
      _
    // Predicated region
    $region26: #{tpu_custom_call.1} parent=1 // pred_check
      _
    $region27: #{tpu_custom_call.1} parent=1 // pred_check_branch
      %69 = sbr.rel (0) target = $region29
    $region28: #{tpu_custom_call.1} parent=1 // pred_region
      %s71 = ssub.s32 2048, 2048
      %72 = vsyncadd [#allocation8], %s71
      %s73 = sshll.u32 [#allocation9], 4
      %s74 = int_to_ptr.vmem [resolvable:$true] %s73
      %79 = dma.hbm_to_vmem [thread:$0]  %s6, 2048, %s74, [#allocation8], 128, 128, 8
    $region29: #{tpu_custom_call.1} parent=1 // pred_fallthru
      _
    // Predicated region
    $region30: #{tpu_custom_call.1} parent=1 // pred_check
      _
    $region31: #{tpu_custom_call.1} parent=1 // pred_check_branch
      %81 = sbr.rel (0) target = $region33
    $region32: #{tpu_custom_call.1} parent=1 // pred_region
      _
    $region33: #{tpu_custom_call.1} parent=1 // pred_fallthru
      _
    // Predicated region
    $region34: #{tpu_custom_call.1} parent=1 // pred_check
      _
    $region35: #{tpu_custom_call.1} parent=1 // pred_check_branch
      %83 = sbr.rel (0) target = $region37
    $region36: #{tpu_custom_call.1} parent=1 // pred_region
      %84 = dma.done [#allocation3], 2048
    $region37: #{tpu_custom_call.1} parent=1 // pred_fallthru
      _
    // Predicated region
    $region38: #{tpu_custom_call.1} parent=1 // pred_check
      _
    $region39: #{tpu_custom_call.1} parent=1 // pred_check_branch
      %86 = sbr.rel (0) target = $region41
    $region40: #{tpu_custom_call.1} parent=1 // pred_region
      %87 = dma.done [#allocation5], 2048
    $region41: #{tpu_custom_call.1} parent=1 // pred_fallthru
      _
    // Predicated region
    $region42: #{tpu_custom_call.1} parent=1 // pred_check
      _
    $region43: #{tpu_custom_call.1} parent=1 // pred_check_branch
      %89 = sbr.rel (0) target = $region45
    $region44: #{tpu_custom_call.1} parent=1 // pred_region
      %90 = dma.done [#allocation5], 2048
    $region45: #{tpu_custom_call.1} parent=1 // pred_fallthru
      _
    // Predicated region
    $region46: #{tpu_custom_call.1} parent=1 // pred_check
      _
    $region47: #{tpu_custom_call.1} parent=1 // pred_check_branch
      %92 = sbr.rel (0) target = $region49
    $region48: #{tpu_custom_call.1} parent=1 // pred_region
      %93 = dma.done [#allocation8], 2048
    $region49: #{tpu_custom_call.1} parent=1 // pred_fallthru
      _
    // Predicated region
    $region50: #{tpu_custom_call.1} parent=1 // pred_check
      _
    $region51: #{tpu_custom_call.1} parent=1 // pred_check_branch
      %95 = sbr.rel (0) target = $region53
    $region52: #{tpu_custom_call.1} parent=1 // pred_region
      %96 = dma.done [#allocation8], 2048
    $region53: #{tpu_custom_call.1} parent=1 // pred_fallthru
      _
    %v97 = vld [vmem:[#allocation2] sm:$0xff]
    %v98 = vld [vmem:[#allocation2 + $0x8] sm:$0xff]
    %v99 = vld [vmem:[#allocation2 + $0x10] sm:$0xff]
    %v100 = vld [vmem:[#allocation2 + $0x18] sm:$0xff]
    %v101 = vld [vmem:[#allocation2 + $0x20] sm:$0xff]
    %v102 = vld [vmem:[#allocation2 + $0x28] sm:$0xff]
    %v103 = vld [vmem:[#allocation2 + $0x30] sm:$0xff]
    %v104 = vld [vmem:[#allocation2 + $0x38] sm:$0xff]
    %v105 = vld [vmem:[#allocation2 + $0x40] sm:$0xff]
    %v106 = vld [vmem:[#allocation2 + $0x48] sm:$0xff]
    %v107 = vld [vmem:[#allocation2 + $0x50] sm:$0xff]
    %v108 = vld [vmem:[#allocation2 + $0x58] sm:$0xff]
    %v109 = vld [vmem:[#allocation2 + $0x60] sm:$0xff]
    %v110 = vld [vmem:[#allocation2 + $0x68] sm:$0xff]
    %v111 = vld [vmem:[#allocation2 + $0x70] sm:$0xff]
    %v112 = vld [vmem:[#allocation2 + $0x78] sm:$0xff]
    %v113 = vld [vmem:[#allocation4] sm:$0xff]
    %v114 = vld [vmem:[#allocation4 + $0x8] sm:$0xff]
    %v115 = vld [vmem:[#allocation4 + $0x10] sm:$0xff]
    %v116 = vld [vmem:[#allocation4 + $0x18] sm:$0xff]
    %v117 = vld [vmem:[#allocation4 + $0x20] sm:$0xff]
    %v118 = vld [vmem:[#allocation4 + $0x28] sm:$0xff]
    %v119 = vld [vmem:[#allocation4 + $0x30] sm:$0xff]
    %v120 = vld [vmem:[#allocation4 + $0x38] sm:$0xff]
    %v121 = vld [vmem:[#allocation4 + $0x40] sm:$0xff]
    %v122 = vld [vmem:[#allocation4 + $0x48] sm:$0xff]
    %v123 = vld [vmem:[#allocation4 + $0x50] sm:$0xff]
    %v124 = vld [vmem:[#allocation4 + $0x58] sm:$0xff]
    %v125 = vld [vmem:[#allocation4 + $0x60] sm:$0xff]
    %v126 = vld [vmem:[#allocation4 + $0x68] sm:$0xff]
    %v127 = vld [vmem:[#allocation4 + $0x70] sm:$0xff]
    %v128 = vld [vmem:[#allocation4 + $0x78] sm:$0xff]
    %v129 = vld [vmem:[%s2] sm:$0x1]
    %v131 = vlaneseq
    %v132 = vshrl.u32 %v131, 7
    %v133 = vsub.s32 0, %v132
    %v134 = vrot.slane %v129, %v133
    %136 = vmatprep.subr.mxu0 0.0
    %137 = vmatpush1.msra.mxu0 %v113
    %138 = vmatprep.subr.mxu0 0.0
    %139 = vmatpush1.msra.mxu0 %v114
    %140 = vmatprep.subr.mxu0 0.0
    %141 = vmatpush1.msra.mxu0 %v115
    %142 = vmatprep.subr.mxu0 0.0
    %143 = vmatpush1.msra.mxu0 %v116
    %144 = vmatprep.subr.mxu0 0.0
    %145 = vmatpush1.msra.mxu0 %v117
    %146 = vmatprep.subr.mxu0 0.0
    %147 = vmatpush1.msra.mxu0 %v118
    %148 = vmatprep.subr.mxu0 0.0
    %149 = vmatpush1.msra.mxu0 %v119
    %150 = vmatprep.subr.mxu0 0.0
    %151 = vmatpush1.msra.mxu0 %v120
    %152 = vmatprep.subr.mxu0 0.0
    %153 = vmatpush1.msra.mxu0 %v121
    %154 = vmatprep.subr.mxu0 0.0
    %155 = vmatpush1.msra.mxu0 %v122
    %156 = vmatprep.subr.mxu0 0.0
    %157 = vmatpush1.msra.mxu0 %v123
    %158 = vmatprep.subr.mxu0 0.0
    %159 = vmatpush1.msra.mxu0 %v124
    %160 = vmatprep.subr.mxu0 0.0
    %161 = vmatpush1.msra.mxu0 %v125
    %162 = vmatprep.subr.mxu0 0.0
    %163 = vmatpush1.msra.mxu0 %v126
    %164 = vmatprep.subr.mxu0 0.0
    %165 = vmatpush1.msra.mxu0 %v127
    %166 = vmatprep.subr.mxu0 0.0
    %167 = vmatpush1.msra.mxu0 %v128
    %168 = vmatprep.subr.mxu0 0.0
    %169 = vmatpush1.msra.mxu0 0.0
    %170 = vmatprep.subr.mxu0 0.0
    %171 = vmatpush1.msra.mxu0 0.0
    %172 = vmatprep.subr.mxu0 0.0
    %173 = vmatpush1.msra.mxu0 0.0
    %174 = vmatprep.subr.mxu0 0.0
    %175 = vmatpush1.msra.mxu0 0.0
    %176 = vmatprep.subr.mxu0 0.0
    %177 = vmatpush1.msra.mxu0 0.0
    %178 = vmatprep.subr.mxu0 0.0
    %179 = vmatpush1.msra.mxu0 0.0
    %180 = vmatprep.subr.mxu0 0.0
    %181 = vmatpush1.msra.mxu0 0.0
    %182 = vmatprep.subr.mxu0 0.0
    %183 = vmatpush1.msra.mxu0 0.0
    %184 = vmatprep.subr.mxu0 0.0
    %185 = vmatpush1.msra.mxu0 0.0
    %186 = vmatprep.subr.mxu0 0.0
    %187 = vmatpush1.msra.mxu0 0.0
    %188 = vmatprep.subr.mxu0 0.0
    %189 = vmatpush1.msra.mxu0 0.0
    %190 = vmatprep.subr.mxu0 0.0
    %191 = vmatpush1.msra.mxu0 0.0
    %192 = vmatprep.subr.mxu0 0.0
    %193 = vmatpush1.msra.mxu0 0.0
    %194 = vmatprep.subr.mxu0 0.0
    %195 = vmatpush1.msra.mxu0 0.0
    %196 = vmatprep.subr.mxu0 0.0
    %197 = vmatpush1.msra.mxu0 0.0
    %198 = vmatprep.subr.mxu0 0.0
    %199 = vmatpush1.msra.mxu0 0.0
    %200 = vmatprep.mubr.f32.mxu0 0.0
    %201 = vmatmul.mubr.f32.gmra.mrb[0].mxu0 %v97
    %v202 = vpop.f32.mrb[0].mxu0
    %v203 = vadd.f32 %v134, %v202
    %v204 = vpop.f32.mrb[0].mxu0
    %205 = vmatprep.mubr.f32.mxu0 0.0
    %206 = vmatmul.mubr.f32.gmra.mrb[0].mxu0 %v98
    %v207 = vpop.f32.mrb[0].mxu0
    %v208 = vadd.f32 %v134, %v207
    %v209 = vpop.f32.mrb[0].mxu0
    %210 = vmatprep.mubr.f32.mxu0 0.0
    %211 = vmatmul.mubr.f32.gmra.mrb[0].mxu0 %v99
    %v212 = vpop.f32.mrb[0].mxu0
    %v213 = vadd.f32 %v134, %v212
    %v214 = vpop.f32.mrb[0].mxu0
    %215 = vmatprep.mubr.f32.mxu0 0.0
    %216 = vmatmul.mubr.f32.gmra.mrb[0].mxu0 %v100
    %v217 = vpop.f32.mrb[0].mxu0
    %v218 = vadd.f32 %v134, %v217
    %v219 = vpop.f32.mrb[0].mxu0
    %220 = vmatprep.mubr.f32.mxu0 0.0
    %221 = vmatmul.mubr.f32.gmra.mrb[0].mxu0 %v101
    %v222 = vpop.f32.mrb[0].mxu0
    %v223 = vadd.f32 %v134, %v222
    %v224 = vpop.f32.mrb[0].mxu0
    %225 = vmatprep.mubr.f32.mxu0 0.0
    %226 = vmatmul.mubr.f32.gmra.mrb[0].mxu0 %v102
    %v227 = vpop.f32.mrb[0].mxu0
    %v228 = vadd.f32 %v134, %v227
    %v229 = vpop.f32.mrb[0].mxu0
    %230 = vmatprep.mubr.f32.mxu0 0.0
    %231 = vmatmul.mubr.f32.gmra.mrb[0].mxu0 %v103
    %v232 = vpop.f32.mrb[0].mxu0
    %v233 = vadd.f32 %v134, %v232
    %v234 = vpop.f32.mrb[0].mxu0
    %235 = vmatprep.mubr.f32.mxu0 0.0
    %236 = vmatmul.mubr.f32.gmra.mrb[0].mxu0 %v104
    %v237 = vpop.f32.mrb[0].mxu0
    %v238 = vadd.f32 %v134, %v237
    %v239 = vpop.f32.mrb[0].mxu0
    %240 = vmatprep.mubr.f32.mxu0 0.0
    %241 = vmatmul.mubr.f32.gmra.mrb[0].mxu0 %v105
    %v242 = vpop.f32.mrb[0].mxu0
    %v243 = vadd.f32 %v134, %v242
    %v244 = vpop.f32.mrb[0].mxu0
    %245 = vmatprep.mubr.f32.mxu0 0.0
    %246 = vmatmul.mubr.f32.gmra.mrb[0].mxu0 %v106
    %v247 = vpop.f32.mrb[0].mxu0
    %v248 = vadd.f32 %v134, %v247
    %v249 = vpop.f32.mrb[0].mxu0
    %250 = vmatprep.mubr.f32.mxu0 0.0
    %251 = vmatmul.mubr.f32.gmra.mrb[0].mxu0 %v107
    %v252 = vpop.f32.mrb[0].mxu0
    %v253 = vadd.f32 %v134, %v252
    %v254 = vpop.f32.mrb[0].mxu0
    %255 = vmatprep.mubr.f32.mxu0 0.0
    %256 = vmatmul.mubr.f32.gmra.mrb[0].mxu0 %v108
    %v257 = vpop.f32.mrb[0].mxu0
    %v258 = vadd.f32 %v134, %v257
    %v259 = vpop.f32.mrb[0].mxu0
    %260 = vmatprep.mubr.f32.mxu0 0.0
    %261 = vmatmul.mubr.f32.gmra.mrb[0].mxu0 %v109
    %v262 = vpop.f32.mrb[0].mxu0
    %v263 = vadd.f32 %v134, %v262
    %v264 = vpop.f32.mrb[0].mxu0
    %265 = vmatprep.mubr.f32.mxu0 0.0
    %266 = vmatmul.mubr.f32.gmra.mrb[0].mxu0 %v110
    %v267 = vpop.f32.mrb[0].mxu0
    %v268 = vadd.f32 %v134, %v267
    %v269 = vpop.f32.mrb[0].mxu0
    %270 = vmatprep.mubr.f32.mxu0 0.0
    %271 = vmatmul.mubr.f32.gmra.mrb[0].mxu0 %v111
    %v272 = vpop.f32.mrb[0].mxu0
    %v273 = vadd.f32 %v134, %v272
    %v274 = vpop.f32.mrb[0].mxu0
    %275 = vmatprep.mubr.f32.mxu0 0.0
    %276 = vmatmul.mubr.f32.gmra.mrb[0].mxu0 %v112
    %v277 = vpop.f32.mrb[0].mxu0
    %v278 = vadd.f32 %v134, %v277
    %v279 = vpop.f32.mrb[0].mxu0
    %280 = vdwg.mxu0
    %v281 = vmax.f32 %v203, 0.0
    %v282 = vmax.f32 %v208, 0.0
    %v283 = vmax.f32 %v213, 0.0
    %v284 = vmax.f32 %v218, 0.0
    %v285 = vmax.f32 %v223, 0.0
    %v286 = vmax.f32 %v228, 0.0
    %v287 = vmax.f32 %v233, 0.0
    %v288 = vmax.f32 %v238, 0.0
    %v289 = vmax.f32 %v243, 0.0
    %v290 = vmax.f32 %v248, 0.0
    %v291 = vmax.f32 %v253, 0.0
    %v292 = vmax.f32 %v258, 0.0
    %v293 = vmax.f32 %v263, 0.0
    %v294 = vmax.f32 %v268, 0.0
    %v295 = vmax.f32 %v273, 0.0
    %v296 = vmax.f32 %v278, 0.0
    %v297 = vld [vmem:[#allocation6] sm:$0xff]
    %v298 = vld [vmem:[#allocation6 + $0x8] sm:$0xff]
    %v299 = vld [vmem:[#allocation6 + $0x10] sm:$0xff]
    %v300 = vld [vmem:[#allocation6 + $0x18] sm:$0xff]
    %v301 = vld [vmem:[#allocation6 + $0x20] sm:$0xff]
    %v302 = vld [vmem:[#allocation6 + $0x28] sm:$0xff]
    %v303 = vld [vmem:[#allocation6 + $0x30] sm:$0xff]
    %v304 = vld [vmem:[#allocation6 + $0x38] sm:$0xff]
    %v305 = vld [vmem:[#allocation6 + $0x40] sm:$0xff]
    %v306 = vld [vmem:[#allocation6 + $0x48] sm:$0xff]
    %v307 = vld [vmem:[#allocation6 + $0x50] sm:$0xff]
    %v308 = vld [vmem:[#allocation6 + $0x58] sm:$0xff]
    %v309 = vld [vmem:[#allocation6 + $0x60] sm:$0xff]
    %v310 = vld [vmem:[#allocation6 + $0x68] sm:$0xff]
    %v311 = vld [vmem:[#allocation6 + $0x70] sm:$0xff]
    %v312 = vld [vmem:[#allocation6 + $0x78] sm:$0xff]
    %v313 = vld [vmem:[%s4] sm:$0x1]
    %v315 = vlaneseq
    %v316 = vshrl.u32 %v315, 7
    %v317 = vsub.s32 0, %v316
    %v318 = vrot.slane %v313, %v317
    %320 = vmatprep.subr.mxu0 0.0
    %321 = vmatpush1.msra.mxu0 %v297
    %322 = vmatprep.subr.mxu0 0.0
    %323 = vmatpush1.msra.mxu0 %v298
    %324 = vmatprep.subr.mxu0 0.0
    %325 = vmatpush1.msra.mxu0 %v299
    %326 = vmatprep.subr.mxu0 0.0
    %327 = vmatpush1.msra.mxu0 %v300
    %328 = vmatprep.subr.mxu0 0.0
    %329 = vmatpush1.msra.mxu0 %v301
    %330 = vmatprep.subr.mxu0 0.0
    %331 = vmatpush1.msra.mxu0 %v302
    %332 = vmatprep.subr.mxu0 0.0
    %333 = vmatpush1.msra.mxu0 %v303
    %334 = vmatprep.subr.mxu0 0.0
    %335 = vmatpush1.msra.mxu0 %v304
    %336 = vmatprep.subr.mxu0 0.0
    %337 = vmatpush1.msra.mxu0 %v305
    %338 = vmatprep.subr.mxu0 0.0
    %339 = vmatpush1.msra.mxu0 %v306
    %340 = vmatprep.subr.mxu0 0.0
    %341 = vmatpush1.msra.mxu0 %v307
    %342 = vmatprep.subr.mxu0 0.0
    %343 = vmatpush1.msra.mxu0 %v308
    %344 = vmatprep.subr.mxu0 0.0
    %345 = vmatpush1.msra.mxu0 %v309
    %346 = vmatprep.subr.mxu0 0.0
    %347 = vmatpush1.msra.mxu0 %v310
    %348 = vmatprep.subr.mxu0 0.0
    %349 = vmatpush1.msra.mxu0 %v311
    %350 = vmatprep.subr.mxu0 0.0
    %351 = vmatpush1.msra.mxu0 %v312
    %352 = vmatprep.subr.mxu0 0.0
    %353 = vmatpush1.msra.mxu0 0.0
    %354 = vmatprep.subr.mxu0 0.0
    %355 = vmatpush1.msra.mxu0 0.0
    %356 = vmatprep.subr.mxu0 0.0
    %357 = vmatpush1.msra.mxu0 0.0
    %358 = vmatprep.subr.mxu0 0.0
    %359 = vmatpush1.msra.mxu0 0.0
    %360 = vmatprep.subr.mxu0 0.0
    %361 = vmatpush1.msra.mxu0 0.0
    %362 = vmatprep.subr.mxu0 0.0
    %363 = vmatpush1.msra.mxu0 0.0
    %364 = vmatprep.subr.mxu0 0.0
    %365 = vmatpush1.msra.mxu0 0.0
    %366 = vmatprep.subr.mxu0 0.0
    %367 = vmatpush1.msra.mxu0 0.0
    %368 = vmatprep.subr.mxu0 0.0
    %369 = vmatpush1.msra.mxu0 0.0
    %370 = vmatprep.subr.mxu0 0.0
    %371 = vmatpush1.msra.mxu0 0.0
    %372 = vmatprep.subr.mxu0 0.0
    %373 = vmatpush1.msra.mxu0 0.0
    %374 = vmatprep.subr.mxu0 0.0
    %375 = vmatpush1.msra.mxu0 0.0
    %376 = vmatprep.subr.mxu0 0.0
    %377 = vmatpush1.msra.mxu0 0.0
    %378 = vmatprep.subr.mxu0 0.0
    %379 = vmatpush1.msra.mxu0 0.0
    %380 = vmatprep.subr.mxu0 0.0
    %381 = vmatpush1.msra.mxu0 0.0
    %382 = vmatprep.subr.mxu0 0.0
    %383 = vmatpush1.msra.mxu0 0.0
    %384 = vmatprep.mubr.f32.mxu0 0.0
    %385 = vmatmul.mubr.f32.gmra.mrb[0].mxu0 %v281
    %v386 = vpop.f32.mrb[0].mxu0
    %v387 = vadd.f32 %v318, %v386
    %v388 = vpop.f32.mrb[0].mxu0
    %389 = vmatprep.mubr.f32.mxu0 0.0
    %390 = vmatmul.mubr.f32.gmra.mrb[0].mxu0 %v282
    %v391 = vpop.f32.mrb[0].mxu0
    %v392 = vadd.f32 %v318, %v391
    %v393 = vpop.f32.mrb[0].mxu0
    %394 = vmatprep.mubr.f32.mxu0 0.0
    %395 = vmatmul.mubr.f32.gmra.mrb[0].mxu0 %v283
    %v396 = vpop.f32.mrb[0].mxu0
    %v397 = vadd.f32 %v318, %v396
    %v398 = vpop.f32.mrb[0].mxu0
    %399 = vmatprep.mubr.f32.mxu0 0.0
    %400 = vmatmul.mubr.f32.gmra.mrb[0].mxu0 %v284
    %v401 = vpop.f32.mrb[0].mxu0
    %v402 = vadd.f32 %v318, %v401
    %v403 = vpop.f32.mrb[0].mxu0
    %404 = vmatprep.mubr.f32.mxu0 0.0
    %405 = vmatmul.mubr.f32.gmra.mrb[0].mxu0 %v285
    %v406 = vpop.f32.mrb[0].mxu0
    %v407 = vadd.f32 %v318, %v406
    %v408 = vpop.f32.mrb[0].mxu0
    %409 = vmatprep.mubr.f32.mxu0 0.0
    %410 = vmatmul.mubr.f32.gmra.mrb[0].mxu0 %v286
    %v411 = vpop.f32.mrb[0].mxu0
    %v412 = vadd.f32 %v318, %v411
    %v413 = vpop.f32.mrb[0].mxu0
    %414 = vmatprep.mubr.f32.mxu0 0.0
    %415 = vmatmul.mubr.f32.gmra.mrb[0].mxu0 %v287
    %v416 = vpop.f32.mrb[0].mxu0
    %v417 = vadd.f32 %v318, %v416
    %v418 = vpop.f32.mrb[0].mxu0
    %419 = vmatprep.mubr.f32.mxu0 0.0
    %420 = vmatmul.mubr.f32.gmra.mrb[0].mxu0 %v288
    %v421 = vpop.f32.mrb[0].mxu0
    %v422 = vadd.f32 %v318, %v421
    %v423 = vpop.f32.mrb[0].mxu0
    %424 = vmatprep.mubr.f32.mxu0 0.0
    %425 = vmatmul.mubr.f32.gmra.mrb[0].mxu0 %v289
    %v426 = vpop.f32.mrb[0].mxu0
    %v427 = vadd.f32 %v318, %v426
    %v428 = vpop.f32.mrb[0].mxu0
    %429 = vmatprep.mubr.f32.mxu0 0.0
    %430 = vmatmul.mubr.f32.gmra.mrb[0].mxu0 %v290
    %v431 = vpop.f32.mrb[0].mxu0
    %v432 = vadd.f32 %v318, %v431
    %v433 = vpop.f32.mrb[0].mxu0
    %434 = vmatprep.mubr.f32.mxu0 0.0
    %435 = vmatmul.mubr.f32.gmra.mrb[0].mxu0 %v291
    %v436 = vpop.f32.mrb[0].mxu0
    %v437 = vadd.f32 %v318, %v436
    %v438 = vpop.f32.mrb[0].mxu0
    %439 = vmatprep.mubr.f32.mxu0 0.0
    %440 = vmatmul.mubr.f32.gmra.mrb[0].mxu0 %v292
    %v441 = vpop.f32.mrb[0].mxu0
    %v442 = vadd.f32 %v318, %v441
    %v443 = vpop.f32.mrb[0].mxu0
    %444 = vmatprep.mubr.f32.mxu0 0.0
    %445 = vmatmul.mubr.f32.gmra.mrb[0].mxu0 %v293
    %v446 = vpop.f32.mrb[0].mxu0
    %v447 = vadd.f32 %v318, %v446
    %v448 = vpop.f32.mrb[0].mxu0
    %449 = vmatprep.mubr.f32.mxu0 0.0
    %450 = vmatmul.mubr.f32.gmra.mrb[0].mxu0 %v294
    %v451 = vpop.f32.mrb[0].mxu0
    %v452 = vadd.f32 %v318, %v451
    %v453 = vpop.f32.mrb[0].mxu0
    %454 = vmatprep.mubr.f32.mxu0 0.0
    %455 = vmatmul.mubr.f32.gmra.mrb[0].mxu0 %v295
    %v456 = vpop.f32.mrb[0].mxu0
    %v457 = vadd.f32 %v318, %v456
    %v458 = vpop.f32.mrb[0].mxu0
    %459 = vmatprep.mubr.f32.mxu0 0.0
    %460 = vmatmul.mubr.f32.gmra.mrb[0].mxu0 %v296
    %v461 = vpop.f32.mrb[0].mxu0
    %v462 = vadd.f32 %v318, %v461
    %v463 = vpop.f32.mrb[0].mxu0
    %464 = vdwg.mxu0
    %v465 = vmax.f32 %v387, 0.0
    %v466 = vmax.f32 %v392, 0.0
    %v467 = vmax.f32 %v397, 0.0
    %v468 = vmax.f32 %v402, 0.0
    %v469 = vmax.f32 %v407, 0.0
    %v470 = vmax.f32 %v412, 0.0
    %v471 = vmax.f32 %v417, 0.0
    %v472 = vmax.f32 %v422, 0.0
    %v473 = vmax.f32 %v427, 0.0
    %v474 = vmax.f32 %v432, 0.0
    %v475 = vmax.f32 %v437, 0.0
    %v476 = vmax.f32 %v442, 0.0
    %v477 = vmax.f32 %v447, 0.0
    %v478 = vmax.f32 %v452, 0.0
    %v479 = vmax.f32 %v457, 0.0
    %v480 = vmax.f32 %v462, 0.0
    %v481 = vld [vmem:[#allocation7] sm:$0xff]
    %v482 = vld [vmem:[#allocation7 + $0x8] sm:$0xff]
    %v483 = vld [vmem:[#allocation7 + $0x10] sm:$0xff]
    %v484 = vld [vmem:[#allocation7 + $0x18] sm:$0xff]
    %v485 = vld [vmem:[#allocation7 + $0x20] sm:$0xff]
    %v486 = vld [vmem:[#allocation7 + $0x28] sm:$0xff]
    %v487 = vld [vmem:[#allocation7 + $0x30] sm:$0xff]
    %v488 = vld [vmem:[#allocation7 + $0x38] sm:$0xff]
    %v489 = vld [vmem:[#allocation7 + $0x40] sm:$0xff]
    %v490 = vld [vmem:[#allocation7 + $0x48] sm:$0xff]
    %v491 = vld [vmem:[#allocation7 + $0x50] sm:$0xff]
    %v492 = vld [vmem:[#allocation7 + $0x58] sm:$0xff]
    %v493 = vld [vmem:[#allocation7 + $0x60] sm:$0xff]
    %v494 = vld [vmem:[#allocation7 + $0x68] sm:$0xff]
    %v495 = vld [vmem:[#allocation7 + $0x70] sm:$0xff]
    %v496 = vld [vmem:[#allocation7 + $0x78] sm:$0xff]
    %v497 = vld [vmem:[#allocation9] sm:$0xff]
    %v498 = vld [vmem:[#allocation9 + $0x8] sm:$0xff]
    %v499 = vld [vmem:[#allocation9 + $0x10] sm:$0xff]
    %v500 = vld [vmem:[#allocation9 + $0x18] sm:$0xff]
    %v501 = vld [vmem:[#allocation9 + $0x20] sm:$0xff]
    %v502 = vld [vmem:[#allocation9 + $0x28] sm:$0xff]
    %v503 = vld [vmem:[#allocation9 + $0x30] sm:$0xff]
    %v504 = vld [vmem:[#allocation9 + $0x38] sm:$0xff]
    %v505 = vld [vmem:[#allocation9 + $0x40] sm:$0xff]
    %v506 = vld [vmem:[#allocation9 + $0x48] sm:$0xff]
    %v507 = vld [vmem:[#allocation9 + $0x50] sm:$0xff]
    %v508 = vld [vmem:[#allocation9 + $0x58] sm:$0xff]
    %v509 = vld [vmem:[#allocation9 + $0x60] sm:$0xff]
    %v510 = vld [vmem:[#allocation9 + $0x68] sm:$0xff]
    %v511 = vld [vmem:[#allocation9 + $0x70] sm:$0xff]
    %v512 = vld [vmem:[#allocation9 + $0x78] sm:$0xff]
    %513 = vmatprep.subr.mxu0 0.0
    %514 = vmatpush1.msra.mxu0 %v497
    %515 = vmatprep.subr.mxu0 0.0
    %516 = vmatpush1.msra.mxu0 %v498
    %517 = vmatprep.subr.mxu0 0.0
    %518 = vmatpush1.msra.mxu0 %v499
    %519 = vmatprep.subr.mxu0 0.0
    %520 = vmatpush1.msra.mxu0 %v500
    %521 = vmatprep.subr.mxu0 0.0
    %522 = vmatpush1.msra.mxu0 %v501
    %523 = vmatprep.subr.mxu0 0.0
    %524 = vmatpush1.msra.mxu0 %v502
    %525 = vmatprep.subr.mxu0 0.0
    %526 = vmatpush1.msra.mxu0 %v503
    %527 = vmatprep.subr.mxu0 0.0
    %528 = vmatpush1.msra.mxu0 %v504
    %529 = vmatprep.subr.mxu0 0.0
    %530 = vmatpush1.msra.mxu0 %v505
    %531 = vmatprep.subr.mxu0 0.0
    %532 = vmatpush1.msra.mxu0 %v506
    %533 = vmatprep.subr.mxu0 0.0
    %534 = vmatpush1.msra.mxu0 %v507
    %535 = vmatprep.subr.mxu0 0.0
    %536 = vmatpush1.msra.mxu0 %v508
    %537 = vmatprep.subr.mxu0 0.0
    %538 = vmatpush1.msra.mxu0 %v509
    %539 = vmatprep.subr.mxu0 0.0
    %540 = vmatpush1.msra.mxu0 %v510
    %541 = vmatprep.subr.mxu0 0.0
    %542 = vmatpush1.msra.mxu0 %v511
    %543 = vmatprep.subr.mxu0 0.0
    %544 = vmatpush1.msra.mxu0 %v512
    %545 = vmatprep.subr.mxu0 0.0
    %546 = vmatpush1.msra.mxu0 0.0
    %547 = vmatprep.subr.mxu0 0.0
    %548 = vmatpush1.msra.mxu0 0.0
    %549 = vmatprep.subr.mxu0 0.0
    %550 = vmatpush1.msra.mxu0 0.0
    %551 = vmatprep.subr.mxu0 0.0
    %552 = vmatpush1.msra.mxu0 0.0
    %553 = vmatprep.subr.mxu0 0.0
    %554 = vmatpush1.msra.mxu0 0.0
    %555 = vmatprep.subr.mxu0 0.0
    %556 = vmatpush1.msra.mxu0 0.0
    %557 = vmatprep.subr.mxu0 0.0
    %558 = vmatpush1.msra.mxu0 0.0
    %559 = vmatprep.subr.mxu0 0.0
    %560 = vmatpush1.msra.mxu0 0.0
    %561 = vmatprep.subr.mxu0 0.0
    %562 = vmatpush1.msra.mxu0 0.0
    %563 = vmatprep.subr.mxu0 0.0
    %564 = vmatpush1.msra.mxu0 0.0
    %565 = vmatprep.subr.mxu0 0.0
    %566 = vmatpush1.msra.mxu0 0.0
    %567 = vmatprep.subr.mxu0 0.0
    %568 = vmatpush1.msra.mxu0 0.0
    %569 = vmatprep.subr.mxu0 0.0
    %570 = vmatpush1.msra.mxu0 0.0
    %571 = vmatprep.subr.mxu0 0.0
    %572 = vmatpush1.msra.mxu0 0.0
    %573 = vmatprep.subr.mxu0 0.0
    %574 = vmatpush1.msra.mxu0 0.0
    %575 = vmatprep.subr.mxu0 0.0
    %576 = vmatpush1.msra.mxu0 0.0
    %577 = vmatprep.mubr.f32.mxu0 0.0
    %578 = vmatmul.mubr.f32.gmra.mrb[0].mxu0 %v97
    %v579 = vpop.f32.mrb[0].mxu0
    %v580 = vadd.f32 0.0, %v579
    %v581 = vpop.f32.mrb[0].mxu0
    %582 = vmatprep.mubr.f32.mxu0 0.0
    %583 = vmatmul.mubr.f32.gmra.mrb[0].mxu0 %v98
    %v584 = vpop.f32.mrb[0].mxu0
    %v585 = vadd.f32 0.0, %v584
    %v586 = vpop.f32.mrb[0].mxu0
    %587 = vmatprep.mubr.f32.mxu0 0.0
    %588 = vmatmul.mubr.f32.gmra.mrb[0].mxu0 %v99
    %v589 = vpop.f32.mrb[0].mxu0
    %v590 = vadd.f32 0.0, %v589
    %v591 = vpop.f32.mrb[0].mxu0
    %592 = vmatprep.mubr.f32.mxu0 0.0
    %593 = vmatmul.mubr.f32.gmra.mrb[0].mxu0 %v100
    %v594 = vpop.f32.mrb[0].mxu0
    %v595 = vadd.f32 0.0, %v594
    %v596 = vpop.f32.mrb[0].mxu0
    %597 = vmatprep.mubr.f32.mxu0 0.0
    %598 = vmatmul.mubr.f32.gmra.mrb[0].mxu0 %v101
    %v599 = vpop.f32.mrb[0].mxu0
    %v600 = vadd.f32 0.0, %v599
    %v601 = vpop.f32.mrb[0].mxu0
    %602 = vmatprep.mubr.f32.mxu0 0.0
    %603 = vmatmul.mubr.f32.gmra.mrb[0].mxu0 %v102
    %v604 = vpop.f32.mrb[0].mxu0
    %v605 = vadd.f32 0.0, %v604
    %v606 = vpop.f32.mrb[0].mxu0
    %607 = vmatprep.mubr.f32.mxu0 0.0
    %608 = vmatmul.mubr.f32.gmra.mrb[0].mxu0 %v103
    %v609 = vpop.f32.mrb[0].mxu0
    %v610 = vadd.f32 0.0, %v609
    %v611 = vpop.f32.mrb[0].mxu0
    %612 = vmatprep.mubr.f32.mxu0 0.0
    %613 = vmatmul.mubr.f32.gmra.mrb[0].mxu0 %v104
    %v614 = vpop.f32.mrb[0].mxu0
    %v615 = vadd.f32 0.0, %v614
    %v616 = vpop.f32.mrb[0].mxu0
    %617 = vmatprep.mubr.f32.mxu0 0.0
    %618 = vmatmul.mubr.f32.gmra.mrb[0].mxu0 %v105
    %v619 = vpop.f32.mrb[0].mxu0
    %v620 = vadd.f32 0.0, %v619
    %v621 = vpop.f32.mrb[0].mxu0
    %622 = vmatprep.mubr.f32.mxu0 0.0
    %623 = vmatmul.mubr.f32.gmra.mrb[0].mxu0 %v106
    %v624 = vpop.f32.mrb[0].mxu0
    %v625 = vadd.f32 0.0, %v624
    %v626 = vpop.f32.mrb[0].mxu0
    %627 = vmatprep.mubr.f32.mxu0 0.0
    %628 = vmatmul.mubr.f32.gmra.mrb[0].mxu0 %v107
    %v629 = vpop.f32.mrb[0].mxu0
    %v630 = vadd.f32 0.0, %v629
    %v631 = vpop.f32.mrb[0].mxu0
    %632 = vmatprep.mubr.f32.mxu0 0.0
    %633 = vmatmul.mubr.f32.gmra.mrb[0].mxu0 %v108
    %v634 = vpop.f32.mrb[0].mxu0
    %v635 = vadd.f32 0.0, %v634
    %v636 = vpop.f32.mrb[0].mxu0
    %637 = vmatprep.mubr.f32.mxu0 0.0
    %638 = vmatmul.mubr.f32.gmra.mrb[0].mxu0 %v109
    %v639 = vpop.f32.mrb[0].mxu0
    %v640 = vadd.f32 0.0, %v639
    %v641 = vpop.f32.mrb[0].mxu0
    %642 = vmatprep.mubr.f32.mxu0 0.0
    %643 = vmatmul.mubr.f32.gmra.mrb[0].mxu0 %v110
    %v644 = vpop.f32.mrb[0].mxu0
    %v645 = vadd.f32 0.0, %v644
    %v646 = vpop.f32.mrb[0].mxu0
    %647 = vmatprep.mubr.f32.mxu0 0.0
    %648 = vmatmul.mubr.f32.gmra.mrb[0].mxu0 %v111
    %v649 = vpop.f32.mrb[0].mxu0
    %v650 = vadd.f32 0.0, %v649
    %v651 = vpop.f32.mrb[0].mxu0
    %652 = vmatprep.mubr.f32.mxu0 0.0
    %653 = vmatmul.mubr.f32.gmra.mrb[0].mxu0 %v112
    %v654 = vpop.f32.mrb[0].mxu0
    %v655 = vadd.f32 0.0, %v654
    %v656 = vpop.f32.mrb[0].mxu0
    %657 = vdwg.mxu0
    %658 = vmatprep.subr.mxu0 0.0
    %659 = vmatpush1.msra.mxu0 %v481
    %660 = vmatprep.subr.mxu0 0.0
    %661 = vmatpush1.msra.mxu0 %v482
    %662 = vmatprep.subr.mxu0 0.0
    %663 = vmatpush1.msra.mxu0 %v483
    %664 = vmatprep.subr.mxu0 0.0
    %665 = vmatpush1.msra.mxu0 %v484
    %666 = vmatprep.subr.mxu0 0.0
    %667 = vmatpush1.msra.mxu0 %v485
    %668 = vmatprep.subr.mxu0 0.0
    %669 = vmatpush1.msra.mxu0 %v486
    %670 = vmatprep.subr.mxu0 0.0
    %671 = vmatpush1.msra.mxu0 %v487
    %672 = vmatprep.subr.mxu0 0.0
    %673 = vmatpush1.msra.mxu0 %v488
    %674 = vmatprep.subr.mxu0 0.0
    %675 = vmatpush1.msra.mxu0 %v489
    %676 = vmatprep.subr.mxu0 0.0
    %677 = vmatpush1.msra.mxu0 %v490
    %678 = vmatprep.subr.mxu0 0.0
    %679 = vmatpush1.msra.mxu0 %v491
    %680 = vmatprep.subr.mxu0 0.0
    %681 = vmatpush1.msra.mxu0 %v492
    %682 = vmatprep.subr.mxu0 0.0
    %683 = vmatpush1.msra.mxu0 %v493
    %684 = vmatprep.subr.mxu0 0.0
    %685 = vmatpush1.msra.mxu0 %v494
    %686 = vmatprep.subr.mxu0 0.0
    %687 = vmatpush1.msra.mxu0 %v495
    %688 = vmatprep.subr.mxu0 0.0
    %689 = vmatpush1.msra.mxu0 %v496
    %690 = vmatprep.subr.mxu0 0.0
    %691 = vmatpush1.msra.mxu0 0.0
    %692 = vmatprep.subr.mxu0 0.0
    %693 = vmatpush1.msra.mxu0 0.0
    %694 = vmatprep.subr.mxu0 0.0
    %695 = vmatpush1.msra.mxu0 0.0
    %696 = vmatprep.subr.mxu0 0.0
    %697 = vmatpush1.msra.mxu0 0.0
    %698 = vmatprep.subr.mxu0 0.0
    %699 = vmatpush1.msra.mxu0 0.0
    %700 = vmatprep.subr.mxu0 0.0
    %701 = vmatpush1.msra.mxu0 0.0
    %702 = vmatprep.subr.mxu0 0.0
    %703 = vmatpush1.msra.mxu0 0.0
    %704 = vmatprep.subr.mxu0 0.0
    %705 = vmatpush1.msra.mxu0 0.0
    %706 = vmatprep.subr.mxu0 0.0
    %707 = vmatpush1.msra.mxu0 0.0
    %708 = vmatprep.subr.mxu0 0.0
    %709 = vmatpush1.msra.mxu0 0.0
    %710 = vmatprep.subr.mxu0 0.0
    %711 = vmatpush1.msra.mxu0 0.0
    %712 = vmatprep.subr.mxu0 0.0
    %713 = vmatpush1.msra.mxu0 0.0
    %714 = vmatprep.subr.mxu0 0.0
    %715 = vmatpush1.msra.mxu0 0.0
    %716 = vmatprep.subr.mxu0 0.0
    %717 = vmatpush1.msra.mxu0 0.0
    %718 = vmatprep.subr.mxu0 0.0
    %719 = vmatpush1.msra.mxu0 0.0
    %720 = vmatprep.subr.mxu0 0.0
    %721 = vmatpush1.msra.mxu0 0.0
    %722 = vmatprep.mubr.f32.mxu0 0.0
    %723 = vmatmul.mubr.f32.gmra.mrb[0].mxu0 %v465
    %v724 = vpop.f32.mrb[0].mxu0
    %v725 = vadd.f32 %v580, %v724
    %v726 = vpop.f32.mrb[0].mxu0
    %727 = vmatprep.mubr.f32.mxu0 0.0
    %728 = vmatmul.mubr.f32.gmra.mrb[0].mxu0 %v466
    %v729 = vpop.f32.mrb[0].mxu0
    %v730 = vadd.f32 %v585, %v729
    %v731 = vpop.f32.mrb[0].mxu0
    %732 = vmatprep.mubr.f32.mxu0 0.0
    %733 = vmatmul.mubr.f32.gmra.mrb[0].mxu0 %v467
    %v734 = vpop.f32.mrb[0].mxu0
    %v735 = vadd.f32 %v590, %v734
    %v736 = vpop.f32.mrb[0].mxu0
    %737 = vmatprep.mubr.f32.mxu0 0.0
    %738 = vmatmul.mubr.f32.gmra.mrb[0].mxu0 %v468
    %v739 = vpop.f32.mrb[0].mxu0
    %v740 = vadd.f32 %v595, %v739
    %v741 = vpop.f32.mrb[0].mxu0
    %742 = vmatprep.mubr.f32.mxu0 0.0
    %743 = vmatmul.mubr.f32.gmra.mrb[0].mxu0 %v469
    %v744 = vpop.f32.mrb[0].mxu0
    %v745 = vadd.f32 %v600, %v744
    %v746 = vpop.f32.mrb[0].mxu0
    %747 = vmatprep.mubr.f32.mxu0 0.0
    %748 = vmatmul.mubr.f32.gmra.mrb[0].mxu0 %v470
    %v749 = vpop.f32.mrb[0].mxu0
    %v750 = vadd.f32 %v605, %v749
    %v751 = vpop.f32.mrb[0].mxu0
    %752 = vmatprep.mubr.f32.mxu0 0.0
    %753 = vmatmul.mubr.f32.gmra.mrb[0].mxu0 %v471
    %v754 = vpop.f32.mrb[0].mxu0
    %v755 = vadd.f32 %v610, %v754
    %v756 = vpop.f32.mrb[0].mxu0
    %757 = vmatprep.mubr.f32.mxu0 0.0
    %758 = vmatmul.mubr.f32.gmra.mrb[0].mxu0 %v472
    %v759 = vpop.f32.mrb[0].mxu0
    %v760 = vadd.f32 %v615, %v759
    %v761 = vpop.f32.mrb[0].mxu0
    %762 = vmatprep.mubr.f32.mxu0 0.0
    %763 = vmatmul.mubr.f32.gmra.mrb[0].mxu0 %v473
    %v764 = vpop.f32.mrb[0].mxu0
    %v765 = vadd.f32 %v620, %v764
    %v766 = vpop.f32.mrb[0].mxu0
    %767 = vmatprep.mubr.f32.mxu0 0.0
    %768 = vmatmul.mubr.f32.gmra.mrb[0].mxu0 %v474
    %v769 = vpop.f32.mrb[0].mxu0
    %v770 = vadd.f32 %v625, %v769
    %v771 = vpop.f32.mrb[0].mxu0
    %772 = vmatprep.mubr.f32.mxu0 0.0
    %773 = vmatmul.mubr.f32.gmra.mrb[0].mxu0 %v475
    %v774 = vpop.f32.mrb[0].mxu0
    %v775 = vadd.f32 %v630, %v774
    %v776 = vpop.f32.mrb[0].mxu0
    %777 = vmatprep.mubr.f32.mxu0 0.0
    %778 = vmatmul.mubr.f32.gmra.mrb[0].mxu0 %v476
    %v779 = vpop.f32.mrb[0].mxu0
    %v780 = vadd.f32 %v635, %v779
    %v781 = vpop.f32.mrb[0].mxu0
    %782 = vmatprep.mubr.f32.mxu0 0.0
    %783 = vmatmul.mubr.f32.gmra.mrb[0].mxu0 %v477
    %v784 = vpop.f32.mrb[0].mxu0
    %v785 = vadd.f32 %v640, %v784
    %v786 = vpop.f32.mrb[0].mxu0
    %787 = vmatprep.mubr.f32.mxu0 0.0
    %788 = vmatmul.mubr.f32.gmra.mrb[0].mxu0 %v478
    %v789 = vpop.f32.mrb[0].mxu0
    %v790 = vadd.f32 %v645, %v789
    %v791 = vpop.f32.mrb[0].mxu0
    %792 = vmatprep.mubr.f32.mxu0 0.0
    %793 = vmatmul.mubr.f32.gmra.mrb[0].mxu0 %v479
    %v794 = vpop.f32.mrb[0].mxu0
    %v795 = vadd.f32 %v650, %v794
    %v796 = vpop.f32.mrb[0].mxu0
    %797 = vmatprep.mubr.f32.mxu0 0.0
    %798 = vmatmul.mubr.f32.gmra.mrb[0].mxu0 %v480
    %v799 = vpop.f32.mrb[0].mxu0
    %v800 = vadd.f32 %v655, %v799
    %v801 = vpop.f32.mrb[0].mxu0
    %802 = vdwg.mxu0
    %v803 = vld [vmem:[%s7] sm:$0x1]
    %v805 = vlaneseq
    %v806 = vshrl.u32 %v805, 7
    %v807 = vsub.s32 0, %v806
    %v808 = vrot.slane %v803, %v807
    %v810 = vadd.f32 %v725, %v808
    %v811 = vadd.f32 %v730, %v808
    %v812 = vadd.f32 %v735, %v808
    %v813 = vadd.f32 %v740, %v808
    %v814 = vadd.f32 %v745, %v808
    %v815 = vadd.f32 %v750, %v808
    %v816 = vadd.f32 %v755, %v808
    %v817 = vadd.f32 %v760, %v808
    %v818 = vadd.f32 %v765, %v808
    %v819 = vadd.f32 %v770, %v808
    %v820 = vadd.f32 %v775, %v808
    %v821 = vadd.f32 %v780, %v808
    %v822 = vadd.f32 %v785, %v808
    %v823 = vadd.f32 %v790, %v808
    %v824 = vadd.f32 %v795, %v808
    %v825 = vadd.f32 %v800, %v808
    %v826 = vsub.f32 0.0, %v810
    %v827 = vsub.f32 0.0, %v811
    %v828 = vsub.f32 0.0, %v812
    %v829 = vsub.f32 0.0, %v813
    %v830 = vsub.f32 0.0, %v814
    %v831 = vsub.f32 0.0, %v815
    %v832 = vsub.f32 0.0, %v816
    %v833 = vsub.f32 0.0, %v817
    %v834 = vsub.f32 0.0, %v818
    %v835 = vsub.f32 0.0, %v819
    %v836 = vsub.f32 0.0, %v820
    %v837 = vsub.f32 0.0, %v821
    %v838 = vsub.f32 0.0, %v822
    %v839 = vsub.f32 0.0, %v823
    %v840 = vsub.f32 0.0, %v824
    %v841 = vsub.f32 0.0, %v825
    %v842 = vmul.f32 %v826, 1.442695
    %v843 = vpow.pop %v842
    %v844 = vmul.f32 %v827, 1.442695
    %v845 = vpow.pop %v844
    %v846 = vmul.f32 %v828, 1.442695
    %v847 = vpow.pop %v846
    %v848 = vmul.f32 %v829, 1.442695
    %v849 = vpow.pop %v848
    %v850 = vmul.f32 %v830, 1.442695
    %v851 = vpow.pop %v850
    %v852 = vmul.f32 %v831, 1.442695
    %v853 = vpow.pop %v852
    %v854 = vmul.f32 %v832, 1.442695
    %v855 = vpow.pop %v854
    %v856 = vmul.f32 %v833, 1.442695
    %v857 = vpow.pop %v856
    %v858 = vmul.f32 %v834, 1.442695
    %v859 = vpow.pop %v858
    %v860 = vmul.f32 %v835, 1.442695
    %v861 = vpow.pop %v860
    %v862 = vmul.f32 %v836, 1.442695
    %v863 = vpow.pop %v862
    %v864 = vmul.f32 %v837, 1.442695
    %v865 = vpow.pop %v864
    %v866 = vmul.f32 %v838, 1.442695
    %v867 = vpow.pop %v866
    %v868 = vmul.f32 %v839, 1.442695
    %v869 = vpow.pop %v868
    %v870 = vmul.f32 %v840, 1.442695
    %v871 = vpow.pop %v870
    %v872 = vmul.f32 %v841, 1.442695
    %v873 = vpow.pop %v872
    %v874 = vadd.f32 %v843, 1.0
    %v875 = vadd.f32 %v845, 1.0
    %v876 = vadd.f32 %v847, 1.0
    %v877 = vadd.f32 %v849, 1.0
    %v878 = vadd.f32 %v851, 1.0
    %v879 = vadd.f32 %v853, 1.0
    %v880 = vadd.f32 %v855, 1.0
    %v881 = vadd.f32 %v857, 1.0
    %v882 = vadd.f32 %v859, 1.0
    %v883 = vadd.f32 %v861, 1.0
    %v884 = vadd.f32 %v863, 1.0
    %v885 = vadd.f32 %v865, 1.0
    %v886 = vadd.f32 %v867, 1.0
    %v887 = vadd.f32 %v869, 1.0
    %v888 = vadd.f32 %v871, 1.0
    %v889 = vadd.f32 %v873, 1.0
    %v890 = vrcp.pop %v874
    %v891 = vmul.f32 1.0, %v890
    %v892 = vrcp.pop %v875
    %v893 = vmul.f32 1.0, %v892
    %v894 = vrcp.pop %v876
    %v895 = vmul.f32 1.0, %v894
    %v896 = vrcp.pop %v877
    %v897 = vmul.f32 1.0, %v896
    %v898 = vrcp.pop %v878
    %v899 = vmul.f32 1.0, %v898
    %v900 = vrcp.pop %v879
    %v901 = vmul.f32 1.0, %v900
    %v902 = vrcp.pop %v880
    %v903 = vmul.f32 1.0, %v902
    %v904 = vrcp.pop %v881
    %v905 = vmul.f32 1.0, %v904
    %v906 = vrcp.pop %v882
    %v907 = vmul.f32 1.0, %v906
    %v908 = vrcp.pop %v883
    %v909 = vmul.f32 1.0, %v908
    %v910 = vrcp.pop %v884
    %v911 = vmul.f32 1.0, %v910
    %v912 = vrcp.pop %v885
    %v913 = vmul.f32 1.0, %v912
    %v914 = vrcp.pop %v886
    %v915 = vmul.f32 1.0, %v914
    %v916 = vrcp.pop %v887
    %v917 = vmul.f32 1.0, %v916
    %v918 = vrcp.pop %v888
    %v919 = vmul.f32 1.0, %v918
    %v920 = vrcp.pop %v889
    %v921 = vmul.f32 1.0, %v920
    %vm922 = vcmask 7168
    %923 = vst.msk [vmem:[%s8] sm:$0xff] %vm922, %v891
    %924 = vst.msk [vmem:[%s8 + $0x8] sm:$0xff] %vm922, %v893
    %925 = vst.msk [vmem:[%s8 + $0x10] sm:$0xff] %vm922, %v895
    %926 = vst.msk [vmem:[%s8 + $0x18] sm:$0xff] %vm922, %v897
    %927 = vst.msk [vmem:[%s8 + $0x20] sm:$0xff] %vm922, %v899
    %928 = vst.msk [vmem:[%s8 + $0x28] sm:$0xff] %vm922, %v901
    %929 = vst.msk [vmem:[%s8 + $0x30] sm:$0xff] %vm922, %v903
    %930 = vst.msk [vmem:[%s8 + $0x38] sm:$0xff] %vm922, %v905
    %931 = vst.msk [vmem:[%s8 + $0x40] sm:$0xff] %vm922, %v907
    %932 = vst.msk [vmem:[%s8 + $0x48] sm:$0xff] %vm922, %v909
    %933 = vst.msk [vmem:[%s8 + $0x50] sm:$0xff] %vm922, %v911
    %934 = vst.msk [vmem:[%s8 + $0x58] sm:$0xff] %vm922, %v913
    %935 = vst.msk [vmem:[%s8 + $0x60] sm:$0xff] %vm922, %v915
    %936 = vst.msk [vmem:[%s8 + $0x68] sm:$0xff] %vm922, %v917
    %937 = vst.msk [vmem:[%s8 + $0x70] sm:$0xff] %vm922, %v919
    %938 = vst.msk [vmem:[%s8 + $0x78] sm:$0xff] %vm922, %v921
    // Predicated region
    $region54: #{tpu_custom_call.1} parent=1 // pred_check
      _
    $region55: #{tpu_custom_call.1} parent=1 // pred_check_branch
      %940 = sbr.rel (0) target = $region57
    $region56: #{tpu_custom_call.1} parent=1 // pred_region
      _
    $region57: #{tpu_custom_call.1} parent=1 // pred_fallthru
      _
    // Predicated region
    $region58: #{tpu_custom_call.1} parent=1 // pred_check
      _
    $region59: #{tpu_custom_call.1} parent=1 // pred_check_branch
      %942 = sbr.rel (0) target = $region61
    $region60: #{tpu_custom_call.1} parent=1 // pred_region
      _
    $region61: #{tpu_custom_call.1} parent=1 // pred_fallthru
      _
    %943 = vsyncpa [#allocation3], 1
    %944 = vsyncpa [#allocation5], 1
    %945 = vsyncpa [#allocation8], 1

// kernel: tpu_custom_call.1
$region0: #{tpu_custom_call.1}
  #allocation0 [shape = 'u32[]', space=smem, size = 0x4, offset = 0x4, fixed_abs, tag = 'smem constant byte address 0x4 - core index']
  #allocation1 [shape = 'u32[144,128]{1,0:T(1,128)}', space=vmem, size = 0x12000, scoped, tag = 'internal scratch']
  %s0 = inlined_call_operand.hbm [shape: f32[128,128], index: 0, kind: input, shape index: {}]
  %s1 = inlined_call_operand.hbm [shape: f32[128,128], index: 1, kind: input, shape index: {}]
  %s2 = inlined_call_operand.vmem [shape: f32[1,128], index: 2, kind: input, shape index: {}]
  %s3 = inlined_call_operand.hbm [shape: f32[128,128], index: 3, kind: input, shape index: {}]
  %s4 = inlined_call_operand.vmem [shape: f32[1,128], index: 4, kind: input, shape index: {}]
  %s5 = inlined_call_operand.hbm [shape: f32[128,128], index: 5, kind: input, shape index: {}]
  %s6 = inlined_call_operand.hbm [shape: f32[128,128], index: 6, kind: input, shape index: {}]
  %s7 = inlined_call_operand.vmem [shape: f32[1,128], index: 7, kind: input, shape index: {}]
  %s8 = inlined_call_operand.vmem [shape: f32[128,1], index: 8, kind: output, shape index: {}]
  %s9 = sld [smem:[#allocation0]]
  $region62: #{tpu_custom_call.1} parent=0
    _
  %s11 = ssub.s32 1, %s9
  %s12 = scalar_select 0, %s11, %s9
  $region1: #{tpu_custom_call.1} parent=0
    #allocation2 [shape = 'u8[65536]{0}', space=vmem, size = 0x10000, scoped, tag = 'input window, operand 0, single buffered']
    #allocation3 [shape = 's32[1]{0}', space=sflag, size = 0x4, scoped, tag = 'scoped memory for tpu_custom_call.1']
    #allocation4 [shape = 'u8[65536]{0}', space=vmem, size = 0x10000, scoped, tag = 'input window, operand 1, single buffered']
    #allocation5 [shape = 's32[1]{0}', space=sflag, size = 0x4, scoped, tag = 'scoped memory for tpu_custom_call.1']
    #allocation6 [shape = 'u8[65536]{0}', space=vmem, size = 0x10000, scoped, tag = 'input window, operand 3, single buffered']
    #allocation7 [shape = 'u8[65536]{0}', space=vmem, size = 0x10000, scoped, tag = 'input window, operand 5, single buffered']
    #allocation8 [shape = 's32[1]{0}', space=sflag, size = 0x4, scoped, tag = 'scoped memory for tpu_custom_call.1']
    #allocation9 [shape = 'u8[65536]{0}', space=vmem, size = 0x10000, scoped, tag = 'input window, operand 6, single buffered']
    %13 = vsyncpa [#allocation3], 0
    %14 = vsyncpa [#allocation5], 0
    %15 = vsyncpa [#allocation8], 0
    // Predicated region
    $region2: #{tpu_custom_call.1} parent=1 // pred_check
      _
    $region3: #{tpu_custom_call.1} parent=1 // pred_check_branch
      %17 = sbr.rel (0) target = $region5
    $region4: #{tpu_custom_call.1} parent=1 // pred_region
      %s19 = ssub.s32 2048, 2048
      %20 = vsyncadd [#allocation3], %s19
      %s21 = sshll.u32 [#allocation2], 4
      %s22 = int_to_ptr.vmem [resolvable:$true] %s21
      %27 = dma.hbm_to_vmem [thread:$0]  %s0, 2048, %s22, [#allocation3], 128, 128, 8
    $region5: #{tpu_custom_call.1} parent=1 // pred_fallthru
      _
    // Predicated region
    $region6: #{tpu_custom_call.1} parent=1 // pred_check
      _
    $region7: #{tpu_custom_call.1} parent=1 // pred_check_branch
      %29 = sbr.rel (0) target = $region9
    $region8: #{tpu_custom_call.1} parent=1 // pred_region
      %s31 = ssub.s32 2048, 2048
      %32 = vsyncadd [#allocation5], %s31
      %s33 = sshll.u32 [#allocation4], 4
      %s34 = int_to_ptr.vmem [resolvable:$true] %s33
      %39 = dma.hbm_to_vmem [thread:$0]  %s1, 2048, %s34, [#allocation5], 128, 128, 8
    $region9: #{tpu_custom_call.1} parent=1 // pred_fallthru
      _
    // Predicated region
    $region10: #{tpu_custom_call.1} parent=1 // pred_check
      _
    $region11: #{tpu_custom_call.1} parent=1 // pred_check_branch
      %41 = sbr.rel (0) target = $region13
    $region12: #{tpu_custom_call.1} parent=1 // pred_region
      _
    $region13: #{tpu_custom_call.1} parent=1 // pred_fallthru
      _
    // Predicated region
    $region14: #{tpu_custom_call.1} parent=1 // pred_check
      _
    $region15: #{tpu_custom_call.1} parent=1 // pred_check_branch
      %43 = sbr.rel (0) target = $region17
    $region16: #{tpu_custom_call.1} parent=1 // pred_region
      %s45 = ssub.s32 2048, 2048
      %46 = vsyncadd [#allocation5], %s45
      %s47 = sshll.u32 [#allocation6], 4
      %s48 = int_to_ptr.vmem [resolvable:$true] %s47
      %53 = dma.hbm_to_vmem [thread:$0]  %s3, 2048, %s48, [#allocation5], 128, 128, 8
    $region17: #{tpu_custom_call.1} parent=1 // pred_fallthru
      _
    // Predicated region
    $region18: #{tpu_custom_call.1} parent=1 // pred_check
      _
    $region19: #{tpu_custom_call.1} parent=1 // pred_check_branch
      %55 = sbr.rel (0) target = $region21
    $region20: #{tpu_custom_call.1} parent=1 // pred_region
      _
    $region21: #{tpu_custom_call.1} parent=1 // pred_fallthru
      _
    // Predicated region
    $region22: #{tpu_custom_call.1} parent=1 // pred_check
      _
    $region23: #{tpu_custom_call.1} parent=1 // pred_check_branch
      %57 = sbr.rel (0) target = $region25
    $region24: #{tpu_custom_call.1} parent=1 // pred_region
      %s59 = ssub.s32 2048, 2048
      %60 = vsyncadd [#allocation8], %s59
      %s61 = sshll.u32 [#allocation7], 4
      %s62 = int_to_ptr.vmem [resolvable:$true] %s61
      %67 = dma.hbm_to_vmem [thread:$0]  %s5, 2048, %s62, [#allocation8], 128, 128, 8
    $region25: #{tpu_custom_call.1} parent=1 // pred_fallthru
      _
    // Predicated region
    $region26: #{tpu_custom_call.1} parent=1 // pred_check
      _
    $region27: #{tpu_custom_call.1} parent=1 // pred_check_branch
      %69 = sbr.rel (0) target = $region29
    $region28: #{tpu_custom_call.1} parent=1 // pred_region
      %s71 = ssub.s32 2048, 2048
      %72 = vsyncadd [#allocation8], %s71
      %s73 = sshll.u32 [#allocation9], 4
      %s74 = int_to_ptr.vmem [resolvable:$true] %s73
      %79 = dma.hbm_to_vmem [thread:$0]  %s6, 2048, %s74, [#allocation8], 128, 128, 8
    $region29: #{tpu_custom_call.1} parent=1 // pred_fallthru
      _
    // Predicated region
    $region30: #{tpu_custom_call.1} parent=1 // pred_check
      _
    $region31: #{tpu_custom_call.1} parent=1 // pred_check_branch
      %81 = sbr.rel (0) target = $region33
    $region32: #{tpu_custom_call.1} parent=1 // pred_region
      _
    $region33: #{tpu_custom_call.1} parent=1 // pred_fallthru
      _
    // Predicated region
    $region34: #{tpu_custom_call.1} parent=1 // pred_check
      _
    $region35: #{tpu_custom_call.1} parent=1 // pred_check_branch
      %83 = sbr.rel (0) target = $region37
    $region36: #{tpu_custom_call.1} parent=1 // pred_region
      %84 = dma.done [#allocation3], 2048
    $region37: #{tpu_custom_call.1} parent=1 // pred_fallthru
      _
    // Predicated region
    $region38: #{tpu_custom_call.1} parent=1 // pred_check
      _
    $region39: #{tpu_custom_call.1} parent=1 // pred_check_branch
      %86 = sbr.rel (0) target = $region41
    $region40: #{tpu_custom_call.1} parent=1 // pred_region
      %87 = dma.done [#allocation5], 2048
    $region41: #{tpu_custom_call.1} parent=1 // pred_fallthru
      _
    // Predicated region
    $region42: #{tpu_custom_call.1} parent=1 // pred_check
      _
    $region43: #{tpu_custom_call.1} parent=1 // pred_check_branch
      %89 = sbr.rel (0) target = $region45
    $region44: #{tpu_custom_call.1} parent=1 // pred_region
      %90 = dma.done [#allocation5], 2048
    $region45: #{tpu_custom_call.1} parent=1 // pred_fallthru
      _
    // Predicated region
    $region46: #{tpu_custom_call.1} parent=1 // pred_check
      _
    $region47: #{tpu_custom_call.1} parent=1 // pred_check_branch
      %92 = sbr.rel (0) target = $region49
    $region48: #{tpu_custom_call.1} parent=1 // pred_region
      %93 = dma.done [#allocation8], 2048
    $region49: #{tpu_custom_call.1} parent=1 // pred_fallthru
      _
    // Predicated region
    $region50: #{tpu_custom_call.1} parent=1 // pred_check
      _
    $region51: #{tpu_custom_call.1} parent=1 // pred_check_branch
      %95 = sbr.rel (0) target = $region53
    $region52: #{tpu_custom_call.1} parent=1 // pred_region
      %96 = dma.done [#allocation8], 2048
    $region53: #{tpu_custom_call.1} parent=1 // pred_fallthru
      _
    %v97 = vld [vmem:[#allocation2] sm:$0xff]
    %v98 = vld [vmem:[#allocation2 + $0x8] sm:$0xff]
    %v99 = vld [vmem:[#allocation2 + $0x10] sm:$0xff]
    %v100 = vld [vmem:[#allocation2 + $0x18] sm:$0xff]
    %v101 = vld [vmem:[#allocation2 + $0x20] sm:$0xff]
    %v102 = vld [vmem:[#allocation2 + $0x28] sm:$0xff]
    %v103 = vld [vmem:[#allocation2 + $0x30] sm:$0xff]
    %v104 = vld [vmem:[#allocation2 + $0x38] sm:$0xff]
    %v105 = vld [vmem:[#allocation2 + $0x40] sm:$0xff]
    %v106 = vld [vmem:[#allocation2 + $0x48] sm:$0xff]
    %v107 = vld [vmem:[#allocation2 + $0x50] sm:$0xff]
    %v108 = vld [vmem:[#allocation2 + $0x58] sm:$0xff]
    %v109 = vld [vmem:[#allocation2 + $0x60] sm:$0xff]
    %v110 = vld [vmem:[#allocation2 + $0x68] sm:$0xff]
    %v111 = vld [vmem:[#allocation2 + $0x70] sm:$0xff]
    %v112 = vld [vmem:[#allocation2 + $0x78] sm:$0xff]
    %v113 = vld [vmem:[#allocation4] sm:$0xff]
    %v114 = vld [vmem:[#allocation4 + $0x8] sm:$0xff]
    %v115 = vld [vmem:[#allocation4 + $0x10] sm:$0xff]
    %v116 = vld [vmem:[#allocation4 + $0x18] sm:$0xff]
    %v117 = vld [vmem:[#allocation4 + $0x20] sm:$0xff]
    %v118 = vld [vmem:[#allocation4 + $0x28] sm:$0xff]
    %v119 = vld [vmem:[#allocation4 + $0x30] sm:$0xff]
    %v120 = vld [vmem:[#allocation4 + $0x38] sm:$0xff]
    %v121 = vld [vmem:[#allocation4 + $0x40] sm:$0xff]
    %v122 = vld [vmem:[#allocation4 + $0x48] sm:$0xff]
    %v123 = vld [vmem:[#allocation4 + $0x50] sm:$0xff]
    %v124 = vld [vmem:[#allocation4 + $0x58] sm:$0xff]
    %v125 = vld [vmem:[#allocation4 + $0x60] sm:$0xff]
    %v126 = vld [vmem:[#allocation4 + $0x68] sm:$0xff]
    %v127 = vld [vmem:[#allocation4 + $0x70] sm:$0xff]
    %v128 = vld [vmem:[#allocation4 + $0x78] sm:$0xff]
    %v129 = vld [vmem:[%s2] sm:$0x1]
    %v131 = vlaneseq
    %v132 = vshrl.u32 %v131, 7
    %v133 = vsub.s32 0, %v132
    %v134 = vrot.slane %v129, %v133
    %136 = vmatprep.subr.mxu0 0.0
    %137 = vmatpush1.msra.mxu0 %v113
    %138 = vmatprep.subr.mxu0 0.0
    %139 = vmatpush1.msra.mxu0 %v114
    %140 = vmatprep.subr.mxu0 0.0
    %141 = vmatpush1.msra.mxu0 %v115
    %142 = vmatprep.subr.mxu0 0.0
    %143 = vmatpush1.msra.mxu0 %v116
    %144 = vmatprep.subr.mxu0 0.0
    %145 = vmatpush1.msra.mxu0 %v117
    %146 = vmatprep.subr.mxu0 0.0
    %147 = vmatpush1.msra.mxu0 %v118
    %148 = vmatprep.subr.mxu0 0.0
    %149 = vmatpush1.msra.mxu0 %v119
    %150 = vmatprep.subr.mxu0 0.0
    %151 = vmatpush1.msra.mxu0 %v120
    %152 = vmatprep.subr.mxu0 0.0
    %153 = vmatpush1.msra.mxu0 %v121
    %154 = vmatprep.subr.mxu0 0.0
    %155 = vmatpush1.msra.mxu0 %v122
    %156 = vmatprep.subr.mxu0 0.0
    %157 = vmatpush1.msra.mxu0 %v123
    %158 = vmatprep.subr.mxu0 0.0
    %159 = vmatpush1.msra.mxu0 %v124
    %160 = vmatprep.subr.mxu0 0.0
    %161 = vmatpush1.msra.mxu0 %v125
    %162 = vmatprep.subr.mxu0 0.0
    %163 = vmatpush1.msra.mxu0 %v126
    %164 = vmatprep.subr.mxu0 0.0
    %165 = vmatpush1.msra.mxu0 %v127
    %166 = vmatprep.subr.mxu0 0.0
    %167 = vmatpush1.msra.mxu0 %v128
    %168 = vmatprep.subr.mxu0 0.0
    %169 = vmatpush1.msra.mxu0 0.0
    %170 = vmatprep.subr.mxu0 0.0
    %171 = vmatpush1.msra.mxu0 0.0
    %172 = vmatprep.subr.mxu0 0.0
    %173 = vmatpush1.msra.mxu0 0.0
    %174 = vmatprep.subr.mxu0 0.0
    %175 = vmatpush1.msra.mxu0 0.0
    %176 = vmatprep.subr.mxu0 0.0
    %177 = vmatpush1.msra.mxu0 0.0
    %178 = vmatprep.subr.mxu0 0.0
    %179 = vmatpush1.msra.mxu0 0.0
    %180 = vmatprep.subr.mxu0 0.0
    %181 = vmatpush1.msra.mxu0 0.0
    %182 = vmatprep.subr.mxu0 0.0
    %183 = vmatpush1.msra.mxu0 0.0
    %184 = vmatprep.subr.mxu0 0.0
    %185 = vmatpush1.msra.mxu0 0.0
    %186 = vmatprep.subr.mxu0 0.0
    %187 = vmatpush1.msra.mxu0 0.0
    %188 = vmatprep.subr.mxu0 0.0
    %189 = vmatpush1.msra.mxu0 0.0
    %190 = vmatprep.subr.mxu0 0.0
    %191 = vmatpush1.msra.mxu0 0.0
    %192 = vmatprep.subr.mxu0 0.0
    %193 = vmatpush1.msra.mxu0 0.0
    %194 = vmatprep.subr.mxu0 0.0
    %195 = vmatpush1.msra.mxu0 0.0
    %196 = vmatprep.subr.mxu0 0.0
    %197 = vmatpush1.msra.mxu0 0.0
    %198 = vmatprep.subr.mxu0 0.0
    %199 = vmatpush1.msra.mxu0 0.0
    %200 = vmatprep.mubr.f32.mxu0 0.0
    %201 = vmatmul.mubr.f32.gmra.mrb[0].mxu0 %v97
    %v202 = vpop.f32.mrb[0].mxu0
    %v203 = vadd.f32 %v134, %v202
    %v204 = vpop.f32.mrb[0].mxu0
    %205 = vmatprep.mubr.f32.mxu0 0.0
    %206 = vmatmul.mubr.f32.gmra.mrb[0].mxu0 %v98
    %v207 = vpop.f32.mrb[0].mxu0
    %v208 = vadd.f32 %v134, %v207
    %v209 = vpop.f32.mrb[0].mxu0
    %210 = vmatprep.mubr.f32.mxu0 0.0
    %211 = vmatmul.mubr.f32.gmra.mrb[0].mxu0 %v99
    %v212 = vpop.f32.mrb[0].mxu0
    %v213 = vadd.f32 %v134, %v212
    %v214 = vpop.f32.mrb[0].mxu0
    %215 = vmatprep.mubr.f32.mxu0 0.0
    %216 = vmatmul.mubr.f32.gmra.mrb[0].mxu0 %v100
    %v217 = vpop.f32.mrb[0].mxu0
    %v218 = vadd.f32 %v134, %v217
    %v219 = vpop.f32.mrb[0].mxu0
    %220 = vmatprep.mubr.f32.mxu0 0.0
    %221 = vmatmul.mubr.f32.gmra.mrb[0].mxu0 %v101
    %v222 = vpop.f32.mrb[0].mxu0
    %v223 = vadd.f32 %v134, %v222
    %v224 = vpop.f32.mrb[0].mxu0
    %225 = vmatprep.mubr.f32.mxu0 0.0
    %226 = vmatmul.mubr.f32.gmra.mrb[0].mxu0 %v102
    %v227 = vpop.f32.mrb[0].mxu0
    %v228 = vadd.f32 %v134, %v227
    %v229 = vpop.f32.mrb[0].mxu0
    %230 = vmatprep.mubr.f32.mxu0 0.0
    %231 = vmatmul.mubr.f32.gmra.mrb[0].mxu0 %v103
    %v232 = vpop.f32.mrb[0].mxu0
    %v233 = vadd.f32 %v134, %v232
    %v234 = vpop.f32.mrb[0].mxu0
    %235 = vmatprep.mubr.f32.mxu0 0.0
    %236 = vmatmul.mubr.f32.gmra.mrb[0].mxu0 %v104
    %v237 = vpop.f32.mrb[0].mxu0
    %v238 = vadd.f32 %v134, %v237
    %v239 = vpop.f32.mrb[0].mxu0
    %240 = vmatprep.mubr.f32.mxu0 0.0
    %241 = vmatmul.mubr.f32.gmra.mrb[0].mxu0 %v105
    %v242 = vpop.f32.mrb[0].mxu0
    %v243 = vadd.f32 %v134, %v242
    %v244 = vpop.f32.mrb[0].mxu0
    %245 = vmatprep.mubr.f32.mxu0 0.0
    %246 = vmatmul.mubr.f32.gmra.mrb[0].mxu0 %v106
    %v247 = vpop.f32.mrb[0].mxu0
    %v248 = vadd.f32 %v134, %v247
    %v249 = vpop.f32.mrb[0].mxu0
    %250 = vmatprep.mubr.f32.mxu0 0.0
    %251 = vmatmul.mubr.f32.gmra.mrb[0].mxu0 %v107
    %v252 = vpop.f32.mrb[0].mxu0
    %v253 = vadd.f32 %v134, %v252
    %v254 = vpop.f32.mrb[0].mxu0
    %255 = vmatprep.mubr.f32.mxu0 0.0
    %256 = vmatmul.mubr.f32.gmra.mrb[0].mxu0 %v108
    %v257 = vpop.f32.mrb[0].mxu0
    %v258 = vadd.f32 %v134, %v257
    %v259 = vpop.f32.mrb[0].mxu0
    %260 = vmatprep.mubr.f32.mxu0 0.0
    %261 = vmatmul.mubr.f32.gmra.mrb[0].mxu0 %v109
    %v262 = vpop.f32.mrb[0].mxu0
    %v263 = vadd.f32 %v134, %v262
    %v264 = vpop.f32.mrb[0].mxu0
    %265 = vmatprep.mubr.f32.mxu0 0.0
    %266 = vmatmul.mubr.f32.gmra.mrb[0].mxu0 %v110
    %v267 = vpop.f32.mrb[0].mxu0
    %v268 = vadd.f32 %v134, %v267
    %v269 = vpop.f32.mrb[0].mxu0
    %270 = vmatprep.mubr.f32.mxu0 0.0
    %271 = vmatmul.mubr.f32.gmra.mrb[0].mxu0 %v111
    %v272 = vpop.f32.mrb[0].mxu0
    %v273 = vadd.f32 %v134, %v272
    %v274 = vpop.f32.mrb[0].mxu0
    %275 = vmatprep.mubr.f32.mxu0 0.0
    %276 = vmatmul.mubr.f32.gmra.mrb[0].mxu0 %v112
    %v277 = vpop.f32.mrb[0].mxu0
    %v278 = vadd.f32 %v134, %v277
    %v279 = vpop.f32.mrb[0].mxu0
    %280 = vdwg.mxu0
    %v281 = vmax.f32 %v203, 0.0
    %v282 = vmax.f32 %v208, 0.0
    %v283 = vmax.f32 %v213, 0.0
    %v284 = vmax.f32 %v218, 0.0
    %v285 = vmax.f32 %v223, 0.0
    %v286 = vmax.f32 %v228, 0.0
    %v287 = vmax.f32 %v233, 0.0
    %v288 = vmax.f32 %v238, 0.0
    %v289 = vmax.f32 %v243, 0.0
    %v290 = vmax.f32 %v248, 0.0
    %v291 = vmax.f32 %v253, 0.0
    %v292 = vmax.f32 %v258, 0.0
    %v293 = vmax.f32 %v263, 0.0
    %v294 = vmax.f32 %v268, 0.0
    %v295 = vmax.f32 %v273, 0.0
    %v296 = vmax.f32 %v278, 0.0
    %v297 = vld [vmem:[#allocation6] sm:$0xff]
    %v298 = vld [vmem:[#allocation6 + $0x8] sm:$0xff]
    %v299 = vld [vmem:[#allocation6 + $0x10] sm:$0xff]
    %v300 = vld [vmem:[#allocation6 + $0x18] sm:$0xff]
    %v301 = vld [vmem:[#allocation6 + $0x20] sm:$0xff]
    %v302 = vld [vmem:[#allocation6 + $0x28] sm:$0xff]
    %v303 = vld [vmem:[#allocation6 + $0x30] sm:$0xff]
    %v304 = vld [vmem:[#allocation6 + $0x38] sm:$0xff]
    %v305 = vld [vmem:[#allocation6 + $0x40] sm:$0xff]
    %v306 = vld [vmem:[#allocation6 + $0x48] sm:$0xff]
    %v307 = vld [vmem:[#allocation6 + $0x50] sm:$0xff]
    %v308 = vld [vmem:[#allocation6 + $0x58] sm:$0xff]
    %v309 = vld [vmem:[#allocation6 + $0x60] sm:$0xff]
    %v310 = vld [vmem:[#allocation6 + $0x68] sm:$0xff]
    %v311 = vld [vmem:[#allocation6 + $0x70] sm:$0xff]
    %v312 = vld [vmem:[#allocation6 + $0x78] sm:$0xff]
    %v313 = vld [vmem:[%s4] sm:$0x1]
    %v315 = vlaneseq
    %v316 = vshrl.u32 %v315, 7
    %v317 = vsub.s32 0, %v316
    %v318 = vrot.slane %v313, %v317
    %320 = vmatprep.subr.mxu0 0.0
    %321 = vmatpush1.msra.mxu0 %v297
    %322 = vmatprep.subr.mxu0 0.0
    %323 = vmatpush1.msra.mxu0 %v298
    %324 = vmatprep.subr.mxu0 0.0
    %325 = vmatpush1.msra.mxu0 %v299
    %326 = vmatprep.subr.mxu0 0.0
    %327 = vmatpush1.msra.mxu0 %v300
    %328 = vmatprep.subr.mxu0 0.0
    %329 = vmatpush1.msra.mxu0 %v301
    %330 = vmatprep.subr.mxu0 0.0
    %331 = vmatpush1.msra.mxu0 %v302
    %332 = vmatprep.subr.mxu0 0.0
    %333 = vmatpush1.msra.mxu0 %v303
    %334 = vmatprep.subr.mxu0 0.0
    %335 = vmatpush1.msra.mxu0 %v304
    %336 = vmatprep.subr.mxu0 0.0
    %337 = vmatpush1.msra.mxu0 %v305
    %338 = vmatprep.subr.mxu0 0.0
    %339 = vmatpush1.msra.mxu0 %v306
    %340 = vmatprep.subr.mxu0 0.0
    %341 = vmatpush1.msra.mxu0 %v307
    %342 = vmatprep.subr.mxu0 0.0
    %343 = vmatpush1.msra.mxu0 %v308
    %344 = vmatprep.subr.mxu0 0.0
    %345 = vmatpush1.msra.mxu0 %v309
    %346 = vmatprep.subr.mxu0 0.0
    %347 = vmatpush1.msra.mxu0 %v310
    %348 = vmatprep.subr.mxu0 0.0
    %349 = vmatpush1.msra.mxu0 %v311
    %350 = vmatprep.subr.mxu0 0.0
    %351 = vmatpush1.msra.mxu0 %v312
    %352 = vmatprep.subr.mxu0 0.0
    %353 = vmatpush1.msra.mxu0 0.0
    %354 = vmatprep.subr.mxu0 0.0
    %355 = vmatpush1.msra.mxu0 0.0
    %356 = vmatprep.subr.mxu0 0.0
    %357 = vmatpush1.msra.mxu0 0.0
    %358 = vmatprep.subr.mxu0 0.0
    %359 = vmatpush1.msra.mxu0 0.0
    %360 = vmatprep.subr.mxu0 0.0
    %361 = vmatpush1.msra.mxu0 0.0
    %362 = vmatprep.subr.mxu0 0.0
    %363 = vmatpush1.msra.mxu0 0.0
    %364 = vmatprep.subr.mxu0 0.0
    %365 = vmatpush1.msra.mxu0 0.0
    %366 = vmatprep.subr.mxu0 0.0
    %367 = vmatpush1.msra.mxu0 0.0
    %368 = vmatprep.subr.mxu0 0.0
    %369 = vmatpush1.msra.mxu0 0.0
    %370 = vmatprep.subr.mxu0 0.0
    %371 = vmatpush1.msra.mxu0 0.0
    %372 = vmatprep.subr.mxu0 0.0
    %373 = vmatpush1.msra.mxu0 0.0
    %374 = vmatprep.subr.mxu0 0.0
    %375 = vmatpush1.msra.mxu0 0.0
    %376 = vmatprep.subr.mxu0 0.0
    %377 = vmatpush1.msra.mxu0 0.0
    %378 = vmatprep.subr.mxu0 0.0
    %379 = vmatpush1.msra.mxu0 0.0
    %380 = vmatprep.subr.mxu0 0.0
    %381 = vmatpush1.msra.mxu0 0.0
    %382 = vmatprep.subr.mxu0 0.0
    %383 = vmatpush1.msra.mxu0 0.0
    %384 = vmatprep.mubr.f32.mxu0 0.0
    %385 = vmatmul.mubr.f32.gmra.mrb[0].mxu0 %v281
    %v386 = vpop.f32.mrb[0].mxu0
    %v387 = vadd.f32 %v318, %v386
    %v388 = vpop.f32.mrb[0].mxu0
    %389 = vmatprep.mubr.f32.mxu0 0.0
    %390 = vmatmul.mubr.f32.gmra.mrb[0].mxu0 %v282
    %v391 = vpop.f32.mrb[0].mxu0
    %v392 = vadd.f32 %v318, %v391
    %v393 = vpop.f32.mrb[0].mxu0
    %394 = vmatprep.mubr.f32.mxu0 0.0
    %395 = vmatmul.mubr.f32.gmra.mrb[0].mxu0 %v283
    %v396 = vpop.f32.mrb[0].mxu0
    %v397 = vadd.f32 %v318, %v396
    %v398 = vpop.f32.mrb[0].mxu0
    %399 = vmatprep.mubr.f32.mxu0 0.0
    %400 = vmatmul.mubr.f32.gmra.mrb[0].mxu0 %v284
    %v401 = vpop.f32.mrb[0].mxu0
    %v402 = vadd.f32 %v318, %v401
    %v403 = vpop.f32.mrb[0].mxu0
    %404 = vmatprep.mubr.f32.mxu0 0.0
    %405 = vmatmul.mubr.f32.gmra.mrb[0].mxu0 %v285
    %v406 = vpop.f32.mrb[0].mxu0
    %v407 = vadd.f32 %v318, %v406
    %v408 = vpop.f32.mrb[0].mxu0
    %409 = vmatprep.mubr.f32.mxu0 0.0
    %410 = vmatmul.mubr.f32.gmra.mrb[0].mxu0 %v286
    %v411 = vpop.f32.mrb[0].mxu0
    %v412 = vadd.f32 %v318, %v411
    %v413 = vpop.f32.mrb[0].mxu0
    %414 = vmatprep.mubr.f32.mxu0 0.0
    %415 = vmatmul.mubr.f32.gmra.mrb[0].mxu0 %v287
    %v416 = vpop.f32.mrb[0].mxu0
    %v417 = vadd.f32 %v318, %v416
    %v418 = vpop.f32.mrb[0].mxu0
    %419 = vmatprep.mubr.f32.mxu0 0.0
    %420 = vmatmul.mubr.f32.gmra.mrb[0].mxu0 %v288
    %v421 = vpop.f32.mrb[0].mxu0
    %v422 = vadd.f32 %v318, %v421
    %v423 = vpop.f32.mrb[0].mxu0
    %424 = vmatprep.mubr.f32.mxu0 0.0
    %425 = vmatmul.mubr.f32.gmra.mrb[0].mxu0 %v289
    %v426 = vpop.f32.mrb[0].mxu0
    %v427 = vadd.f32 %v318, %v426
    %v428 = vpop.f32.mrb[0].mxu0
    %429 = vmatprep.mubr.f32.mxu0 0.0
    %430 = vmatmul.mubr.f32.gmra.mrb[0].mxu0 %v290
    %v431 = vpop.f32.mrb[0].mxu0
    %v432 = vadd.f32 %v318, %v431
    %v433 = vpop.f32.mrb[0].mxu0
    %434 = vmatprep.mubr.f32.mxu0 0.0
    %435 = vmatmul.mubr.f32.gmra.mrb[0].mxu0 %v291
    %v436 = vpop.f32.mrb[0].mxu0
    %v437 = vadd.f32 %v318, %v436
    %v438 = vpop.f32.mrb[0].mxu0
    %439 = vmatprep.mubr.f32.mxu0 0.0
    %440 = vmatmul.mubr.f32.gmra.mrb[0].mxu0 %v292
    %v441 = vpop.f32.mrb[0].mxu0
    %v442 = vadd.f32 %v318, %v441
    %v443 = vpop.f32.mrb[0].mxu0
    %444 = vmatprep.mubr.f32.mxu0 0.0
    %445 = vmatmul.mubr.f32.gmra.mrb[0].mxu0 %v293
    %v446 = vpop.f32.mrb[0].mxu0
    %v447 = vadd.f32 %v318, %v446
    %v448 = vpop.f32.mrb[0].mxu0
    %449 = vmatprep.mubr.f32.mxu0 0.0
    %450 = vmatmul.mubr.f32.gmra.mrb[0].mxu0 %v294
    %v451 = vpop.f32.mrb[0].mxu0
    %v452 = vadd.f32 %v318, %v451
    %v453 = vpop.f32.mrb[0].mxu0
    %454 = vmatprep.mubr.f32.mxu0 0.0
    %455 = vmatmul.mubr.f32.gmra.mrb[0].mxu0 %v295
    %v456 = vpop.f32.mrb[0].mxu0
    %v457 = vadd.f32 %v318, %v456
    %v458 = vpop.f32.mrb[0].mxu0
    %459 = vmatprep.mubr.f32.mxu0 0.0
    %460 = vmatmul.mubr.f32.gmra.mrb[0].mxu0 %v296
    %v461 = vpop.f32.mrb[0].mxu0
    %v462 = vadd.f32 %v318, %v461
    %v463 = vpop.f32.mrb[0].mxu0
    %464 = vdwg.mxu0
    %v465 = vmax.f32 %v387, 0.0
    %v466 = vmax.f32 %v392, 0.0
    %v467 = vmax.f32 %v397, 0.0
    %v468 = vmax.f32 %v402, 0.0
    %v469 = vmax.f32 %v407, 0.0
    %v470 = vmax.f32 %v412, 0.0
    %v471 = vmax.f32 %v417, 0.0
    %v472 = vmax.f32 %v422, 0.0
    %v473 = vmax.f32 %v427, 0.0
    %v474 = vmax.f32 %v432, 0.0
    %v475 = vmax.f32 %v437, 0.0
    %v476 = vmax.f32 %v442, 0.0
    %v477 = vmax.f32 %v447, 0.0
    %v478 = vmax.f32 %v452, 0.0
    %v479 = vmax.f32 %v457, 0.0
    %v480 = vmax.f32 %v462, 0.0
    %v481 = vld [vmem:[#allocation7] sm:$0xff]
    %v482 = vld [vmem:[#allocation7 + $0x8] sm:$0xff]
    %v483 = vld [vmem:[#allocation7 + $0x10] sm:$0xff]
    %v484 = vld [vmem:[#allocation7 + $0x18] sm:$0xff]
    %v485 = vld [vmem:[#allocation7 + $0x20] sm:$0xff]
    %v486 = vld [vmem:[#allocation7 + $0x28] sm:$0xff]
    %v487 = vld [vmem:[#allocation7 + $0x30] sm:$0xff]
    %v488 = vld [vmem:[#allocation7 + $0x38] sm:$0xff]
    %v489 = vld [vmem:[#allocation7 + $0x40] sm:$0xff]
    %v490 = vld [vmem:[#allocation7 + $0x48] sm:$0xff]
    %v491 = vld [vmem:[#allocation7 + $0x50] sm:$0xff]
    %v492 = vld [vmem:[#allocation7 + $0x58] sm:$0xff]
    %v493 = vld [vmem:[#allocation7 + $0x60] sm:$0xff]
    %v494 = vld [vmem:[#allocation7 + $0x68] sm:$0xff]
    %v495 = vld [vmem:[#allocation7 + $0x70] sm:$0xff]
    %v496 = vld [vmem:[#allocation7 + $0x78] sm:$0xff]
    %v497 = vld [vmem:[#allocation9] sm:$0xff]
    %v498 = vld [vmem:[#allocation9 + $0x8] sm:$0xff]
    %v499 = vld [vmem:[#allocation9 + $0x10] sm:$0xff]
    %v500 = vld [vmem:[#allocation9 + $0x18] sm:$0xff]
    %v501 = vld [vmem:[#allocation9 + $0x20] sm:$0xff]
    %v502 = vld [vmem:[#allocation9 + $0x28] sm:$0xff]
    %v503 = vld [vmem:[#allocation9 + $0x30] sm:$0xff]
    %v504 = vld [vmem:[#allocation9 + $0x38] sm:$0xff]
    %v505 = vld [vmem:[#allocation9 + $0x40] sm:$0xff]
    %v506 = vld [vmem:[#allocation9 + $0x48] sm:$0xff]
    %v507 = vld [vmem:[#allocation9 + $0x50] sm:$0xff]
    %v508 = vld [vmem:[#allocation9 + $0x58] sm:$0xff]
    %v509 = vld [vmem:[#allocation9 + $0x60] sm:$0xff]
    %v510 = vld [vmem:[#allocation9 + $0x68] sm:$0xff]
    %v511 = vld [vmem:[#allocation9 + $0x70] sm:$0xff]
    %v512 = vld [vmem:[#allocation9 + $0x78] sm:$0xff]
    %513 = vmatprep.subr.mxu0 0.0
    %514 = vmatpush1.msra.mxu0 %v497
    %515 = vmatprep.subr.mxu0 0.0
    %516 = vmatpush1.msra.mxu0 %v498
    %517 = vmatprep.subr.mxu0 0.0
    %518 = vmatpush1.msra.mxu0 %v499
    %519 = vmatprep.subr.mxu0 0.0
    %520 = vmatpush1.msra.mxu0 %v500
    %521 = vmatprep.subr.mxu0 0.0
    %522 = vmatpush1.msra.mxu0 %v501
    %523 = vmatprep.subr.mxu0 0.0
    %524 = vmatpush1.msra.mxu0 %v502
    %525 = vmatprep.subr.mxu0 0.0
    %526 = vmatpush1.msra.mxu0 %v503
    %527 = vmatprep.subr.mxu0 0.0
    %528 = vmatpush1.msra.mxu0 %v504
    %529 = vmatprep.subr.mxu0 0.0
    %530 = vmatpush1.msra.mxu0 %v505
    %531 = vmatprep.subr.mxu0 0.0
    %532 = vmatpush1.msra.mxu0 %v506
    %533 = vmatprep.subr.mxu0 0.0
    %534 = vmatpush1.msra.mxu0 %v507
    %535 = vmatprep.subr.mxu0 0.0
    %536 = vmatpush1.msra.mxu0 %v508
    %537 = vmatprep.subr.mxu0 0.0
    %538 = vmatpush1.msra.mxu0 %v509
    %539 = vmatprep.subr.mxu0 0.0
    %540 = vmatpush1.msra.mxu0 %v510
    %541 = vmatprep.subr.mxu0 0.0
    %542 = vmatpush1.msra.mxu0 %v511
    %543 = vmatprep.subr.mxu0 0.0
    %544 = vmatpush1.msra.mxu0 %v512
    %545 = vmatprep.subr.mxu0 0.0
    %546 = vmatpush1.msra.mxu0 0.0
    %547 = vmatprep.subr.mxu0 0.0
    %548 = vmatpush1.msra.mxu0 0.0
    %549 = vmatprep.subr.mxu0 0.0
    %550 = vmatpush1.msra.mxu0 0.0
    %551 = vmatprep.subr.mxu0 0.0
    %552 = vmatpush1.msra.mxu0 0.0
    %553 = vmatprep.subr.mxu0 0.0
    %554 = vmatpush1.msra.mxu0 0.0
    %555 = vmatprep.subr.mxu0 0.0
    %556 = vmatpush1.msra.mxu0 0.0
    %557 = vmatprep.subr.mxu0 0.0
    %558 = vmatpush1.msra.mxu0 0.0
    %559 = vmatprep.subr.mxu0 0.0
    %560 = vmatpush1.msra.mxu0 0.0
    %561 = vmatprep.subr.mxu0 0.0
    %562 = vmatpush1.msra.mxu0 0.0
    %563 = vmatprep.subr.mxu0 0.0
    %564 = vmatpush1.msra.mxu0 0.0
    %565 = vmatprep.subr.mxu0 0.0
    %566 = vmatpush1.msra.mxu0 0.0
    %567 = vmatprep.subr.mxu0 0.0
    %568 = vmatpush1.msra.mxu0 0.0
    %569 = vmatprep.subr.mxu0 0.0
    %570 = vmatpush1.msra.mxu0 0.0
    %571 = vmatprep.subr.mxu0 0.0
    %572 = vmatpush1.msra.mxu0 0.0
    %573 = vmatprep.subr.mxu0 0.0
    %574 = vmatpush1.msra.mxu0 0.0
    %575 = vmatprep.subr.mxu0 0.0
    %576 = vmatpush1.msra.mxu0 0.0
    %577 = vmatprep.mubr.f32.mxu0 0.0
    %578 = vmatmul.mubr.f32.gmra.mrb[0].mxu0 %v97
    %v579 = vpop.f32.mrb[0].mxu0
    %v580 = vadd.f32 0.0, %v579
    %v581 = vpop.f32.mrb[0].mxu0
    %582 = vmatprep.mubr.f32.mxu0 0.0
    %583 = vmatmul.mubr.f32.gmra.mrb[0].mxu0 %v98
    %v584 = vpop.f32.mrb[0].mxu0
    %v585 = vadd.f32 0.0, %v584
    %v586 = vpop.f32.mrb[0].mxu0
    %587 = vmatprep.mubr.f32.mxu0 0.0
    %588 = vmatmul.mubr.f32.gmra.mrb[0].mxu0 %v99
    %v589 = vpop.f32.mrb[0].mxu0
    %v590 = vadd.f32 0.0, %v589
    %v591 = vpop.f32.mrb[0].mxu0
    %592 = vmatprep.mubr.f32.mxu0 0.0
    %593 = vmatmul.mubr.f32.gmra.mrb[0].mxu0 %v100
    %v594 = vpop.f32.mrb[0].mxu0
    %v595 = vadd.f32 0.0, %v594
    %v596 = vpop.f32.mrb[0].mxu0
    %597 = vmatprep.mubr.f32.mxu0 0.0
    %598 = vmatmul.mubr.f32.gmra.mrb[0].mxu0 %v101
    %v599 = vpop.f32.mrb[0].mxu0
    %v600 = vadd.f32 0.0, %v599
    %v601 = vpop.f32.mrb[0].mxu0
    %602 = vmatprep.mubr.f32.mxu0 0.0
    %603 = vmatmul.mubr.f32.gmra.mrb[0].mxu0 %v102
    %v604 = vpop.f32.mrb[0].mxu0
    %v605 = vadd.f32 0.0, %v604
    %v606 = vpop.f32.mrb[0].mxu0
    %607 = vmatprep.mubr.f32.mxu0 0.0
    %608 = vmatmul.mubr.f32.gmra.mrb[0].mxu0 %v103
    %v609 = vpop.f32.mrb[0].mxu0
    %v610 = vadd.f32 0.0, %v609
    %v611 = vpop.f32.mrb[0].mxu0
    %612 = vmatprep.mubr.f32.mxu0 0.0
    %613 = vmatmul.mubr.f32.gmra.mrb[0].mxu0 %v104
    %v614 = vpop.f32.mrb[0].mxu0
    %v615 = vadd.f32 0.0, %v614
    %v616 = vpop.f32.mrb[0].mxu0
    %617 = vmatprep.mubr.f32.mxu0 0.0
    %618 = vmatmul.mubr.f32.gmra.mrb[0].mxu0 %v105
    %v619 = vpop.f32.mrb[0].mxu0
    %v620 = vadd.f32 0.0, %v619
    %v621 = vpop.f32.mrb[0].mxu0
    %622 = vmatprep.mubr.f32.mxu0 0.0
    %623 = vmatmul.mubr.f32.gmra.mrb[0].mxu0 %v106
    %v624 = vpop.f32.mrb[0].mxu0
    %v625 = vadd.f32 0.0, %v624
    %v626 = vpop.f32.mrb[0].mxu0
    %627 = vmatprep.mubr.f32.mxu0 0.0
    %628 = vmatmul.mubr.f32.gmra.mrb[0].mxu0 %v107
    %v629 = vpop.f32.mrb[0].mxu0
    %v630 = vadd.f32 0.0, %v629
    %v631 = vpop.f32.mrb[0].mxu0
    %632 = vmatprep.mubr.f32.mxu0 0.0
    %633 = vmatmul.mubr.f32.gmra.mrb[0].mxu0 %v108
    %v634 = vpop.f32.mrb[0].mxu0
    %v635 = vadd.f32 0.0, %v634
    %v636 = vpop.f32.mrb[0].mxu0
    %637 = vmatprep.mubr.f32.mxu0 0.0
    %638 = vmatmul.mubr.f32.gmra.mrb[0].mxu0 %v109
    %v639 = vpop.f32.mrb[0].mxu0
    %v640 = vadd.f32 0.0, %v639
    %v641 = vpop.f32.mrb[0].mxu0
    %642 = vmatprep.mubr.f32.mxu0 0.0
    %643 = vmatmul.mubr.f32.gmra.mrb[0].mxu0 %v110
    %v644 = vpop.f32.mrb[0].mxu0
    %v645 = vadd.f32 0.0, %v644
    %v646 = vpop.f32.mrb[0].mxu0
    %647 = vmatprep.mubr.f32.mxu0 0.0
    %648 = vmatmul.mubr.f32.gmra.mrb[0].mxu0 %v111
    %v649 = vpop.f32.mrb[0].mxu0
    %v650 = vadd.f32 0.0, %v649
    %v651 = vpop.f32.mrb[0].mxu0
    %652 = vmatprep.mubr.f32.mxu0 0.0
    %653 = vmatmul.mubr.f32.gmra.mrb[0].mxu0 %v112
    %v654 = vpop.f32.mrb[0].mxu0
    %v655 = vadd.f32 0.0, %v654
    %v656 = vpop.f32.mrb[0].mxu0
    %657 = vdwg.mxu0
    %658 = vmatprep.subr.mxu0 0.0
    %659 = vmatpush1.msra.mxu0 %v481
    %660 = vmatprep.subr.mxu0 0.0
    %661 = vmatpush1.msra.mxu0 %v482
    %662 = vmatprep.subr.mxu0 0.0
    %663 = vmatpush1.msra.mxu0 %v483
    %664 = vmatprep.subr.mxu0 0.0
    %665 = vmatpush1.msra.mxu0 %v484
    %666 = vmatprep.subr.mxu0 0.0
    %667 = vmatpush1.msra.mxu0 %v485
    %668 = vmatprep.subr.mxu0 0.0
    %669 = vmatpush1.msra.mxu0 %v486
    %670 = vmatprep.subr.mxu0 0.0
    %671 = vmatpush1.msra.mxu0 %v487
    %672 = vmatprep.subr.mxu0 0.0
    %673 = vmatpush1.msra.mxu0 %v488
    %674 = vmatprep.subr.mxu0 0.0
    %675 = vmatpush1.msra.mxu0 %v489
    %676 = vmatprep.subr.mxu0 0.0
    %677 = vmatpush1.msra.mxu0 %v490
    %678 = vmatprep.subr.mxu0 0.0
    %679 = vmatpush1.msra.mxu0 %v491
    %680 = vmatprep.subr.mxu0 0.0
    %681 = vmatpush1.msra.mxu0 %v492
    %682 = vmatprep.subr.mxu0 0.0
    %683 = vmatpush1.msra.mxu0 %v493
    %684 = vmatprep.subr.mxu0 0.0
    %685 = vmatpush1.msra.mxu0 %v494
    %686 = vmatprep.subr.mxu0 0.0
    %687 = vmatpush1.msra.mxu0 %v495
    %688 = vmatprep.subr.mxu0 0.0
    %689 = vmatpush1.msra.mxu0 %v496
    %690 = vmatprep.subr.mxu0 0.0
    %691 = vmatpush1.msra.mxu0 0.0
    %692 = vmatprep.subr.mxu0 0.0
    %693 = vmatpush1.msra.mxu0 0.0
    %694 = vmatprep.subr.mxu0 0.0
    %695 = vmatpush1.msra.mxu0 0.0
    %696 = vmatprep.subr.mxu0 0.0
    %697 = vmatpush1.msra.mxu0 0.0
    %698 = vmatprep.subr.mxu0 0.0
    %699 = vmatpush1.msra.mxu0 0.0
    %700 = vmatprep.subr.mxu0 0.0
    %701 = vmatpush1.msra.mxu0 0.0
    %702 = vmatprep.subr.mxu0 0.0
    %703 = vmatpush1.msra.mxu0 0.0
    %704 = vmatprep.subr.mxu0 0.0
    %705 = vmatpush1.msra.mxu0 0.0
    %706 = vmatprep.subr.mxu0 0.0
    %707 = vmatpush1.msra.mxu0 0.0
    %708 = vmatprep.subr.mxu0 0.0
    %709 = vmatpush1.msra.mxu0 0.0
    %710 = vmatprep.subr.mxu0 0.0
    %711 = vmatpush1.msra.mxu0 0.0
    %712 = vmatprep.subr.mxu0 0.0
    %713 = vmatpush1.msra.mxu0 0.0
    %714 = vmatprep.subr.mxu0 0.0
    %715 = vmatpush1.msra.mxu0 0.0
    %716 = vmatprep.subr.mxu0 0.0
    %717 = vmatpush1.msra.mxu0 0.0
    %718 = vmatprep.subr.mxu0 0.0
    %719 = vmatpush1.msra.mxu0 0.0
    %720 = vmatprep.subr.mxu0 0.0
    %721 = vmatpush1.msra.mxu0 0.0
    %722 = vmatprep.mubr.f32.mxu0 0.0
    %723 = vmatmul.mubr.f32.gmra.mrb[0].mxu0 %v465
    %v724 = vpop.f32.mrb[0].mxu0
    %v725 = vadd.f32 %v580, %v724
    %v726 = vpop.f32.mrb[0].mxu0
    %727 = vmatprep.mubr.f32.mxu0 0.0
    %728 = vmatmul.mubr.f32.gmra.mrb[0].mxu0 %v466
    %v729 = vpop.f32.mrb[0].mxu0
    %v730 = vadd.f32 %v585, %v729
    %v731 = vpop.f32.mrb[0].mxu0
    %732 = vmatprep.mubr.f32.mxu0 0.0
    %733 = vmatmul.mubr.f32.gmra.mrb[0].mxu0 %v467
    %v734 = vpop.f32.mrb[0].mxu0
    %v735 = vadd.f32 %v590, %v734
    %v736 = vpop.f32.mrb[0].mxu0
    %737 = vmatprep.mubr.f32.mxu0 0.0
    %738 = vmatmul.mubr.f32.gmra.mrb[0].mxu0 %v468
    %v739 = vpop.f32.mrb[0].mxu0
    %v740 = vadd.f32 %v595, %v739
    %v741 = vpop.f32.mrb[0].mxu0
    %742 = vmatprep.mubr.f32.mxu0 0.0
    %743 = vmatmul.mubr.f32.gmra.mrb[0].mxu0 %v469
    %v744 = vpop.f32.mrb[0].mxu0
    %v745 = vadd.f32 %v600, %v744
    %v746 = vpop.f32.mrb[0].mxu0
    %747 = vmatprep.mubr.f32.mxu0 0.0
    %748 = vmatmul.mubr.f32.gmra.mrb[0].mxu0 %v470
    %v749 = vpop.f32.mrb[0].mxu0
    %v750 = vadd.f32 %v605, %v749
    %v751 = vpop.f32.mrb[0].mxu0
    %752 = vmatprep.mubr.f32.mxu0 0.0
    %753 = vmatmul.mubr.f32.gmra.mrb[0].mxu0 %v471
    %v754 = vpop.f32.mrb[0].mxu0
    %v755 = vadd.f32 %v610, %v754
    %v756 = vpop.f32.mrb[0].mxu0
    %757 = vmatprep.mubr.f32.mxu0 0.0
    %758 = vmatmul.mubr.f32.gmra.mrb[0].mxu0 %v472
    %v759 = vpop.f32.mrb[0].mxu0
    %v760 = vadd.f32 %v615, %v759
    %v761 = vpop.f32.mrb[0].mxu0
    %762 = vmatprep.mubr.f32.mxu0 0.0
    %763 = vmatmul.mubr.f32.gmra.mrb[0].mxu0 %v473
    %v764 = vpop.f32.mrb[0].mxu0
    %v765 = vadd.f32 %v620, %v764
    %v766 = vpop.f32.mrb[0].mxu0
    %767 = vmatprep.mubr.f32.mxu0 0.0
    %768 = vmatmul.mubr.f32.gmra.mrb[0].mxu0 %v474
    %v769 = vpop.f32.mrb[0].mxu0
    %v770 = vadd.f32 %v625, %v769
    %v771 = vpop.f32.mrb[0].mxu0
    %772 = vmatprep.mubr.f32.mxu0 0.0
    %773 = vmatmul.mubr.f32.gmra.mrb[0].mxu0 %v475
    %v774 = vpop.f32.mrb[0].mxu0
    %v775 = vadd.f32 %v630, %v774
    %v776 = vpop.f32.mrb[0].mxu0
    %777 = vmatprep.mubr.f32.mxu0 0.0
    %778 = vmatmul.mubr.f32.gmra.mrb[0].mxu0 %v476
    %v779 = vpop.f32.mrb[0].mxu0
    %v780 = vadd.f32 %v635, %v779
    %v781 = vpop.f32.mrb[0].mxu0
    %782 = vmatprep.mubr.f32.mxu0 0.0
    %783 = vmatmul.mubr.f32.gmra.mrb[0].mxu0 %v477
    %v784 = vpop.f32.mrb[0].mxu0
    %v785 = vadd.f32 %v640, %v784
    %v786 = vpop.f32.mrb[0].mxu0
    %787 = vmatprep.mubr.f32.mxu0 0.0
    %788 = vmatmul.mubr.f32.gmra.mrb[0].mxu0 %v478
    %v789 = vpop.f32.mrb[0].mxu0
    %v790 = vadd.f32 %v645, %v789
    %v791 = vpop.f32.mrb[0].mxu0
    %792 = vmatprep.mubr.f32.mxu0 0.0
    %793 = vmatmul.mubr.f32.gmra.mrb[0].mxu0 %v479
    %v794 = vpop.f32.mrb[0].mxu0
    %v795 = vadd.f32 %v650, %v794
    %v796 = vpop.f32.mrb[0].mxu0
    %797 = vmatprep.mubr.f32.mxu0 0.0
    %798 = vmatmul.mubr.f32.gmra.mrb[0].mxu0 %v480
    %v799 = vpop.f32.mrb[0].mxu0
    %v800 = vadd.f32 %v655, %v799
    %v801 = vpop.f32.mrb[0].mxu0
    %802 = vdwg.mxu0
    %v803 = vld [vmem:[%s7] sm:$0x1]
    %v805 = vlaneseq
    %v806 = vshrl.u32 %v805, 7
    %v807 = vsub.s32 0, %v806
    %v808 = vrot.slane %v803, %v807
    %v810 = vadd.f32 %v725, %v808
    %v811 = vadd.f32 %v730, %v808
    %v812 = vadd.f32 %v735, %v808
    %v813 = vadd.f32 %v740, %v808
    %v814 = vadd.f32 %v745, %v808
    %v815 = vadd.f32 %v750, %v808
    %v816 = vadd.f32 %v755, %v808
    %v817 = vadd.f32 %v760, %v808
    %v818 = vadd.f32 %v765, %v808
    %v819 = vadd.f32 %v770, %v808
    %v820 = vadd.f32 %v775, %v808
    %v821 = vadd.f32 %v780, %v808
    %v822 = vadd.f32 %v785, %v808
    %v823 = vadd.f32 %v790, %v808
    %v824 = vadd.f32 %v795, %v808
    %v825 = vadd.f32 %v800, %v808
    %v826 = vsub.f32 0.0, %v810
    %v827 = vsub.f32 0.0, %v811
    %v828 = vsub.f32 0.0, %v812
    %v829 = vsub.f32 0.0, %v813
    %v830 = vsub.f32 0.0, %v814
    %v831 = vsub.f32 0.0, %v815
    %v832 = vsub.f32 0.0, %v816
    %v833 = vsub.f32 0.0, %v817
    %v834 = vsub.f32 0.0, %v818
    %v835 = vsub.f32 0.0, %v819
    %v836 = vsub.f32 0.0, %v820
    %v837 = vsub.f32 0.0, %v821
    %v838 = vsub.f32 0.0, %v822
    %v839 = vsub.f32 0.0, %v823
    %v840 = vsub.f32 0.0, %v824
    %v841 = vsub.f32 0.0, %v825
    %v842 = vmul.f32 %v826, 1.442695
    %v843 = vpow.pop %v842
    %v844 = vmul.f32 %v827, 1.442695
    %v845 = vpow.pop %v844
    %v846 = vmul.f32 %v828, 1.442695
    %v847 = vpow.pop %v846
    %v848 = vmul.f32 %v829, 1.442695
    %v849 = vpow.pop %v848
    %v850 = vmul.f32 %v830, 1.442695
    %v851 = vpow.pop %v850
    %v852 = vmul.f32 %v831, 1.442695
    %v853 = vpow.pop %v852
    %v854 = vmul.f32 %v832, 1.442695
    %v855 = vpow.pop %v854
    %v856 = vmul.f32 %v833, 1.442695
    %v857 = vpow.pop %v856
    %v858 = vmul.f32 %v834, 1.442695
    %v859 = vpow.pop %v858
    %v860 = vmul.f32 %v835, 1.442695
    %v861 = vpow.pop %v860
    %v862 = vmul.f32 %v836, 1.442695
    %v863 = vpow.pop %v862
    %v864 = vmul.f32 %v837, 1.442695
    %v865 = vpow.pop %v864
    %v866 = vmul.f32 %v838, 1.442695
    %v867 = vpow.pop %v866
    %v868 = vmul.f32 %v839, 1.442695
    %v869 = vpow.pop %v868
    %v870 = vmul.f32 %v840, 1.442695
    %v871 = vpow.pop %v870
    %v872 = vmul.f32 %v841, 1.442695
    %v873 = vpow.pop %v872
    %v874 = vadd.f32 %v843, 1.0
    %v875 = vadd.f32 %v845, 1.0
    %v876 = vadd.f32 %v847, 1.0
    %v877 = vadd.f32 %v849, 1.0
    %v878 = vadd.f32 %v851, 1.0
    %v879 = vadd.f32 %v853, 1.0
    %v880 = vadd.f32 %v855, 1.0
    %v881 = vadd.f32 %v857, 1.0
    %v882 = vadd.f32 %v859, 1.0
    %v883 = vadd.f32 %v861, 1.0
    %v884 = vadd.f32 %v863, 1.0
    %v885 = vadd.f32 %v865, 1.0
    %v886 = vadd.f32 %v867, 1.0
    %v887 = vadd.f32 %v869, 1.0
    %v888 = vadd.f32 %v871, 1.0
    %v889 = vadd.f32 %v873, 1.0
    %v890 = vrcp.pop %v874
    %v891 = vmul.f32 1.0, %v890
    %v892 = vrcp.pop %v875
    %v893 = vmul.f32 1.0, %v892
    %v894 = vrcp.pop %v876
    %v895 = vmul.f32 1.0, %v894
    %v896 = vrcp.pop %v877
    %v897 = vmul.f32 1.0, %v896
    %v898 = vrcp.pop %v878
    %v899 = vmul.f32 1.0, %v898
    %v900 = vrcp.pop %v879
    %v901 = vmul.f32 1.0, %v900
    %v902 = vrcp.pop %v880
    %v903 = vmul.f32 1.0, %v902
    %v904 = vrcp.pop %v881
    %v905 = vmul.f32 1.0, %v904
    %v906 = vrcp.pop %v882
    %v907 = vmul.f32 1.0, %v906
    %v908 = vrcp.pop %v883
    %v909 = vmul.f32 1.0, %v908
    %v910 = vrcp.pop %v884
    %v911 = vmul.f32 1.0, %v910
    %v912 = vrcp.pop %v885
    %v913 = vmul.f32 1.0, %v912
    %v914 = vrcp.pop %v886
    %v915 = vmul.f32 1.0, %v914
    %v916 = vrcp.pop %v887
    %v917 = vmul.f32 1.0, %v916
    %v918 = vrcp.pop %v888
    %v919 = vmul.f32 1.0, %v918
    %v920 = vrcp.pop %v889
    %v921 = vmul.f32 1.0, %v920
    %vm922 = vcmask 7168
    %923 = vst.msk [vmem:[%s8] sm:$0xff] %vm922, %v891
    %924 = vst.msk [vmem:[%s8 + $0x8] sm:$0xff] %vm922, %v893
    %925 = vst.msk [vmem:[%s8 + $0x10] sm:$0xff] %vm922, %v895
    %926 = vst.msk [vmem:[%s8 + $0x18] sm:$0xff] %vm922, %v897
    %927 = vst.msk [vmem:[%s8 + $0x20] sm:$0xff] %vm922, %v899
    %928 = vst.msk [vmem:[%s8 + $0x28] sm:$0xff] %vm922, %v901
    %929 = vst.msk [vmem:[%s8 + $0x30] sm:$0xff] %vm922, %v903
    %930 = vst.msk [vmem:[%s8 + $0x38] sm:$0xff] %vm922, %v905
    %931 = vst.msk [vmem:[%s8 + $0x40] sm:$0xff] %vm922, %v907
    %932 = vst.msk [vmem:[%s8 + $0x48] sm:$0xff] %vm922, %v909
    %933 = vst.msk [vmem:[%s8 + $0x50] sm:$0xff] %vm922, %v911
    %934 = vst.msk [vmem:[%s8 + $0x58] sm:$0xff] %vm922, %v913
    %935 = vst.msk [vmem:[%s8 + $0x60] sm:$0xff] %vm922, %v915
    %936 = vst.msk [vmem:[%s8 + $0x68] sm:$0xff] %vm922, %v917
    %937 = vst.msk [vmem:[%s8 + $0x70] sm:$0xff] %vm922, %v919
    %938 = vst.msk [vmem:[%s8 + $0x78] sm:$0xff] %vm922, %v921
    // Predicated region
    $region54: #{tpu_custom_call.1} parent=1 // pred_check
      _
    $region55: #{tpu_custom_call.1} parent=1 // pred_check_branch
      %940 = sbr.rel (0) target = $region57
    $region56: #{tpu_custom_call.1} parent=1 // pred_region
      _
    $region57: #{tpu_custom_call.1} parent=1 // pred_fallthru
      _
    // Predicated region
    $region58: #{tpu_custom_call.1} parent=1 // pred_check
      _
    $region59: #{tpu_custom_call.1} parent=1 // pred_check_branch
      %942 = sbr.rel (0) target = $region61
    $region60: #{tpu_custom_call.1} parent=1 // pred_region
      _
    $region61: #{tpu_custom_call.1} parent=1 // pred_fallthru
      _
    %943 = vsyncpa [#allocation3], 1
    %944 = vsyncpa [#allocation5], 1
    %945 = vsyncpa [#allocation8], 1

// kernel: tpu_custom_call.1
$region0: #{tpu_custom_call.1}
  #allocation0 [shape = 'u32[]', space=smem, size = 0x4, offset = 0x4, fixed_abs, tag = 'smem constant byte address 0x4 - core index']
  #allocation1 [shape = 'u32[144,128]{1,0:T(1,128)}', space=vmem, size = 0x12000, scoped, tag = 'internal scratch']
  %s0 = inlined_call_operand.hbm [shape: f32[128,128], index: 0, kind: input, shape index: {}]
  %s1 = inlined_call_operand.hbm [shape: f32[128,128], index: 1, kind: input, shape index: {}]
  %s2 = inlined_call_operand.vmem [shape: f32[1,128], index: 2, kind: input, shape index: {}]
  %s3 = inlined_call_operand.hbm [shape: f32[128,128], index: 3, kind: input, shape index: {}]
  %s4 = inlined_call_operand.vmem [shape: f32[1,128], index: 4, kind: input, shape index: {}]
  %s5 = inlined_call_operand.hbm [shape: f32[128,128], index: 5, kind: input, shape index: {}]
  %s6 = inlined_call_operand.hbm [shape: f32[128,128], index: 6, kind: input, shape index: {}]
  %s7 = inlined_call_operand.vmem [shape: f32[1,128], index: 7, kind: input, shape index: {}]
  %s8 = inlined_call_operand.hbm [shape: f32[128,128], index: 8, kind: output, shape index: {}]
  %s9 = sld [smem:[#allocation0]]
  $region62: #{tpu_custom_call.1} parent=0
    _
  %s11 = ssub.s32 1, %s9
  %s12 = scalar_select 0, %s11, %s9
  $region1: #{tpu_custom_call.1} parent=0
    #allocation2 [shape = 'u8[65536]{0}', space=vmem, size = 0x10000, scoped, tag = 'input window, operand 0, single buffered']
    #allocation3 [shape = 's32[1]{0}', space=sflag, size = 0x4, scoped, tag = 'scoped memory for tpu_custom_call.1']
    #allocation4 [shape = 's32[1]{0}', space=sflag, size = 0x4, scoped, tag = 'scoped memory for tpu_custom_call.1']
    #allocation5 [shape = 'u8[65536]{0}', space=vmem, size = 0x10000, scoped, tag = 'input window, operand 1, single buffered']
    #allocation6 [shape = 's32[1]{0}', space=sflag, size = 0x4, scoped, tag = 'scoped memory for tpu_custom_call.1']
    #allocation7 [shape = 'u8[65536]{0}', space=vmem, size = 0x10000, scoped, tag = 'input window, operand 3, single buffered']
    #allocation8 [shape = 'u8[65536]{0}', space=vmem, size = 0x10000, scoped, tag = 'input window, operand 5, single buffered']
    #allocation9 [shape = 's32[1]{0}', space=sflag, size = 0x4, scoped, tag = 'scoped memory for tpu_custom_call.1']
    #allocation10 [shape = 'u8[65536]{0}', space=vmem, size = 0x10000, scoped, tag = 'input window, operand 6, single buffered']
    #allocation11 [shape = 'u8[65536]{0}', space=vmem, size = 0x10000, scoped, tag = 'output window, operand 0, single buffered']
    %13 = vsyncpa [#allocation3], 0
    %14 = vsyncpa [#allocation6], 0
    %15 = vsyncpa [#allocation9], 0
    %16 = vsyncpa [#allocation4], 0
    // Predicated region
    $region2: #{tpu_custom_call.1} parent=1 // pred_check
      _
    $region3: #{tpu_custom_call.1} parent=1 // pred_check_branch
      %18 = sbr.rel (0) target = $region5
    $region4: #{tpu_custom_call.1} parent=1 // pred_region
      %s20 = ssub.s32 2048, 2048
      %21 = vsyncadd [#allocation3], %s20
      %s22 = sshll.u32 [#allocation2], 4
      %s23 = int_to_ptr.vmem [resolvable:$true] %s22
      %28 = dma.hbm_to_vmem [thread:$0]  %s0, 2048, %s23, [#allocation3], 128, 128, 8
    $region5: #{tpu_custom_call.1} parent=1 // pred_fallthru
      _
    // Predicated region
    $region6: #{tpu_custom_call.1} parent=1 // pred_check
      _
    $region7: #{tpu_custom_call.1} parent=1 // pred_check_branch
      %30 = sbr.rel (0) target = $region9
    $region8: #{tpu_custom_call.1} parent=1 // pred_region
      %s32 = ssub.s32 2048, 2048
      %33 = vsyncadd [#allocation6], %s32
      %s34 = sshll.u32 [#allocation5], 4
      %s35 = int_to_ptr.vmem [resolvable:$true] %s34
      %40 = dma.hbm_to_vmem [thread:$0]  %s1, 2048, %s35, [#allocation6], 128, 128, 8
    $region9: #{tpu_custom_call.1} parent=1 // pred_fallthru
      _
    // Predicated region
    $region10: #{tpu_custom_call.1} parent=1 // pred_check
      _
    $region11: #{tpu_custom_call.1} parent=1 // pred_check_branch
      %42 = sbr.rel (0) target = $region13
    $region12: #{tpu_custom_call.1} parent=1 // pred_region
      _
    $region13: #{tpu_custom_call.1} parent=1 // pred_fallthru
      _
    // Predicated region
    $region14: #{tpu_custom_call.1} parent=1 // pred_check
      _
    $region15: #{tpu_custom_call.1} parent=1 // pred_check_branch
      %44 = sbr.rel (0) target = $region17
    $region16: #{tpu_custom_call.1} parent=1 // pred_region
      %s46 = ssub.s32 2048, 2048
      %47 = vsyncadd [#allocation6], %s46
      %s48 = sshll.u32 [#allocation7], 4
      %s49 = int_to_ptr.vmem [resolvable:$true] %s48
      %54 = dma.hbm_to_vmem [thread:$0]  %s3, 2048, %s49, [#allocation6], 128, 128, 8
    $region17: #{tpu_custom_call.1} parent=1 // pred_fallthru
      _
    // Predicated region
    $region18: #{tpu_custom_call.1} parent=1 // pred_check
      _
    $region19: #{tpu_custom_call.1} parent=1 // pred_check_branch
      %56 = sbr.rel (0) target = $region21
    $region20: #{tpu_custom_call.1} parent=1 // pred_region
      _
    $region21: #{tpu_custom_call.1} parent=1 // pred_fallthru
      _
    // Predicated region
    $region22: #{tpu_custom_call.1} parent=1 // pred_check
      _
    $region23: #{tpu_custom_call.1} parent=1 // pred_check_branch
      %58 = sbr.rel (0) target = $region25
    $region24: #{tpu_custom_call.1} parent=1 // pred_region
      %s60 = ssub.s32 2048, 2048
      %61 = vsyncadd [#allocation9], %s60
      %s62 = sshll.u32 [#allocation8], 4
      %s63 = int_to_ptr.vmem [resolvable:$true] %s62
      %68 = dma.hbm_to_vmem [thread:$0]  %s5, 2048, %s63, [#allocation9], 128, 128, 8
    $region25: #{tpu_custom_call.1} parent=1 // pred_fallthru
      _
    // Predicated region
    $region26: #{tpu_custom_call.1} parent=1 // pred_check
      _
    $region27: #{tpu_custom_call.1} parent=1 // pred_check_branch
      %70 = sbr.rel (0) target = $region29
    $region28: #{tpu_custom_call.1} parent=1 // pred_region
      %s72 = ssub.s32 2048, 2048
      %73 = vsyncadd [#allocation9], %s72
      %s74 = sshll.u32 [#allocation10], 4
      %s75 = int_to_ptr.vmem [resolvable:$true] %s74
      %80 = dma.hbm_to_vmem [thread:$0]  %s6, 2048, %s75, [#allocation9], 128, 128, 8
    $region29: #{tpu_custom_call.1} parent=1 // pred_fallthru
      _
    // Predicated region
    $region30: #{tpu_custom_call.1} parent=1 // pred_check
      _
    $region31: #{tpu_custom_call.1} parent=1 // pred_check_branch
      %82 = sbr.rel (0) target = $region33
    $region32: #{tpu_custom_call.1} parent=1 // pred_region
      _
    $region33: #{tpu_custom_call.1} parent=1 // pred_fallthru
      _
    // Predicated region
    $region34: #{tpu_custom_call.1} parent=1 // pred_check
      _
    $region35: #{tpu_custom_call.1} parent=1 // pred_check_branch
      %84 = sbr.rel (0) target = $region37
    $region36: #{tpu_custom_call.1} parent=1 // pred_region
      %85 = dma.done [#allocation3], 2048
    $region37: #{tpu_custom_call.1} parent=1 // pred_fallthru
      _
    // Predicated region
    $region38: #{tpu_custom_call.1} parent=1 // pred_check
      _
    $region39: #{tpu_custom_call.1} parent=1 // pred_check_branch
      %87 = sbr.rel (0) target = $region41
    $region40: #{tpu_custom_call.1} parent=1 // pred_region
      %88 = dma.done [#allocation6], 2048
    $region41: #{tpu_custom_call.1} parent=1 // pred_fallthru
      _
    // Predicated region
    $region42: #{tpu_custom_call.1} parent=1 // pred_check
      _
    $region43: #{tpu_custom_call.1} parent=1 // pred_check_branch
      %90 = sbr.rel (0) target = $region45
    $region44: #{tpu_custom_call.1} parent=1 // pred_region
      %91 = dma.done [#allocation6], 2048
    $region45: #{tpu_custom_call.1} parent=1 // pred_fallthru
      _
    // Predicated region
    $region46: #{tpu_custom_call.1} parent=1 // pred_check
      _
    $region47: #{tpu_custom_call.1} parent=1 // pred_check_branch
      %93 = sbr.rel (0) target = $region49
    $region48: #{tpu_custom_call.1} parent=1 // pred_region
      %94 = dma.done [#allocation9], 2048
    $region49: #{tpu_custom_call.1} parent=1 // pred_fallthru
      _
    // Predicated region
    $region50: #{tpu_custom_call.1} parent=1 // pred_check
      _
    $region51: #{tpu_custom_call.1} parent=1 // pred_check_branch
      %96 = sbr.rel (0) target = $region53
    $region52: #{tpu_custom_call.1} parent=1 // pred_region
      %97 = dma.done [#allocation9], 2048
    $region53: #{tpu_custom_call.1} parent=1 // pred_fallthru
      _
    %v98 = vld [vmem:[#allocation2] sm:$0xff]
    %v99 = vld [vmem:[#allocation2 + $0x8] sm:$0xff]
    %v100 = vld [vmem:[#allocation2 + $0x10] sm:$0xff]
    %v101 = vld [vmem:[#allocation2 + $0x18] sm:$0xff]
    %v102 = vld [vmem:[#allocation2 + $0x20] sm:$0xff]
    %v103 = vld [vmem:[#allocation2 + $0x28] sm:$0xff]
    %v104 = vld [vmem:[#allocation2 + $0x30] sm:$0xff]
    %v105 = vld [vmem:[#allocation2 + $0x38] sm:$0xff]
    %v106 = vld [vmem:[#allocation2 + $0x40] sm:$0xff]
    %v107 = vld [vmem:[#allocation2 + $0x48] sm:$0xff]
    %v108 = vld [vmem:[#allocation2 + $0x50] sm:$0xff]
    %v109 = vld [vmem:[#allocation2 + $0x58] sm:$0xff]
    %v110 = vld [vmem:[#allocation2 + $0x60] sm:$0xff]
    %v111 = vld [vmem:[#allocation2 + $0x68] sm:$0xff]
    %v112 = vld [vmem:[#allocation2 + $0x70] sm:$0xff]
    %v113 = vld [vmem:[#allocation2 + $0x78] sm:$0xff]
    %v114 = vld [vmem:[#allocation5] sm:$0xff]
    %v115 = vld [vmem:[#allocation5 + $0x8] sm:$0xff]
    %v116 = vld [vmem:[#allocation5 + $0x10] sm:$0xff]
    %v117 = vld [vmem:[#allocation5 + $0x18] sm:$0xff]
    %v118 = vld [vmem:[#allocation5 + $0x20] sm:$0xff]
    %v119 = vld [vmem:[#allocation5 + $0x28] sm:$0xff]
    %v120 = vld [vmem:[#allocation5 + $0x30] sm:$0xff]
    %v121 = vld [vmem:[#allocation5 + $0x38] sm:$0xff]
    %v122 = vld [vmem:[#allocation5 + $0x40] sm:$0xff]
    %v123 = vld [vmem:[#allocation5 + $0x48] sm:$0xff]
    %v124 = vld [vmem:[#allocation5 + $0x50] sm:$0xff]
    %v125 = vld [vmem:[#allocation5 + $0x58] sm:$0xff]
    %v126 = vld [vmem:[#allocation5 + $0x60] sm:$0xff]
    %v127 = vld [vmem:[#allocation5 + $0x68] sm:$0xff]
    %v128 = vld [vmem:[#allocation5 + $0x70] sm:$0xff]
    %v129 = vld [vmem:[#allocation5 + $0x78] sm:$0xff]
    %v130 = vld [vmem:[%s2] sm:$0x1]
    %v132 = vlaneseq
    %v133 = vshrl.u32 %v132, 7
    %v134 = vsub.s32 0, %v133
    %v135 = vrot.slane %v130, %v134
    %137 = vmatprep.subr.mxu0 0.0
    %138 = vmatpush1.msra.mxu0 %v114
    %139 = vmatprep.subr.mxu0 0.0
    %140 = vmatpush1.msra.mxu0 %v115
    %141 = vmatprep.subr.mxu0 0.0
    %142 = vmatpush1.msra.mxu0 %v116
    %143 = vmatprep.subr.mxu0 0.0
    %144 = vmatpush1.msra.mxu0 %v117
    %145 = vmatprep.subr.mxu0 0.0
    %146 = vmatpush1.msra.mxu0 %v118
    %147 = vmatprep.subr.mxu0 0.0
    %148 = vmatpush1.msra.mxu0 %v119
    %149 = vmatprep.subr.mxu0 0.0
    %150 = vmatpush1.msra.mxu0 %v120
    %151 = vmatprep.subr.mxu0 0.0
    %152 = vmatpush1.msra.mxu0 %v121
    %153 = vmatprep.subr.mxu0 0.0
    %154 = vmatpush1.msra.mxu0 %v122
    %155 = vmatprep.subr.mxu0 0.0
    %156 = vmatpush1.msra.mxu0 %v123
    %157 = vmatprep.subr.mxu0 0.0
    %158 = vmatpush1.msra.mxu0 %v124
    %159 = vmatprep.subr.mxu0 0.0
    %160 = vmatpush1.msra.mxu0 %v125
    %161 = vmatprep.subr.mxu0 0.0
    %162 = vmatpush1.msra.mxu0 %v126
    %163 = vmatprep.subr.mxu0 0.0
    %164 = vmatpush1.msra.mxu0 %v127
    %165 = vmatprep.subr.mxu0 0.0
    %166 = vmatpush1.msra.mxu0 %v128
    %167 = vmatprep.subr.mxu0 0.0
    %168 = vmatpush1.msra.mxu0 %v129
    %169 = vmatprep.subr.mxu0 0.0
    %170 = vmatpush1.msra.mxu0 0.0
    %171 = vmatprep.subr.mxu0 0.0
    %172 = vmatpush1.msra.mxu0 0.0
    %173 = vmatprep.subr.mxu0 0.0
    %174 = vmatpush1.msra.mxu0 0.0
    %175 = vmatprep.subr.mxu0 0.0
    %176 = vmatpush1.msra.mxu0 0.0
    %177 = vmatprep.subr.mxu0 0.0
    %178 = vmatpush1.msra.mxu0 0.0
    %179 = vmatprep.subr.mxu0 0.0
    %180 = vmatpush1.msra.mxu0 0.0
    %181 = vmatprep.subr.mxu0 0.0
    %182 = vmatpush1.msra.mxu0 0.0
    %183 = vmatprep.subr.mxu0 0.0
    %184 = vmatpush1.msra.mxu0 0.0
    %185 = vmatprep.subr.mxu0 0.0
    %186 = vmatpush1.msra.mxu0 0.0
    %187 = vmatprep.subr.mxu0 0.0
    %188 = vmatpush1.msra.mxu0 0.0
    %189 = vmatprep.subr.mxu0 0.0
    %190 = vmatpush1.msra.mxu0 0.0
    %191 = vmatprep.subr.mxu0 0.0
    %192 = vmatpush1.msra.mxu0 0.0
    %193 = vmatprep.subr.mxu0 0.0
    %194 = vmatpush1.msra.mxu0 0.0
    %195 = vmatprep.subr.mxu0 0.0
    %196 = vmatpush1.msra.mxu0 0.0
    %197 = vmatprep.subr.mxu0 0.0
    %198 = vmatpush1.msra.mxu0 0.0
    %199 = vmatprep.subr.mxu0 0.0
    %200 = vmatpush1.msra.mxu0 0.0
    %201 = vmatprep.mubr.f32.mxu0 0.0
    %202 = vmatmul.mubr.f32.gmra.mrb[0].mxu0 %v98
    %v203 = vpop.f32.mrb[0].mxu0
    %v204 = vadd.f32 %v135, %v203
    %v205 = vpop.f32.mrb[0].mxu0
    %206 = vmatprep.mubr.f32.mxu0 0.0
    %207 = vmatmul.mubr.f32.gmra.mrb[0].mxu0 %v99
    %v208 = vpop.f32.mrb[0].mxu0
    %v209 = vadd.f32 %v135, %v208
    %v210 = vpop.f32.mrb[0].mxu0
    %211 = vmatprep.mubr.f32.mxu0 0.0
    %212 = vmatmul.mubr.f32.gmra.mrb[0].mxu0 %v100
    %v213 = vpop.f32.mrb[0].mxu0
    %v214 = vadd.f32 %v135, %v213
    %v215 = vpop.f32.mrb[0].mxu0
    %216 = vmatprep.mubr.f32.mxu0 0.0
    %217 = vmatmul.mubr.f32.gmra.mrb[0].mxu0 %v101
    %v218 = vpop.f32.mrb[0].mxu0
    %v219 = vadd.f32 %v135, %v218
    %v220 = vpop.f32.mrb[0].mxu0
    %221 = vmatprep.mubr.f32.mxu0 0.0
    %222 = vmatmul.mubr.f32.gmra.mrb[0].mxu0 %v102
    %v223 = vpop.f32.mrb[0].mxu0
    %v224 = vadd.f32 %v135, %v223
    %v225 = vpop.f32.mrb[0].mxu0
    %226 = vmatprep.mubr.f32.mxu0 0.0
    %227 = vmatmul.mubr.f32.gmra.mrb[0].mxu0 %v103
    %v228 = vpop.f32.mrb[0].mxu0
    %v229 = vadd.f32 %v135, %v228
    %v230 = vpop.f32.mrb[0].mxu0
    %231 = vmatprep.mubr.f32.mxu0 0.0
    %232 = vmatmul.mubr.f32.gmra.mrb[0].mxu0 %v104
    %v233 = vpop.f32.mrb[0].mxu0
    %v234 = vadd.f32 %v135, %v233
    %v235 = vpop.f32.mrb[0].mxu0
    %236 = vmatprep.mubr.f32.mxu0 0.0
    %237 = vmatmul.mubr.f32.gmra.mrb[0].mxu0 %v105
    %v238 = vpop.f32.mrb[0].mxu0
    %v239 = vadd.f32 %v135, %v238
    %v240 = vpop.f32.mrb[0].mxu0
    %241 = vmatprep.mubr.f32.mxu0 0.0
    %242 = vmatmul.mubr.f32.gmra.mrb[0].mxu0 %v106
    %v243 = vpop.f32.mrb[0].mxu0
    %v244 = vadd.f32 %v135, %v243
    %v245 = vpop.f32.mrb[0].mxu0
    %246 = vmatprep.mubr.f32.mxu0 0.0
    %247 = vmatmul.mubr.f32.gmra.mrb[0].mxu0 %v107
    %v248 = vpop.f32.mrb[0].mxu0
    %v249 = vadd.f32 %v135, %v248
    %v250 = vpop.f32.mrb[0].mxu0
    %251 = vmatprep.mubr.f32.mxu0 0.0
    %252 = vmatmul.mubr.f32.gmra.mrb[0].mxu0 %v108
    %v253 = vpop.f32.mrb[0].mxu0
    %v254 = vadd.f32 %v135, %v253
    %v255 = vpop.f32.mrb[0].mxu0
    %256 = vmatprep.mubr.f32.mxu0 0.0
    %257 = vmatmul.mubr.f32.gmra.mrb[0].mxu0 %v109
    %v258 = vpop.f32.mrb[0].mxu0
    %v259 = vadd.f32 %v135, %v258
    %v260 = vpop.f32.mrb[0].mxu0
    %261 = vmatprep.mubr.f32.mxu0 0.0
    %262 = vmatmul.mubr.f32.gmra.mrb[0].mxu0 %v110
    %v263 = vpop.f32.mrb[0].mxu0
    %v264 = vadd.f32 %v135, %v263
    %v265 = vpop.f32.mrb[0].mxu0
    %266 = vmatprep.mubr.f32.mxu0 0.0
    %267 = vmatmul.mubr.f32.gmra.mrb[0].mxu0 %v111
    %v268 = vpop.f32.mrb[0].mxu0
    %v269 = vadd.f32 %v135, %v268
    %v270 = vpop.f32.mrb[0].mxu0
    %271 = vmatprep.mubr.f32.mxu0 0.0
    %272 = vmatmul.mubr.f32.gmra.mrb[0].mxu0 %v112
    %v273 = vpop.f32.mrb[0].mxu0
    %v274 = vadd.f32 %v135, %v273
    %v275 = vpop.f32.mrb[0].mxu0
    %276 = vmatprep.mubr.f32.mxu0 0.0
    %277 = vmatmul.mubr.f32.gmra.mrb[0].mxu0 %v113
    %v278 = vpop.f32.mrb[0].mxu0
    %v279 = vadd.f32 %v135, %v278
    %v280 = vpop.f32.mrb[0].mxu0
    %281 = vdwg.mxu0
    %v282 = vmax.f32 %v204, 0.0
    %v283 = vmax.f32 %v209, 0.0
    %v284 = vmax.f32 %v214, 0.0
    %v285 = vmax.f32 %v219, 0.0
    %v286 = vmax.f32 %v224, 0.0
    %v287 = vmax.f32 %v229, 0.0
    %v288 = vmax.f32 %v234, 0.0
    %v289 = vmax.f32 %v239, 0.0
    %v290 = vmax.f32 %v244, 0.0
    %v291 = vmax.f32 %v249, 0.0
    %v292 = vmax.f32 %v254, 0.0
    %v293 = vmax.f32 %v259, 0.0
    %v294 = vmax.f32 %v264, 0.0
    %v295 = vmax.f32 %v269, 0.0
    %v296 = vmax.f32 %v274, 0.0
    %v297 = vmax.f32 %v279, 0.0
    %v298 = vld [vmem:[#allocation7] sm:$0xff]
    %v299 = vld [vmem:[#allocation7 + $0x8] sm:$0xff]
    %v300 = vld [vmem:[#allocation7 + $0x10] sm:$0xff]
    %v301 = vld [vmem:[#allocation7 + $0x18] sm:$0xff]
    %v302 = vld [vmem:[#allocation7 + $0x20] sm:$0xff]
    %v303 = vld [vmem:[#allocation7 + $0x28] sm:$0xff]
    %v304 = vld [vmem:[#allocation7 + $0x30] sm:$0xff]
    %v305 = vld [vmem:[#allocation7 + $0x38] sm:$0xff]
    %v306 = vld [vmem:[#allocation7 + $0x40] sm:$0xff]
    %v307 = vld [vmem:[#allocation7 + $0x48] sm:$0xff]
    %v308 = vld [vmem:[#allocation7 + $0x50] sm:$0xff]
    %v309 = vld [vmem:[#allocation7 + $0x58] sm:$0xff]
    %v310 = vld [vmem:[#allocation7 + $0x60] sm:$0xff]
    %v311 = vld [vmem:[#allocation7 + $0x68] sm:$0xff]
    %v312 = vld [vmem:[#allocation7 + $0x70] sm:$0xff]
    %v313 = vld [vmem:[#allocation7 + $0x78] sm:$0xff]
    %v314 = vld [vmem:[%s4] sm:$0x1]
    %v316 = vlaneseq
    %v317 = vshrl.u32 %v316, 7
    %v318 = vsub.s32 0, %v317
    %v319 = vrot.slane %v314, %v318
    %321 = vmatprep.subr.mxu0 0.0
    %322 = vmatpush1.msra.mxu0 %v298
    %323 = vmatprep.subr.mxu0 0.0
    %324 = vmatpush1.msra.mxu0 %v299
    %325 = vmatprep.subr.mxu0 0.0
    %326 = vmatpush1.msra.mxu0 %v300
    %327 = vmatprep.subr.mxu0 0.0
    %328 = vmatpush1.msra.mxu0 %v301
    %329 = vmatprep.subr.mxu0 0.0
    %330 = vmatpush1.msra.mxu0 %v302
    %331 = vmatprep.subr.mxu0 0.0
    %332 = vmatpush1.msra.mxu0 %v303
    %333 = vmatprep.subr.mxu0 0.0
    %334 = vmatpush1.msra.mxu0 %v304
    %335 = vmatprep.subr.mxu0 0.0
    %336 = vmatpush1.msra.mxu0 %v305
    %337 = vmatprep.subr.mxu0 0.0
    %338 = vmatpush1.msra.mxu0 %v306
    %339 = vmatprep.subr.mxu0 0.0
    %340 = vmatpush1.msra.mxu0 %v307
    %341 = vmatprep.subr.mxu0 0.0
    %342 = vmatpush1.msra.mxu0 %v308
    %343 = vmatprep.subr.mxu0 0.0
    %344 = vmatpush1.msra.mxu0 %v309
    %345 = vmatprep.subr.mxu0 0.0
    %346 = vmatpush1.msra.mxu0 %v310
    %347 = vmatprep.subr.mxu0 0.0
    %348 = vmatpush1.msra.mxu0 %v311
    %349 = vmatprep.subr.mxu0 0.0
    %350 = vmatpush1.msra.mxu0 %v312
    %351 = vmatprep.subr.mxu0 0.0
    %352 = vmatpush1.msra.mxu0 %v313
    %353 = vmatprep.subr.mxu0 0.0
    %354 = vmatpush1.msra.mxu0 0.0
    %355 = vmatprep.subr.mxu0 0.0
    %356 = vmatpush1.msra.mxu0 0.0
    %357 = vmatprep.subr.mxu0 0.0
    %358 = vmatpush1.msra.mxu0 0.0
    %359 = vmatprep.subr.mxu0 0.0
    %360 = vmatpush1.msra.mxu0 0.0
    %361 = vmatprep.subr.mxu0 0.0
    %362 = vmatpush1.msra.mxu0 0.0
    %363 = vmatprep.subr.mxu0 0.0
    %364 = vmatpush1.msra.mxu0 0.0
    %365 = vmatprep.subr.mxu0 0.0
    %366 = vmatpush1.msra.mxu0 0.0
    %367 = vmatprep.subr.mxu0 0.0
    %368 = vmatpush1.msra.mxu0 0.0
    %369 = vmatprep.subr.mxu0 0.0
    %370 = vmatpush1.msra.mxu0 0.0
    %371 = vmatprep.subr.mxu0 0.0
    %372 = vmatpush1.msra.mxu0 0.0
    %373 = vmatprep.subr.mxu0 0.0
    %374 = vmatpush1.msra.mxu0 0.0
    %375 = vmatprep.subr.mxu0 0.0
    %376 = vmatpush1.msra.mxu0 0.0
    %377 = vmatprep.subr.mxu0 0.0
    %378 = vmatpush1.msra.mxu0 0.0
    %379 = vmatprep.subr.mxu0 0.0
    %380 = vmatpush1.msra.mxu0 0.0
    %381 = vmatprep.subr.mxu0 0.0
    %382 = vmatpush1.msra.mxu0 0.0
    %383 = vmatprep.subr.mxu0 0.0
    %384 = vmatpush1.msra.mxu0 0.0
    %385 = vmatprep.mubr.f32.mxu0 0.0
    %386 = vmatmul.mubr.f32.gmra.mrb[0].mxu0 %v282
    %v387 = vpop.f32.mrb[0].mxu0
    %v388 = vadd.f32 %v319, %v387
    %v389 = vpop.f32.mrb[0].mxu0
    %390 = vmatprep.mubr.f32.mxu0 0.0
    %391 = vmatmul.mubr.f32.gmra.mrb[0].mxu0 %v283
    %v392 = vpop.f32.mrb[0].mxu0
    %v393 = vadd.f32 %v319, %v392
    %v394 = vpop.f32.mrb[0].mxu0
    %395 = vmatprep.mubr.f32.mxu0 0.0
    %396 = vmatmul.mubr.f32.gmra.mrb[0].mxu0 %v284
    %v397 = vpop.f32.mrb[0].mxu0
    %v398 = vadd.f32 %v319, %v397
    %v399 = vpop.f32.mrb[0].mxu0
    %400 = vmatprep.mubr.f32.mxu0 0.0
    %401 = vmatmul.mubr.f32.gmra.mrb[0].mxu0 %v285
    %v402 = vpop.f32.mrb[0].mxu0
    %v403 = vadd.f32 %v319, %v402
    %v404 = vpop.f32.mrb[0].mxu0
    %405 = vmatprep.mubr.f32.mxu0 0.0
    %406 = vmatmul.mubr.f32.gmra.mrb[0].mxu0 %v286
    %v407 = vpop.f32.mrb[0].mxu0
    %v408 = vadd.f32 %v319, %v407
    %v409 = vpop.f32.mrb[0].mxu0
    %410 = vmatprep.mubr.f32.mxu0 0.0
    %411 = vmatmul.mubr.f32.gmra.mrb[0].mxu0 %v287
    %v412 = vpop.f32.mrb[0].mxu0
    %v413 = vadd.f32 %v319, %v412
    %v414 = vpop.f32.mrb[0].mxu0
    %415 = vmatprep.mubr.f32.mxu0 0.0
    %416 = vmatmul.mubr.f32.gmra.mrb[0].mxu0 %v288
    %v417 = vpop.f32.mrb[0].mxu0
    %v418 = vadd.f32 %v319, %v417
    %v419 = vpop.f32.mrb[0].mxu0
    %420 = vmatprep.mubr.f32.mxu0 0.0
    %421 = vmatmul.mubr.f32.gmra.mrb[0].mxu0 %v289
    %v422 = vpop.f32.mrb[0].mxu0
    %v423 = vadd.f32 %v319, %v422
    %v424 = vpop.f32.mrb[0].mxu0
    %425 = vmatprep.mubr.f32.mxu0 0.0
    %426 = vmatmul.mubr.f32.gmra.mrb[0].mxu0 %v290
    %v427 = vpop.f32.mrb[0].mxu0
    %v428 = vadd.f32 %v319, %v427
    %v429 = vpop.f32.mrb[0].mxu0
    %430 = vmatprep.mubr.f32.mxu0 0.0
    %431 = vmatmul.mubr.f32.gmra.mrb[0].mxu0 %v291
    %v432 = vpop.f32.mrb[0].mxu0
    %v433 = vadd.f32 %v319, %v432
    %v434 = vpop.f32.mrb[0].mxu0
    %435 = vmatprep.mubr.f32.mxu0 0.0
    %436 = vmatmul.mubr.f32.gmra.mrb[0].mxu0 %v292
    %v437 = vpop.f32.mrb[0].mxu0
    %v438 = vadd.f32 %v319, %v437
    %v439 = vpop.f32.mrb[0].mxu0
    %440 = vmatprep.mubr.f32.mxu0 0.0
    %441 = vmatmul.mubr.f32.gmra.mrb[0].mxu0 %v293
    %v442 = vpop.f32.mrb[0].mxu0
    %v443 = vadd.f32 %v319, %v442
    %v444 = vpop.f32.mrb[0].mxu0
    %445 = vmatprep.mubr.f32.mxu0 0.0
    %446 = vmatmul.mubr.f32.gmra.mrb[0].mxu0 %v294
    %v447 = vpop.f32.mrb[0].mxu0
    %v448 = vadd.f32 %v319, %v447
    %v449 = vpop.f32.mrb[0].mxu0
    %450 = vmatprep.mubr.f32.mxu0 0.0
    %451 = vmatmul.mubr.f32.gmra.mrb[0].mxu0 %v295
    %v452 = vpop.f32.mrb[0].mxu0
    %v453 = vadd.f32 %v319, %v452
    %v454 = vpop.f32.mrb[0].mxu0
    %455 = vmatprep.mubr.f32.mxu0 0.0
    %456 = vmatmul.mubr.f32.gmra.mrb[0].mxu0 %v296
    %v457 = vpop.f32.mrb[0].mxu0
    %v458 = vadd.f32 %v319, %v457
    %v459 = vpop.f32.mrb[0].mxu0
    %460 = vmatprep.mubr.f32.mxu0 0.0
    %461 = vmatmul.mubr.f32.gmra.mrb[0].mxu0 %v297
    %v462 = vpop.f32.mrb[0].mxu0
    %v463 = vadd.f32 %v319, %v462
    %v464 = vpop.f32.mrb[0].mxu0
    %465 = vdwg.mxu0
    %v466 = vmax.f32 %v388, 0.0
    %v467 = vmax.f32 %v393, 0.0
    %v468 = vmax.f32 %v398, 0.0
    %v469 = vmax.f32 %v403, 0.0
    %v470 = vmax.f32 %v408, 0.0
    %v471 = vmax.f32 %v413, 0.0
    %v472 = vmax.f32 %v418, 0.0
    %v473 = vmax.f32 %v423, 0.0
    %v474 = vmax.f32 %v428, 0.0
    %v475 = vmax.f32 %v433, 0.0
    %v476 = vmax.f32 %v438, 0.0
    %v477 = vmax.f32 %v443, 0.0
    %v478 = vmax.f32 %v448, 0.0
    %v479 = vmax.f32 %v453, 0.0
    %v480 = vmax.f32 %v458, 0.0
    %v481 = vmax.f32 %v463, 0.0
    %v482 = vld [vmem:[#allocation8] sm:$0xff]
    %v483 = vld [vmem:[#allocation8 + $0x8] sm:$0xff]
    %v484 = vld [vmem:[#allocation8 + $0x10] sm:$0xff]
    %v485 = vld [vmem:[#allocation8 + $0x18] sm:$0xff]
    %v486 = vld [vmem:[#allocation8 + $0x20] sm:$0xff]
    %v487 = vld [vmem:[#allocation8 + $0x28] sm:$0xff]
    %v488 = vld [vmem:[#allocation8 + $0x30] sm:$0xff]
    %v489 = vld [vmem:[#allocation8 + $0x38] sm:$0xff]
    %v490 = vld [vmem:[#allocation8 + $0x40] sm:$0xff]
    %v491 = vld [vmem:[#allocation8 + $0x48] sm:$0xff]
    %v492 = vld [vmem:[#allocation8 + $0x50] sm:$0xff]
    %v493 = vld [vmem:[#allocation8 + $0x58] sm:$0xff]
    %v494 = vld [vmem:[#allocation8 + $0x60] sm:$0xff]
    %v495 = vld [vmem:[#allocation8 + $0x68] sm:$0xff]
    %v496 = vld [vmem:[#allocation8 + $0x70] sm:$0xff]
    %v497 = vld [vmem:[#allocation8 + $0x78] sm:$0xff]
    %v498 = vld [vmem:[#allocation10] sm:$0xff]
    %v499 = vld [vmem:[#allocation10 + $0x8] sm:$0xff]
    %v500 = vld [vmem:[#allocation10 + $0x10] sm:$0xff]
    %v501 = vld [vmem:[#allocation10 + $0x18] sm:$0xff]
    %v502 = vld [vmem:[#allocation10 + $0x20] sm:$0xff]
    %v503 = vld [vmem:[#allocation10 + $0x28] sm:$0xff]
    %v504 = vld [vmem:[#allocation10 + $0x30] sm:$0xff]
    %v505 = vld [vmem:[#allocation10 + $0x38] sm:$0xff]
    %v506 = vld [vmem:[#allocation10 + $0x40] sm:$0xff]
    %v507 = vld [vmem:[#allocation10 + $0x48] sm:$0xff]
    %v508 = vld [vmem:[#allocation10 + $0x50] sm:$0xff]
    %v509 = vld [vmem:[#allocation10 + $0x58] sm:$0xff]
    %v510 = vld [vmem:[#allocation10 + $0x60] sm:$0xff]
    %v511 = vld [vmem:[#allocation10 + $0x68] sm:$0xff]
    %v512 = vld [vmem:[#allocation10 + $0x70] sm:$0xff]
    %v513 = vld [vmem:[#allocation10 + $0x78] sm:$0xff]
    %514 = vmatprep.subr.mxu0 0.0
    %515 = vmatpush1.msra.mxu0 %v498
    %516 = vmatprep.subr.mxu0 0.0
    %517 = vmatpush1.msra.mxu0 %v499
    %518 = vmatprep.subr.mxu0 0.0
    %519 = vmatpush1.msra.mxu0 %v500
    %520 = vmatprep.subr.mxu0 0.0
    %521 = vmatpush1.msra.mxu0 %v501
    %522 = vmatprep.subr.mxu0 0.0
    %523 = vmatpush1.msra.mxu0 %v502
    %524 = vmatprep.subr.mxu0 0.0
    %525 = vmatpush1.msra.mxu0 %v503
    %526 = vmatprep.subr.mxu0 0.0
    %527 = vmatpush1.msra.mxu0 %v504
    %528 = vmatprep.subr.mxu0 0.0
    %529 = vmatpush1.msra.mxu0 %v505
    %530 = vmatprep.subr.mxu0 0.0
    %531 = vmatpush1.msra.mxu0 %v506
    %532 = vmatprep.subr.mxu0 0.0
    %533 = vmatpush1.msra.mxu0 %v507
    %534 = vmatprep.subr.mxu0 0.0
    %535 = vmatpush1.msra.mxu0 %v508
    %536 = vmatprep.subr.mxu0 0.0
    %537 = vmatpush1.msra.mxu0 %v509
    %538 = vmatprep.subr.mxu0 0.0
    %539 = vmatpush1.msra.mxu0 %v510
    %540 = vmatprep.subr.mxu0 0.0
    %541 = vmatpush1.msra.mxu0 %v511
    %542 = vmatprep.subr.mxu0 0.0
    %543 = vmatpush1.msra.mxu0 %v512
    %544 = vmatprep.subr.mxu0 0.0
    %545 = vmatpush1.msra.mxu0 %v513
    %546 = vmatprep.subr.mxu0 0.0
    %547 = vmatpush1.msra.mxu0 0.0
    %548 = vmatprep.subr.mxu0 0.0
    %549 = vmatpush1.msra.mxu0 0.0
    %550 = vmatprep.subr.mxu0 0.0
    %551 = vmatpush1.msra.mxu0 0.0
    %552 = vmatprep.subr.mxu0 0.0
    %553 = vmatpush1.msra.mxu0 0.0
    %554 = vmatprep.subr.mxu0 0.0
    %555 = vmatpush1.msra.mxu0 0.0
    %556 = vmatprep.subr.mxu0 0.0
    %557 = vmatpush1.msra.mxu0 0.0
    %558 = vmatprep.subr.mxu0 0.0
    %559 = vmatpush1.msra.mxu0 0.0
    %560 = vmatprep.subr.mxu0 0.0
    %561 = vmatpush1.msra.mxu0 0.0
    %562 = vmatprep.subr.mxu0 0.0
    %563 = vmatpush1.msra.mxu0 0.0
    %564 = vmatprep.subr.mxu0 0.0
    %565 = vmatpush1.msra.mxu0 0.0
    %566 = vmatprep.subr.mxu0 0.0
    %567 = vmatpush1.msra.mxu0 0.0
    %568 = vmatprep.subr.mxu0 0.0
    %569 = vmatpush1.msra.mxu0 0.0
    %570 = vmatprep.subr.mxu0 0.0
    %571 = vmatpush1.msra.mxu0 0.0
    %572 = vmatprep.subr.mxu0 0.0
    %573 = vmatpush1.msra.mxu0 0.0
    %574 = vmatprep.subr.mxu0 0.0
    %575 = vmatpush1.msra.mxu0 0.0
    %576 = vmatprep.subr.mxu0 0.0
    %577 = vmatpush1.msra.mxu0 0.0
    %578 = vmatprep.mubr.f32.mxu0 0.0
    %579 = vmatmul.mubr.f32.gmra.mrb[0].mxu0 %v98
    %v580 = vpop.f32.mrb[0].mxu0
    %v581 = vadd.f32 0.0, %v580
    %v582 = vpop.f32.mrb[0].mxu0
    %583 = vmatprep.mubr.f32.mxu0 0.0
    %584 = vmatmul.mubr.f32.gmra.mrb[0].mxu0 %v99
    %v585 = vpop.f32.mrb[0].mxu0
    %v586 = vadd.f32 0.0, %v585
    %v587 = vpop.f32.mrb[0].mxu0
    %588 = vmatprep.mubr.f32.mxu0 0.0
    %589 = vmatmul.mubr.f32.gmra.mrb[0].mxu0 %v100
    %v590 = vpop.f32.mrb[0].mxu0
    %v591 = vadd.f32 0.0, %v590
    %v592 = vpop.f32.mrb[0].mxu0
    %593 = vmatprep.mubr.f32.mxu0 0.0
    %594 = vmatmul.mubr.f32.gmra.mrb[0].mxu0 %v101
    %v595 = vpop.f32.mrb[0].mxu0
    %v596 = vadd.f32 0.0, %v595
    %v597 = vpop.f32.mrb[0].mxu0
    %598 = vmatprep.mubr.f32.mxu0 0.0
    %599 = vmatmul.mubr.f32.gmra.mrb[0].mxu0 %v102
    %v600 = vpop.f32.mrb[0].mxu0
    %v601 = vadd.f32 0.0, %v600
    %v602 = vpop.f32.mrb[0].mxu0
    %603 = vmatprep.mubr.f32.mxu0 0.0
    %604 = vmatmul.mubr.f32.gmra.mrb[0].mxu0 %v103
    %v605 = vpop.f32.mrb[0].mxu0
    %v606 = vadd.f32 0.0, %v605
    %v607 = vpop.f32.mrb[0].mxu0
    %608 = vmatprep.mubr.f32.mxu0 0.0
    %609 = vmatmul.mubr.f32.gmra.mrb[0].mxu0 %v104
    %v610 = vpop.f32.mrb[0].mxu0
    %v611 = vadd.f32 0.0, %v610
    %v612 = vpop.f32.mrb[0].mxu0
    %613 = vmatprep.mubr.f32.mxu0 0.0
    %614 = vmatmul.mubr.f32.gmra.mrb[0].mxu0 %v105
    %v615 = vpop.f32.mrb[0].mxu0
    %v616 = vadd.f32 0.0, %v615
    %v617 = vpop.f32.mrb[0].mxu0
    %618 = vmatprep.mubr.f32.mxu0 0.0
    %619 = vmatmul.mubr.f32.gmra.mrb[0].mxu0 %v106
    %v620 = vpop.f32.mrb[0].mxu0
    %v621 = vadd.f32 0.0, %v620
    %v622 = vpop.f32.mrb[0].mxu0
    %623 = vmatprep.mubr.f32.mxu0 0.0
    %624 = vmatmul.mubr.f32.gmra.mrb[0].mxu0 %v107
    %v625 = vpop.f32.mrb[0].mxu0
    %v626 = vadd.f32 0.0, %v625
    %v627 = vpop.f32.mrb[0].mxu0
    %628 = vmatprep.mubr.f32.mxu0 0.0
    %629 = vmatmul.mubr.f32.gmra.mrb[0].mxu0 %v108
    %v630 = vpop.f32.mrb[0].mxu0
    %v631 = vadd.f32 0.0, %v630
    %v632 = vpop.f32.mrb[0].mxu0
    %633 = vmatprep.mubr.f32.mxu0 0.0
    %634 = vmatmul.mubr.f32.gmra.mrb[0].mxu0 %v109
    %v635 = vpop.f32.mrb[0].mxu0
    %v636 = vadd.f32 0.0, %v635
    %v637 = vpop.f32.mrb[0].mxu0
    %638 = vmatprep.mubr.f32.mxu0 0.0
    %639 = vmatmul.mubr.f32.gmra.mrb[0].mxu0 %v110
    %v640 = vpop.f32.mrb[0].mxu0
    %v641 = vadd.f32 0.0, %v640
    %v642 = vpop.f32.mrb[0].mxu0
    %643 = vmatprep.mubr.f32.mxu0 0.0
    %644 = vmatmul.mubr.f32.gmra.mrb[0].mxu0 %v111
    %v645 = vpop.f32.mrb[0].mxu0
    %v646 = vadd.f32 0.0, %v645
    %v647 = vpop.f32.mrb[0].mxu0
    %648 = vmatprep.mubr.f32.mxu0 0.0
    %649 = vmatmul.mubr.f32.gmra.mrb[0].mxu0 %v112
    %v650 = vpop.f32.mrb[0].mxu0
    %v651 = vadd.f32 0.0, %v650
    %v652 = vpop.f32.mrb[0].mxu0
    %653 = vmatprep.mubr.f32.mxu0 0.0
    %654 = vmatmul.mubr.f32.gmra.mrb[0].mxu0 %v113
    %v655 = vpop.f32.mrb[0].mxu0
    %v656 = vadd.f32 0.0, %v655
    %v657 = vpop.f32.mrb[0].mxu0
    %658 = vdwg.mxu0
    %659 = vmatprep.subr.mxu0 0.0
    %660 = vmatpush1.msra.mxu0 %v482
    %661 = vmatprep.subr.mxu0 0.0
    %662 = vmatpush1.msra.mxu0 %v483
    %663 = vmatprep.subr.mxu0 0.0
    %664 = vmatpush1.msra.mxu0 %v484
    %665 = vmatprep.subr.mxu0 0.0
    %666 = vmatpush1.msra.mxu0 %v485
    %667 = vmatprep.subr.mxu0 0.0
    %668 = vmatpush1.msra.mxu0 %v486
    %669 = vmatprep.subr.mxu0 0.0
    %670 = vmatpush1.msra.mxu0 %v487
    %671 = vmatprep.subr.mxu0 0.0
    %672 = vmatpush1.msra.mxu0 %v488
    %673 = vmatprep.subr.mxu0 0.0
    %674 = vmatpush1.msra.mxu0 %v489
    %675 = vmatprep.subr.mxu0 0.0
    %676 = vmatpush1.msra.mxu0 %v490
    %677 = vmatprep.subr.mxu0 0.0
    %678 = vmatpush1.msra.mxu0 %v491
    %679 = vmatprep.subr.mxu0 0.0
    %680 = vmatpush1.msra.mxu0 %v492
    %681 = vmatprep.subr.mxu0 0.0
    %682 = vmatpush1.msra.mxu0 %v493
    %683 = vmatprep.subr.mxu0 0.0
    %684 = vmatpush1.msra.mxu0 %v494
    %685 = vmatprep.subr.mxu0 0.0
    %686 = vmatpush1.msra.mxu0 %v495
    %687 = vmatprep.subr.mxu0 0.0
    %688 = vmatpush1.msra.mxu0 %v496
    %689 = vmatprep.subr.mxu0 0.0
    %690 = vmatpush1.msra.mxu0 %v497
    %691 = vmatprep.subr.mxu0 0.0
    %692 = vmatpush1.msra.mxu0 0.0
    %693 = vmatprep.subr.mxu0 0.0
    %694 = vmatpush1.msra.mxu0 0.0
    %695 = vmatprep.subr.mxu0 0.0
    %696 = vmatpush1.msra.mxu0 0.0
    %697 = vmatprep.subr.mxu0 0.0
    %698 = vmatpush1.msra.mxu0 0.0
    %699 = vmatprep.subr.mxu0 0.0
    %700 = vmatpush1.msra.mxu0 0.0
    %701 = vmatprep.subr.mxu0 0.0
    %702 = vmatpush1.msra.mxu0 0.0
    %703 = vmatprep.subr.mxu0 0.0
    %704 = vmatpush1.msra.mxu0 0.0
    %705 = vmatprep.subr.mxu0 0.0
    %706 = vmatpush1.msra.mxu0 0.0
    %707 = vmatprep.subr.mxu0 0.0
    %708 = vmatpush1.msra.mxu0 0.0
    %709 = vmatprep.subr.mxu0 0.0
    %710 = vmatpush1.msra.mxu0 0.0
    %711 = vmatprep.subr.mxu0 0.0
    %712 = vmatpush1.msra.mxu0 0.0
    %713 = vmatprep.subr.mxu0 0.0
    %714 = vmatpush1.msra.mxu0 0.0
    %715 = vmatprep.subr.mxu0 0.0
    %716 = vmatpush1.msra.mxu0 0.0
    %717 = vmatprep.subr.mxu0 0.0
    %718 = vmatpush1.msra.mxu0 0.0
    %719 = vmatprep.subr.mxu0 0.0
    %720 = vmatpush1.msra.mxu0 0.0
    %721 = vmatprep.subr.mxu0 0.0
    %722 = vmatpush1.msra.mxu0 0.0
    %723 = vmatprep.mubr.f32.mxu0 0.0
    %724 = vmatmul.mubr.f32.gmra.mrb[0].mxu0 %v466
    %v725 = vpop.f32.mrb[0].mxu0
    %v726 = vadd.f32 %v581, %v725
    %v727 = vpop.f32.mrb[0].mxu0
    %728 = vmatprep.mubr.f32.mxu0 0.0
    %729 = vmatmul.mubr.f32.gmra.mrb[0].mxu0 %v467
    %v730 = vpop.f32.mrb[0].mxu0
    %v731 = vadd.f32 %v586, %v730
    %v732 = vpop.f32.mrb[0].mxu0
    %733 = vmatprep.mubr.f32.mxu0 0.0
    %734 = vmatmul.mubr.f32.gmra.mrb[0].mxu0 %v468
    %v735 = vpop.f32.mrb[0].mxu0
    %v736 = vadd.f32 %v591, %v735
    %v737 = vpop.f32.mrb[0].mxu0
    %738 = vmatprep.mubr.f32.mxu0 0.0
    %739 = vmatmul.mubr.f32.gmra.mrb[0].mxu0 %v469
    %v740 = vpop.f32.mrb[0].mxu0
    %v741 = vadd.f32 %v596, %v740
    %v742 = vpop.f32.mrb[0].mxu0
    %743 = vmatprep.mubr.f32.mxu0 0.0
    %744 = vmatmul.mubr.f32.gmra.mrb[0].mxu0 %v470
    %v745 = vpop.f32.mrb[0].mxu0
    %v746 = vadd.f32 %v601, %v745
    %v747 = vpop.f32.mrb[0].mxu0
    %748 = vmatprep.mubr.f32.mxu0 0.0
    %749 = vmatmul.mubr.f32.gmra.mrb[0].mxu0 %v471
    %v750 = vpop.f32.mrb[0].mxu0
    %v751 = vadd.f32 %v606, %v750
    %v752 = vpop.f32.mrb[0].mxu0
    %753 = vmatprep.mubr.f32.mxu0 0.0
    %754 = vmatmul.mubr.f32.gmra.mrb[0].mxu0 %v472
    %v755 = vpop.f32.mrb[0].mxu0
    %v756 = vadd.f32 %v611, %v755
    %v757 = vpop.f32.mrb[0].mxu0
    %758 = vmatprep.mubr.f32.mxu0 0.0
    %759 = vmatmul.mubr.f32.gmra.mrb[0].mxu0 %v473
    %v760 = vpop.f32.mrb[0].mxu0
    %v761 = vadd.f32 %v616, %v760
    %v762 = vpop.f32.mrb[0].mxu0
    %763 = vmatprep.mubr.f32.mxu0 0.0
    %764 = vmatmul.mubr.f32.gmra.mrb[0].mxu0 %v474
    %v765 = vpop.f32.mrb[0].mxu0
    %v766 = vadd.f32 %v621, %v765
    %v767 = vpop.f32.mrb[0].mxu0
    %768 = vmatprep.mubr.f32.mxu0 0.0
    %769 = vmatmul.mubr.f32.gmra.mrb[0].mxu0 %v475
    %v770 = vpop.f32.mrb[0].mxu0
    %v771 = vadd.f32 %v626, %v770
    %v772 = vpop.f32.mrb[0].mxu0
    %773 = vmatprep.mubr.f32.mxu0 0.0
    %774 = vmatmul.mubr.f32.gmra.mrb[0].mxu0 %v476
    %v775 = vpop.f32.mrb[0].mxu0
    %v776 = vadd.f32 %v631, %v775
    %v777 = vpop.f32.mrb[0].mxu0
    %778 = vmatprep.mubr.f32.mxu0 0.0
    %779 = vmatmul.mubr.f32.gmra.mrb[0].mxu0 %v477
    %v780 = vpop.f32.mrb[0].mxu0
    %v781 = vadd.f32 %v636, %v780
    %v782 = vpop.f32.mrb[0].mxu0
    %783 = vmatprep.mubr.f32.mxu0 0.0
    %784 = vmatmul.mubr.f32.gmra.mrb[0].mxu0 %v478
    %v785 = vpop.f32.mrb[0].mxu0
    %v786 = vadd.f32 %v641, %v785
    %v787 = vpop.f32.mrb[0].mxu0
    %788 = vmatprep.mubr.f32.mxu0 0.0
    %789 = vmatmul.mubr.f32.gmra.mrb[0].mxu0 %v479
    %v790 = vpop.f32.mrb[0].mxu0
    %v791 = vadd.f32 %v646, %v790
    %v792 = vpop.f32.mrb[0].mxu0
    %793 = vmatprep.mubr.f32.mxu0 0.0
    %794 = vmatmul.mubr.f32.gmra.mrb[0].mxu0 %v480
    %v795 = vpop.f32.mrb[0].mxu0
    %v796 = vadd.f32 %v651, %v795
    %v797 = vpop.f32.mrb[0].mxu0
    %798 = vmatprep.mubr.f32.mxu0 0.0
    %799 = vmatmul.mubr.f32.gmra.mrb[0].mxu0 %v481
    %v800 = vpop.f32.mrb[0].mxu0
    %v801 = vadd.f32 %v656, %v800
    %v802 = vpop.f32.mrb[0].mxu0
    %803 = vdwg.mxu0
    %v804 = vld [vmem:[%s7] sm:$0x1]
    %v806 = vlaneseq
    %v807 = vshrl.u32 %v806, 7
    %v808 = vsub.s32 0, %v807
    %v809 = vrot.slane %v804, %v808
    %v811 = vadd.f32 %v726, %v809
    %v812 = vadd.f32 %v731, %v809
    %v813 = vadd.f32 %v736, %v809
    %v814 = vadd.f32 %v741, %v809
    %v815 = vadd.f32 %v746, %v809
    %v816 = vadd.f32 %v751, %v809
    %v817 = vadd.f32 %v756, %v809
    %v818 = vadd.f32 %v761, %v809
    %v819 = vadd.f32 %v766, %v809
    %v820 = vadd.f32 %v771, %v809
    %v821 = vadd.f32 %v776, %v809
    %v822 = vadd.f32 %v781, %v809
    %v823 = vadd.f32 %v786, %v809
    %v824 = vadd.f32 %v791, %v809
    %v825 = vadd.f32 %v796, %v809
    %v826 = vadd.f32 %v801, %v809
    %v827 = vsub.f32 0.0, %v811
    %v828 = vsub.f32 0.0, %v812
    %v829 = vsub.f32 0.0, %v813
    %v830 = vsub.f32 0.0, %v814
    %v831 = vsub.f32 0.0, %v815
    %v832 = vsub.f32 0.0, %v816
    %v833 = vsub.f32 0.0, %v817
    %v834 = vsub.f32 0.0, %v818
    %v835 = vsub.f32 0.0, %v819
    %v836 = vsub.f32 0.0, %v820
    %v837 = vsub.f32 0.0, %v821
    %v838 = vsub.f32 0.0, %v822
    %v839 = vsub.f32 0.0, %v823
    %v840 = vsub.f32 0.0, %v824
    %v841 = vsub.f32 0.0, %v825
    %v842 = vsub.f32 0.0, %v826
    %v843 = vmul.f32 %v827, 1.442695
    %v844 = vpow.pop %v843
    %v845 = vmul.f32 %v828, 1.442695
    %v846 = vpow.pop %v845
    %v847 = vmul.f32 %v829, 1.442695
    %v848 = vpow.pop %v847
    %v849 = vmul.f32 %v830, 1.442695
    %v850 = vpow.pop %v849
    %v851 = vmul.f32 %v831, 1.442695
    %v852 = vpow.pop %v851
    %v853 = vmul.f32 %v832, 1.442695
    %v854 = vpow.pop %v853
    %v855 = vmul.f32 %v833, 1.442695
    %v856 = vpow.pop %v855
    %v857 = vmul.f32 %v834, 1.442695
    %v858 = vpow.pop %v857
    %v859 = vmul.f32 %v835, 1.442695
    %v860 = vpow.pop %v859
    %v861 = vmul.f32 %v836, 1.442695
    %v862 = vpow.pop %v861
    %v863 = vmul.f32 %v837, 1.442695
    %v864 = vpow.pop %v863
    %v865 = vmul.f32 %v838, 1.442695
    %v866 = vpow.pop %v865
    %v867 = vmul.f32 %v839, 1.442695
    %v868 = vpow.pop %v867
    %v869 = vmul.f32 %v840, 1.442695
    %v870 = vpow.pop %v869
    %v871 = vmul.f32 %v841, 1.442695
    %v872 = vpow.pop %v871
    %v873 = vmul.f32 %v842, 1.442695
    %v874 = vpow.pop %v873
    %v875 = vadd.f32 %v844, 1.0
    %v876 = vadd.f32 %v846, 1.0
    %v877 = vadd.f32 %v848, 1.0
    %v878 = vadd.f32 %v850, 1.0
    %v879 = vadd.f32 %v852, 1.0
    %v880 = vadd.f32 %v854, 1.0
    %v881 = vadd.f32 %v856, 1.0
    %v882 = vadd.f32 %v858, 1.0
    %v883 = vadd.f32 %v860, 1.0
    %v884 = vadd.f32 %v862, 1.0
    %v885 = vadd.f32 %v864, 1.0
    %v886 = vadd.f32 %v866, 1.0
    %v887 = vadd.f32 %v868, 1.0
    %v888 = vadd.f32 %v870, 1.0
    %v889 = vadd.f32 %v872, 1.0
    %v890 = vadd.f32 %v874, 1.0
    %v891 = vrcp.pop %v875
    %v892 = vmul.f32 1.0, %v891
    %v893 = vrcp.pop %v876
    %v894 = vmul.f32 1.0, %v893
    %v895 = vrcp.pop %v877
    %v896 = vmul.f32 1.0, %v895
    %v897 = vrcp.pop %v878
    %v898 = vmul.f32 1.0, %v897
    %v899 = vrcp.pop %v879
    %v900 = vmul.f32 1.0, %v899
    %v901 = vrcp.pop %v880
    %v902 = vmul.f32 1.0, %v901
    %v903 = vrcp.pop %v881
    %v904 = vmul.f32 1.0, %v903
    %v905 = vrcp.pop %v882
    %v906 = vmul.f32 1.0, %v905
    %v907 = vrcp.pop %v883
    %v908 = vmul.f32 1.0, %v907
    %v909 = vrcp.pop %v884
    %v910 = vmul.f32 1.0, %v909
    %v911 = vrcp.pop %v885
    %v912 = vmul.f32 1.0, %v911
    %v913 = vrcp.pop %v886
    %v914 = vmul.f32 1.0, %v913
    %v915 = vrcp.pop %v887
    %v916 = vmul.f32 1.0, %v915
    %v917 = vrcp.pop %v888
    %v918 = vmul.f32 1.0, %v917
    %v919 = vrcp.pop %v889
    %v920 = vmul.f32 1.0, %v919
    %v921 = vrcp.pop %v890
    %v922 = vmul.f32 1.0, %v921
    %923 = vst [vmem:[#allocation11] sm:$0xff] %v892
    %924 = vst [vmem:[#allocation11 + $0x8] sm:$0xff] %v894
    %925 = vst [vmem:[#allocation11 + $0x10] sm:$0xff] %v896
    %926 = vst [vmem:[#allocation11 + $0x18] sm:$0xff] %v898
    %927 = vst [vmem:[#allocation11 + $0x20] sm:$0xff] %v900
    %928 = vst [vmem:[#allocation11 + $0x28] sm:$0xff] %v902
    %929 = vst [vmem:[#allocation11 + $0x30] sm:$0xff] %v904
    %930 = vst [vmem:[#allocation11 + $0x38] sm:$0xff] %v906
    %931 = vst [vmem:[#allocation11 + $0x40] sm:$0xff] %v908
    %932 = vst [vmem:[#allocation11 + $0x48] sm:$0xff] %v910
    %933 = vst [vmem:[#allocation11 + $0x50] sm:$0xff] %v912
    %934 = vst [vmem:[#allocation11 + $0x58] sm:$0xff] %v914
    %935 = vst [vmem:[#allocation11 + $0x60] sm:$0xff] %v916
    %936 = vst [vmem:[#allocation11 + $0x68] sm:$0xff] %v918
    %937 = vst [vmem:[#allocation11 + $0x70] sm:$0xff] %v920
    %938 = vst [vmem:[#allocation11 + $0x78] sm:$0xff] %v922
    // Predicated region
    $region54: #{tpu_custom_call.1} parent=1 // pred_check
      _
    $region55: #{tpu_custom_call.1} parent=1 // pred_check_branch
      %940 = sbr.rel (0) target = $region57
    $region56: #{tpu_custom_call.1} parent=1 // pred_region
      %s942 = ssub.s32 2048, 2048
      %943 = vsyncadd [#allocation4], %s942
      %s944 = sshll.u32 [#allocation11], 4
      %s945 = int_to_ptr.vmem [resolvable:$true] %s944
      %950 = dma.vmem_to_hbm [thread:$0]  %s945, 2048, %s8, [#allocation4], 128, 128, 8
    $region57: #{tpu_custom_call.1} parent=1 // pred_fallthru
      _
    // Predicated region
    $region58: #{tpu_custom_call.1} parent=1 // pred_check
      _
    $region59: #{tpu_custom_call.1} parent=1 // pred_check_branch
      %952 = sbr.rel (0) target = $region61
    $region60: #{tpu_custom_call.1} parent=1 // pred_region
      %953 = dma.done [#allocation4], 2048
    $region61: #{tpu_custom_call.1} parent=1 // pred_fallthru
      _
    %954 = vsyncpa [#allocation3], 1
    %955 = vsyncpa [#allocation6], 1
    %956 = vsyncpa [#allocation9], 1
    %957 = vsyncpa [#allocation4], 1

</llo_original>
